<compile_context>
chip_gen: v7x
topology: tpu7x:2x2x1
jax: 0.10.0
libtpu: 0.0.40
codegen_flags: <defaults>
</compile_context>

<pallas_src>
import functools

import jax
import jax.numpy as jnp
from jax.experimental import pallas as pl
from jax.experimental.pallas import tpu as pltpu


def _round_up(x, m):
    return ((x + m - 1) // m) * m


# ----------------------------------------------------------------------------
# Kernel
# ----------------------------------------------------------------------------
def _query_encoder_kernel(q_ref, wq_ref, ws_ref, pf_ref, bias_ref, out_ref, *,
                          input_dim, d_pad, process_step, compute_dtype):
    d, dp = input_dim, d_pad
    q = q_ref[...].astype(jnp.float32)          # (bb, d)      exact residual path
    q_c = q.astype(compute_dtype)               # MXU operand
    wq = wq_ref[...]                            # (d, 8dp+fp)  [Wih^T|Whh_h^T|S^T]
    ws = ws_ref[...]                            # (dp, 4dp+fp) [Whh_h^T|S^T] (row-pad)
    pf = pf_ref[...]                            # (fp, 4dp)    P = S @ Whh_r^T
    bias = bias_ref[...]                        # (1, 8dp+fp)  [gate bias|0|-1e30 mask]

    bb = q.shape[0]

    # ---- hoisted loop invariants: one fused MXU push for all q matmuls ----
    slab = jnp.dot(q_c, wq, preferred_element_type=jnp.float32) + bias
    x_gates = slab[:, : 4 * dp]                 # step-0 gates  (= q@Wih^T + b)
    base = x_gates + slab[:, 4 * dp: 8 * dp]    # + q@Whh_h^T   (steps >= 1)
    qs = slab[:, 8 * dp:]                       # q·support scores; padded cols -1e30

    c = jnp.zeros((bb, dp), jnp.float32)
    delta = jnp.zeros((bb, dp), jnp.float32)    # = h - q (live d lanes; pad lanes stay 0)
    gates = x_gates

    # process_step is a small static int: unroll in Python.
    for step in range(process_step):
        # Gate layout: [i | f | o | g], each dp lanes (live d at the front).
        sig = jax.nn.sigmoid(gates[:, : 3 * dp])
        g_g = jnp.tanh(gates[:, 3 * dp:])
        i_g = sig[:, :dp]
        f_g = sig[:, dp: 2 * dp]
        o_g = sig[:, 2 * dp: 3 * dp]
        c = f_g * c + i_g * g_g
        delta = o_g * jnp.tanh(c)               # = h_r_[:, :d];  h = q + delta

        if step + 1 < process_step:
            # One fused matmul: gate recurrence + attention scores.
            sl = jnp.dot(delta.astype(compute_dtype), ws,
                         preferred_element_type=jnp.float32)   # (bb, 4dp+fp)
            scores = qs + sl[:, 4 * dp:]        # padded cols stay ~ -1e30
            scores = scores - jnp.max(scores, axis=1, keepdims=True)
            e = jnp.exp(scores)                 # padded cols -> 0
            attn = e * pl.reciprocal(jnp.sum(e, axis=1, keepdims=True),
                                     approx=True)
            # r is never materialized: attn @ (support @ Whh_r^T).
            gates = (base + sl[:, : 4 * dp]
                     + jnp.dot(attn.astype(compute_dtype), pf,
                               preferred_element_type=jnp.float32))

    out_ref[...] = (q + delta[:, :d]).astype(out_ref.dtype)


# ----------------------------------------------------------------------------
# One-time parameter preparation (hoisted out of the per-call path)
# ----------------------------------------------------------------------------
def prepare_params(support, w_ih, w_hh, b_ih, b_hh, *,
                   compute_dtype=jnp.bfloat16):
    """Pre-permute / pad / fuse LSTMCell weights for the kernel. Do this once."""
    few, d = support.shape
    hid = 2 * d
    assert w_ih.shape == (4 * hid, d)
    assert w_hh.shape == (4 * hid, hid)

    dp = _round_up(d, 128)      # lane-aligned per-gate width
    fp = _round_up(few, 128)    # lane-aligned support count

    # torch.nn.LSTMCell row blocks are [i, f, g, o], each of width `hid`.
    # Only the first d output units of every gate ever influence the returned
    # h (upper half of h_r_/c is dead): keep those rows, reorder to [i,f,o,g].
    perm = jnp.concatenate([
        jnp.arange(0 * hid, 0 * hid + d),   # i (live half)
        jnp.arange(1 * hid, 1 * hid + d),   # f
        jnp.arange(3 * hid, 3 * hid + d),   # o
        jnp.arange(2 * hid, 2 * hid + d),   # g
    ])
    wih_live = w_ih[perm]                   # (4d, d)
    whh_live = w_hh[perm]                   # (4d, 2d)
    whh_h = whh_live[:, :d]                 # (4d, d)  consumes h
    whh_r = whh_live[:, d:]                 # (4d, d)  consumes r
    bias_live = (b_ih + b_hh)[perm]         # (4d,)

    def pad_gate_cols(m):
        # (K, 4d) with gate blocks of width d -> (K, 4*dp); each gate block
        # starts on a 128-lane boundary, zero padded.
        out = jnp.zeros((m.shape[0], 4 * dp), m.dtype)
        for g in range(4):
            out = out.at[:, g * dp: g * dp + d].set(m[:, g * d:(g + 1) * d])
        return out

    wih_t = pad_gate_cols(wih_live.T)                                  # (d, 4dp)
    whh_h_t = pad_gate_cols(whh_h.T)                                   # (d, 4dp)
    s_t = jnp.zeros((d, fp), jnp.float32).at[:, :few].set(support.T)   # (d, fp)

    # Prologue slab: q @ [Wih^T | Whh_h^T | support^T].
    wq_slab = jnp.concatenate([wih_t, whh_h_t, s_t], axis=1)           # (d, 8dp+fp)

    # Recurrence slab: delta @ [Whh_h^T | support^T]; K padded to dp (zero rows).
    ws_slab = jnp.zeros((dp, 4 * dp + fp), jnp.float32)
    ws_slab = ws_slab.at[:d, : 4 * dp].set(whh_h_t)
    ws_slab = ws_slab.at[:d, 4 * dp:].set(s_t)

    # Folded attention readout: P = support @ Whh_r^T (weight-only, wrapper-side).
    p_fold = pad_gate_cols(support @ whh_r.T)                          # (few, 4dp)
    p_fold = jnp.zeros((fp, 4 * dp), jnp.float32).at[:few].set(p_fold)

    # Full-width additive vector for the prologue slab:
    #   [gate bias (lane-aligned) | zeros | -1e30 softmax mask for padded cols].
    bias_gates = jnp.zeros((4 * dp,), jnp.float32)
    for g in range(4):
        bias_gates = bias_gates.at[g * dp: g * dp + d].set(
            bias_live[g * d:(g + 1) * d])
    neg_mask = jnp.where(jnp.arange(fp) < few, 0.0, -1e30).astype(jnp.float32)
    bias_full = jnp.concatenate(
        [bias_gates, jnp.zeros((4 * dp,), jnp.float32), neg_mask]).reshape(1, -1)

    cd = jnp.dtype(compute_dtype)
    return dict(
        wq_slab=wq_slab.astype(cd),
        ws_slab=ws_slab.astype(cd),
        p_fold=p_fold.astype(cd),
        bias_full=bias_full,                    # stays f32 (post-matmul add)
        input_dim=d, d_pad=dp, few_pad=fp, compute_dtype=cd)


# ----------------------------------------------------------------------------
# pallas_call wrapper
# ----------------------------------------------------------------------------
def query_encoder_prepared(query, params, process_step=4):
    """query (B, d) -> (B, d) using pre-prepared params. Matches PyTorch forward."""
    bsz, d = query.shape
    assert d == params["input_dim"]
    if process_step == 0:
        return query

    dp, fp = params["d_pad"], params["few_pad"]
    wq, ws = params["wq_slab"], params["ws_slab"]
    pf, bias = params["p_fold"], params["bias_full"]

    # Batch tile: 512 fills the 256-row MXU (v6e/v7x) and amortizes per-grid
    # step overhead; still a modest per-tile VMEM footprint on v7x.
    bb = bsz if bsz <= 512 else 512
    grid = (pl.cdiv(bsz, bb),)

    # Rough VMEM budget: double-buffered q/out tiles + resident weights (<=2
    # buffers) + f32 temporaries; raise the scoped limit accordingly, clamped
    # to 64 MiB so it is always legal on v7x (v5e/v6e have 128 MiB physical).
    est = (4 * bb * d * 4
           + 2 * (wq.nbytes + ws.nbytes + pf.nbytes + bias.nbytes)
           + 4 * bb * (12 * dp + 2 * fp) * 4)
    vmem_limit = int(min(64 * 2**20, max(est, 32 * 2**20)))

    kernel = functools.partial(
        _query_encoder_kernel, input_dim=d, d_pad=dp,
        process_step=process_step, compute_dtype=params["compute_dtype"])

    def build(single_buffer_resident):
        res_kwargs = ({"pipeline_mode": pl.Buffered(1)}
                      if single_buffer_resident else {})

        def resident(shape):
            return pl.BlockSpec(shape, lambda i: (0,) * len(shape), **res_kwargs)

        return pl.pallas_call(
            kernel,
            out_shape=jax.ShapeDtypeStruct((bsz, d), query.dtype),
            grid=grid,
            in_specs=[
                pl.BlockSpec((bb, d), lambda i: (i, 0)),   # query tile
                resident(wq.shape),                        # fused q-matmul slab
                resident(ws.shape),                        # fused step-matmul slab
                resident(pf.shape),                        # folded readout P
                resident(bias.shape),                      # fused bias + mask
            ],
            out_specs=pl.BlockSpec((bb, d), lambda i: (i, 0)),
            # On v7x with multi-tile batches, pltpu.CORE_PARALLEL here would
            # guarantee the two TensorCores split the batch axis.
            compiler_params=pltpu.CompilerParams(
                dimension_semantics=("parallel",),
                vmem_limit_bytes=vmem_limit),
        )

    args = (query, wq, ws, pf, bias)
    try:
        # Index-invariant inputs single-buffered: halves their resident VMEM.
        return build(True)(*args)
    except Exception:
        # Fallback if this Pallas build rejects Buffered(1) pipeline_mode.
        return build(False)(*args)


def query_encoder(query, support, w_ih, w_hh, b_ih, b_hh, process_step=4,
                  compute_dtype=jnp.bfloat16):
    """Convenience one-shot API mirroring the PyTorch module's forward()."""
    if process_step == 0:
        return query
    params = prepare_params(support, w_ih, w_hh, b_ih, b_hh,
                            compute_dtype=compute_dtype)
    return query_encoder_prepared(query, params, process_step=process_step)


# ----------------------------------------------------------------------------
# Pure-JAX reference (torch.nn.LSTMCell semantics, f32)
# ----------------------------------------------------------------------------
def _reference(query, support, w_ih, w_hh, b_ih, b_hh, process_step=4):
    bsz, d = query.shape
    hid = 2 * d
    h_r = jnp.zeros((bsz, hid), jnp.float32)
    c = jnp.zeros((bsz, hid), jnp.float32)
    h = query
    for _ in range(process_step):
        gates = query @ w_ih.T + b_ih + h_r @ w_hh.T + b_hh
        i_g, f_g, g_g, o_g = jnp.split(gates, 4, axis=1)
        i_g, f_g, o_g = jax.nn.sigmoid(i_g), jax.nn.sigmoid(f_g), jax.nn.sigmoid(o_g)
        g_g = jnp.tanh(g_g)
        c = f_g * c + i_g * g_g
        h_r_full = o_g * jnp.tanh(c)
        h = query + h_r_full[:, :d]
        attn = jax.nn.softmax(h @ support.T, axis=1)
        r = attn @ support
        h_r = jnp.concatenate([h, r], axis=1)
    return h


if __name__ == "__main__":
    # Small deterministic example: batch=2, input_dim=32, few=8, process_step=4.
    B, D, FEW, STEPS = 2, 32, 8, 4
    HID = 2 * D

    key = jax.random.PRNGKey(0)
    k_q, k_s, k_wih, k_whh, k_bih, k_bhh = jax.random.split(key, 6)

    query = jax.random.normal(k_q, (B, D), jnp.float32)
    support = jax.random.normal(k_s, (FEW, D), jnp.float32)

    # torch.nn.LSTMCell default init: U(-1/sqrt(hidden), 1/sqrt(hidden)).
    bound = 1.0 / jnp.sqrt(jnp.float32(HID))
    w_ih = jax.random.uniform(k_wih, (4 * HID, D), jnp.float32, -bound, bound)
    w_hh = jax.random.uniform(k_whh, (4 * HID, HID), jnp.float32, -bound, bound)
    b_ih = jax.random.uniform(k_bih, (4 * HID,), jnp.float32, -bound, bound)
    b_hh = jax.random.uniform(k_bhh, (4 * HID,), jnp.float32, -bound, bound)

    ref = _reference(query, support, w_ih, w_hh, b_ih, b_hh, process_step=STEPS)

    # 1) f32 MXU operands: tight check (only f32 reassociation + approx recip).
    params_f32 = prepare_params(support, w_ih, w_hh, b_ih, b_hh,
                                compute_dtype=jnp.float32)
    out_f32 = jax.block_until_ready(
        query_encoder_prepared(query, params_f32, process_step=STEPS))
    assert out_f32.shape == (B, D)
    assert jnp.allclose(out_f32, ref, atol=2e-3, rtol=2e-3)

    # 2) bf16 MXU operands (fast default): intentional accuracy trade-off —
    #    bf16 operand rounding through 4 recurrent steps + approx EUP recip.
    params_bf16 = prepare_params(support, w_ih, w_hh, b_ih, b_hh,
                                 compute_dtype=jnp.bfloat16)
    out_bf16 = jax.block_until_ready(
        query_encoder_prepared(query, params_bf16, process_step=STEPS))
    assert out_bf16.shape == (B, D)
    assert float(jnp.max(jnp.abs(out_bf16 - ref))) < 1e-1

    print("KERNEL_OK")
</pallas_src>

<mosaic_0001>
module attributes {stable_mosaic.version = 11 : i64} {
  func.func @_query_encoder_kernel(%arg0: i32, %arg1: memref<2x32xf32, #tpu.memory_space<vmem>>, %arg2: memref<32x1152xf32, #tpu.memory_space<vmem>>, %arg3: memref<128x640xf32, #tpu.memory_space<vmem>>, %arg4: memref<128x512xf32, #tpu.memory_space<vmem>>, %arg5: memref<1x1152xf32, #tpu.memory_space<vmem>>, %arg6: memref<2x32xf32, #tpu.memory_space<vmem>>) attributes {dimension_semantics = [#tpu.dimension_semantics<parallel>], iteration_bounds = array<i64: 1>, scalar_prefetch = 0 : i64, scratch_operands = 0 : i64, tpu.core_type = #tpu.core_type<tc>, window_params = [{transform_indices = @transform_0, window_bounds = array<i64: 2, 32>}, {pipeline_mode = #tpu.pipeline_mode<synchronous>, transform_indices = @transform_1, window_bounds = array<i64: 32, 1152>}, {pipeline_mode = #tpu.pipeline_mode<synchronous>, transform_indices = @transform_2, window_bounds = array<i64: 128, 640>}, {pipeline_mode = #tpu.pipeline_mode<synchronous>, transform_indices = @transform_3, window_bounds = array<i64: 128, 512>}, {pipeline_mode = #tpu.pipeline_mode<synchronous>, transform_indices = @transform_4, window_bounds = array<i64: 1, 1152>}, {transform_indices = @transform_5, window_bounds = array<i64: 2, 32>}]} {
    %c0 = arith.constant 0 : index
    %c0_0 = arith.constant 0 : index
    %0 = vector.load %arg1[%c0, %c0_0] : memref<2x32xf32, #tpu.memory_space<vmem>>, vector<2x32xf32>
    %c0_1 = arith.constant 0 : index
    %c0_2 = arith.constant 0 : index
    %1 = vector.load %arg2[%c0_1, %c0_2] : memref<32x1152xf32, #tpu.memory_space<vmem>>, vector<32x1152xf32>
    %c0_3 = arith.constant 0 : index
    %c0_4 = arith.constant 0 : index
    %2 = vector.load %arg3[%c0_3, %c0_4] : memref<128x640xf32, #tpu.memory_space<vmem>>, vector<128x640xf32>
    %c0_5 = arith.constant 0 : index
    %c0_6 = arith.constant 0 : index
    %3 = vector.load %arg4[%c0_5, %c0_6] : memref<128x512xf32, #tpu.memory_space<vmem>>, vector<128x512xf32>
    %c0_7 = arith.constant 0 : index
    %c0_8 = arith.constant 0 : index
    %4 = vector.load %arg5[%c0_7, %c0_8] : memref<1x1152xf32, #tpu.memory_space<vmem>>, vector<1x1152xf32>
    %cst = arith.constant dense<0.000000e+00> : vector<2x1152xf32>
    %5 = tpu.matmul %0, %1, %cst {dimension_numbers = #tpu.dot_dimension_numbers<[1], [0], [0], [1], [0, 0, 1, 1], [], []>} : vector<2x32xf32>, vector<32x1152xf32>, vector<2x1152xf32> -> vector<2x1152xf32>
    %6 = vector.broadcast %4 : vector<1x1152xf32> to vector<2x1152xf32>
    %7 = arith.addf %5, %6 : vector<2x1152xf32>
    %8 = vector.extract_strided_slice %7 {offsets = [0, 0], sizes = [2, 512], strides = [1, 1]} : vector<2x1152xf32> to vector<2x512xf32>
    %9 = vector.extract_strided_slice %7 {offsets = [0, 512], sizes = [2, 512], strides = [1, 1]} : vector<2x1152xf32> to vector<2x512xf32>
    %10 = arith.addf %8, %9 : vector<2x512xf32>
    %11 = vector.extract_strided_slice %7 {offsets = [0, 1024], sizes = [2, 128], strides = [1, 1]} : vector<2x1152xf32> to vector<2x128xf32>
    %cst_9 = arith.constant 0.000000e+00 : f32
    %12 = vector.broadcast %cst_9 : f32 to vector<2x128xf32>
    %13 = vector.extract_strided_slice %8 {offsets = [0, 0], sizes = [2, 384], strides = [1, 1]} : vector<2x512xf32> to vector<2x384xf32>
    %14 = arith.negf %13 : vector<2x384xf32>
    %15 = math.exp %14 : vector<2x384xf32>
    %cst_10 = arith.constant 1.000000e+00 : f32
    %16 = vector.broadcast %cst_10 : f32 to vector<2x384xf32>
    %17 = arith.addf %16, %15 : vector<2x384xf32>
    %18 = arith.divf %16, %17 : vector<2x384xf32>
    %19 = vector.extract_strided_slice %8 {offsets = [0, 384], sizes = [2, 128], strides = [1, 1]} : vector<2x512xf32> to vector<2x128xf32>
    %20 = math.tanh %19 : vector<2x128xf32>
    %21 = vector.extract_strided_slice %18 {offsets = [0, 0], sizes = [2, 128], strides = [1, 1]} : vector<2x384xf32> to vector<2x128xf32>
    %22 = vector.extract_strided_slice %18 {offsets = [0, 128], sizes = [2, 128], strides = [1, 1]} : vector<2x384xf32> to vector<2x128xf32>
    %23 = vector.extract_strided_slice %18 {offsets = [0, 256], sizes = [2, 128], strides = [1, 1]} : vector<2x384xf32> to vector<2x128xf32>
    %24 = arith.mulf %22, %12 : vector<2x128xf32>
    %25 = arith.mulf %21, %20 : vector<2x128xf32>
    %26 = arith.addf %24, %25 : vector<2x128xf32>
    %27 = math.tanh %26 : vector<2x128xf32>
    %28 = arith.mulf %23, %27 : vector<2x128xf32>
    %cst_11 = arith.constant dense<0.000000e+00> : vector<2x640xf32>
    %29 = tpu.matmul %28, %2, %cst_11 {dimension_numbers = #tpu.dot_dimension_numbers<[1], [0], [0], [1], [0, 0, 1, 1], [], []>} : vector<2x128xf32>, vector<128x640xf32>, vector<2x640xf32> -> vector<2x640xf32>
    %30 = vector.extract_strided_slice %29 {offsets = [0, 512], sizes = [2, 128], strides = [1, 1]} : vector<2x640xf32> to vector<2x128xf32>
    %31 = arith.addf %11, %30 : vector<2x128xf32>
    %cst_12 = arith.constant dense<0xFF800000> : vector<2xf32>
    %32 = vector.multi_reduction <maximumf>, %31, %cst_12 [1] : vector<2x128xf32> to vector<2xf32>
    %33 = vector.shape_cast %32 : vector<2xf32> to vector<2x1xf32>
    %34 = vector.broadcast %33 : vector<2x1xf32> to vector<2x128xf32>
    %35 = arith.subf %31, %34 : vector<2x128xf32>
    %36 = math.exp %35 : vector<2x128xf32>
    %cst_13 = arith.constant dense<0.000000e+00> : vector<2xf32>
    %37 = vector.multi_reduction <add>, %36, %cst_13 [1] : vector<2x128xf32> to vector<2xf32>
    %38 = vector.shape_cast %37 : vector<2xf32> to vector<2x1xf32>
    %39 = tpu.reciprocal %38 {approx = true} : vector<2x1xf32> -> vector<2x1xf32>
    %40 = vector.broadcast %39 : vector<2x1xf32> to vector<2x128xf32>
    %41 = arith.mulf %36, %40 : vector<2x128xf32>
    %42 = vector.extract_strided_slice %29 {offsets = [0, 0], sizes = [2, 512], strides = [1, 1]} : vector<2x640xf32> to vector<2x512xf32>
    %43 = arith.addf %10, %42 : vector<2x512xf32>
    %cst_14 = arith.constant dense<0.000000e+00> : vector<2x512xf32>
    %44 = tpu.matmul %41, %3, %cst_14 {dimension_numbers = #tpu.dot_dimension_numbers<[1], [0], [0], [1], [0, 0, 1, 1], [], []>} : vector<2x128xf32>, vector<128x512xf32>, vector<2x512xf32> -> vector<2x512xf32>
    %45 = arith.addf %43, %44 : vector<2x512xf32>
    %46 = vector.extract_strided_slice %45 {offsets = [0, 0], sizes = [2, 384], strides = [1, 1]} : vector<2x512xf32> to vector<2x384xf32>
    %47 = arith.negf %46 : vector<2x384xf32>
    %48 = math.exp %47 : vector<2x384xf32>
    %cst_15 = arith.constant 1.000000e+00 : f32
    %49 = vector.broadcast %cst_15 : f32 to vector<2x384xf32>
    %50 = arith.addf %49, %48 : vector<2x384xf32>
    %51 = arith.divf %49, %50 : vector<2x384xf32>
    %52 = vector.extract_strided_slice %45 {offsets = [0, 384], sizes = [2, 128], strides = [1, 1]} : vector<2x512xf32> to vector<2x128xf32>
    %53 = math.tanh %52 : vector<2x128xf32>
    %54 = vector.extract_strided_slice %51 {offsets = [0, 0], sizes = [2, 128], strides = [1, 1]} : vector<2x384xf32> to vector<2x128xf32>
    %55 = vector.extract_strided_slice %51 {offsets = [0, 128], sizes = [2, 128], strides = [1, 1]} : vector<2x384xf32> to vector<2x128xf32>
    %56 = vector.extract_strided_slice %51 {offsets = [0, 256], sizes = [2, 128], strides = [1, 1]} : vector<2x384xf32> to vector<2x128xf32>
    %57 = arith.mulf %55, %26 : vector<2x128xf32>
    %58 = arith.mulf %54, %53 : vector<2x128xf32>
    %59 = arith.addf %57, %58 : vector<2x128xf32>
    %60 = math.tanh %59 : vector<2x128xf32>
    %61 = arith.mulf %56, %60 : vector<2x128xf32>
    %cst_16 = arith.constant dense<0.000000e+00> : vector<2x640xf32>
    %62 = tpu.matmul %61, %2, %cst_16 {dimension_numbers = #tpu.dot_dimension_numbers<[1], [0], [0], [1], [0, 0, 1, 1], [], []>} : vector<2x128xf32>, vector<128x640xf32>, vector<2x640xf32> -> vector<2x640xf32>
    %63 = vector.extract_strided_slice %62 {offsets = [0, 512], sizes = [2, 128], strides = [1, 1]} : vector<2x640xf32> to vector<2x128xf32>
    %64 = arith.addf %11, %63 : vector<2x128xf32>
    %cst_17 = arith.constant dense<0xFF800000> : vector<2xf32>
    %65 = vector.multi_reduction <maximumf>, %64, %cst_17 [1] : vector<2x128xf32> to vector<2xf32>
    %66 = vector.shape_cast %65 : vector<2xf32> to vector<2x1xf32>
    %67 = vector.broadcast %66 : vector<2x1xf32> to vector<2x128xf32>
    %68 = arith.subf %64, %67 : vector<2x128xf32>
    %69 = math.exp %68 : vector<2x128xf32>
    %cst_18 = arith.constant dense<0.000000e+00> : vector<2xf32>
    %70 = vector.multi_reduction <add>, %69, %cst_18 [1] : vector<2x128xf32> to vector<2xf32>
    %71 = vector.shape_cast %70 : vector<2xf32> to vector<2x1xf32>
    %72 = tpu.reciprocal %71 {approx = true} : vector<2x1xf32> -> vector<2x1xf32>
    %73 = vector.broadcast %72 : vector<2x1xf32> to vector<2x128xf32>
    %74 = arith.mulf %69, %73 : vector<2x128xf32>
    %75 = vector.extract_strided_slice %62 {offsets = [0, 0], sizes = [2, 512], strides = [1, 1]} : vector<2x640xf32> to vector<2x512xf32>
    %76 = arith.addf %10, %75 : vector<2x512xf32>
    %cst_19 = arith.constant dense<0.000000e+00> : vector<2x512xf32>
    %77 = tpu.matmul %74, %3, %cst_19 {dimension_numbers = #tpu.dot_dimension_numbers<[1], [0], [0], [1], [0, 0, 1, 1], [], []>} : vector<2x128xf32>, vector<128x512xf32>, vector<2x512xf32> -> vector<2x512xf32>
    %78 = arith.addf %76, %77 : vector<2x512xf32>
    %79 = vector.extract_strided_slice %78 {offsets = [0, 0], sizes = [2, 384], strides = [1, 1]} : vector<2x512xf32> to vector<2x384xf32>
    %80 = arith.negf %79 : vector<2x384xf32>
    %81 = math.exp %80 : vector<2x384xf32>
    %cst_20 = arith.constant 1.000000e+00 : f32
    %82 = vector.broadcast %cst_20 : f32 to vector<2x384xf32>
    %83 = arith.addf %82, %81 : vector<2x384xf32>
    %84 = arith.divf %82, %83 : vector<2x384xf32>
    %85 = vector.extract_strided_slice %78 {offsets = [0, 384], sizes = [2, 128], strides = [1, 1]} : vector<2x512xf32> to vector<2x128xf32>
    %86 = math.tanh %85 : vector<2x128xf32>
    %87 = vector.extract_strided_slice %84 {offsets = [0, 0], sizes = [2, 128], strides = [1, 1]} : vector<2x384xf32> to vector<2x128xf32>
    %88 = vector.extract_strided_slice %84 {offsets = [0, 128], sizes = [2, 128], strides = [1, 1]} : vector<2x384xf32> to vector<2x128xf32>
    %89 = vector.extract_strided_slice %84 {offsets = [0, 256], sizes = [2, 128], strides = [1, 1]} : vector<2x384xf32> to vector<2x128xf32>
    %90 = arith.mulf %88, %59 : vector<2x128xf32>
    %91 = arith.mulf %87, %86 : vector<2x128xf32>
    %92 = arith.addf %90, %91 : vector<2x128xf32>
    %93 = math.tanh %92 : vector<2x128xf32>
    %94 = arith.mulf %89, %93 : vector<2x128xf32>
    %cst_21 = arith.constant dense<0.000000e+00> : vector<2x640xf32>
    %95 = tpu.matmul %94, %2, %cst_21 {dimension_numbers = #tpu.dot_dimension_numbers<[1], [0], [0], [1], [0, 0, 1, 1], [], []>} : vector<2x128xf32>, vector<128x640xf32>, vector<2x640xf32> -> vector<2x640xf32>
    %96 = vector.extract_strided_slice %95 {offsets = [0, 512], sizes = [2, 128], strides = [1, 1]} : vector<2x640xf32> to vector<2x128xf32>
    %97 = arith.addf %11, %96 : vector<2x128xf32>
    %cst_22 = arith.constant dense<0xFF800000> : vector<2xf32>
    %98 = vector.multi_reduction <maximumf>, %97, %cst_22 [1] : vector<2x128xf32> to vector<2xf32>
    %99 = vector.shape_cast %98 : vector<2xf32> to vector<2x1xf32>
    %100 = vector.broadcast %99 : vector<2x1xf32> to vector<2x128xf32>
    %101 = arith.subf %97, %100 : vector<2x128xf32>
    %102 = math.exp %101 : vector<2x128xf32>
    %cst_23 = arith.constant dense<0.000000e+00> : vector<2xf32>
    %103 = vector.multi_reduction <add>, %102, %cst_23 [1] : vector<2x128xf32> to vector<2xf32>
    %104 = vector.shape_cast %103 : vector<2xf32> to vector<2x1xf32>
    %105 = tpu.reciprocal %104 {approx = true} : vector<2x1xf32> -> vector<2x1xf32>
    %106 = vector.broadcast %105 : vector<2x1xf32> to vector<2x128xf32>
    %107 = arith.mulf %102, %106 : vector<2x128xf32>
    %108 = vector.extract_strided_slice %95 {offsets = [0, 0], sizes = [2, 512], strides = [1, 1]} : vector<2x640xf32> to vector<2x512xf32>
    %109 = arith.addf %10, %108 : vector<2x512xf32>
    %cst_24 = arith.constant dense<0.000000e+00> : vector<2x512xf32>
    %110 = tpu.matmul %107, %3, %cst_24 {dimension_numbers = #tpu.dot_dimension_numbers<[1], [0], [0], [1], [0, 0, 1, 1], [], []>} : vector<2x128xf32>, vector<128x512xf32>, vector<2x512xf32> -> vector<2x512xf32>
    %111 = arith.addf %109, %110 : vector<2x512xf32>
    %112 = vector.extract_strided_slice %111 {offsets = [0, 0], sizes = [2, 384], strides = [1, 1]} : vector<2x512xf32> to vector<2x384xf32>
    %113 = arith.negf %112 : vector<2x384xf32>
    %114 = math.exp %113 : vector<2x384xf32>
    %cst_25 = arith.constant 1.000000e+00 : f32
    %115 = vector.broadcast %cst_25 : f32 to vector<2x384xf32>
    %116 = arith.addf %115, %114 : vector<2x384xf32>
    %117 = arith.divf %115, %116 : vector<2x384xf32>
    %118 = vector.extract_strided_slice %111 {offsets = [0, 384], sizes = [2, 128], strides = [1, 1]} : vector<2x512xf32> to vector<2x128xf32>
    %119 = math.tanh %118 : vector<2x128xf32>
    %120 = vector.extract_strided_slice %117 {offsets = [0, 0], sizes = [2, 128], strides = [1, 1]} : vector<2x384xf32> to vector<2x128xf32>
    %121 = vector.extract_strided_slice %117 {offsets = [0, 128], sizes = [2, 128], strides = [1, 1]} : vector<2x384xf32> to vector<2x128xf32>
    %122 = vector.extract_strided_slice %117 {offsets = [0, 256], sizes = [2, 128], strides = [1, 1]} : vector<2x384xf32> to vector<2x128xf32>
    %123 = arith.mulf %121, %92 : vector<2x128xf32>
    %124 = arith.mulf %120, %119 : vector<2x128xf32>
    %125 = arith.addf %123, %124 : vector<2x128xf32>
    %126 = math.tanh %125 : vector<2x128xf32>
    %127 = arith.mulf %122, %126 : vector<2x128xf32>
    %128 = vector.extract_strided_slice %127 {offsets = [0, 0], sizes = [2, 32], strides = [1, 1]} : vector<2x128xf32> to vector<2x32xf32>
    %129 = arith.addf %0, %128 : vector<2x32xf32>
    %c0_26 = arith.constant 0 : index
    %c0_27 = arith.constant 0 : index
    %130 = vector.load %arg6[%c0_26, %c0_27] : memref<2x32xf32, #tpu.memory_space<vmem>>, vector<2x32xf32>
    tpu.vector_store %arg6[%c0_26, %c0_27], %129 {strides = array<i32>} : memref<2x32xf32, #tpu.memory_space<vmem>>, vector<2x32xf32>,
    return
  }
  func.func @transform_0(%arg0: i32) -> (i32, i32) {
    %c0_i32 = arith.constant 0 : i32
    %c0_i32_0 = arith.constant 0 : i32
    return %arg0, %c0_i32 : i32, i32
  }
  func.func @transform_1(%arg0: i32) -> (i32, i32) {
    %c0_i32 = arith.constant 0 : i32
    %c0_i32_0 = arith.constant 0 : i32
    %c0_i32_1 = arith.constant 0 : i32
    return %c0_i32, %c0_i32_0 : i32, i32
  }
  func.func @transform_2(%arg0: i32) -> (i32, i32) {
    %c0_i32 = arith.constant 0 : i32
    %c0_i32_0 = arith.constant 0 : i32
    %c0_i32_1 = arith.constant 0 : i32
    return %c0_i32, %c0_i32_0 : i32, i32
  }
  func.func @transform_3(%arg0: i32) -> (i32, i32) {
    %c0_i32 = arith.constant 0 : i32
    %c0_i32_0 = arith.constant 0 : i32
    %c0_i32_1 = arith.constant 0 : i32
    return %c0_i32, %c0_i32_0 : i32, i32
  }
  func.func @transform_4(%arg0: i32) -> (i32, i32) {
    %c0_i32 = arith.constant 0 : i32
    %c0_i32_0 = arith.constant 0 : i32
    %c0_i32_1 = arith.constant 0 : i32
    return %c0_i32, %c0_i32_0 : i32, i32
  }
  func.func @transform_5(%arg0: i32) -> (i32, i32) {
    %c0_i32 = arith.constant 0 : i32
    %c0_i32_0 = arith.constant 0 : i32
    return %arg0, %c0_i32 : i32, i32
  }
}

module attributes {stable_mosaic.version = 11 : i64} {
  func.func @_query_encoder_kernel(%arg0: i32, %arg1: memref<2x32xf32, #tpu.memory_space<vmem>>, %arg2: memref<32x1152xf32, #tpu.memory_space<vmem>>, %arg3: memref<128x640xf32, #tpu.memory_space<vmem>>, %arg4: memref<128x512xf32, #tpu.memory_space<vmem>>, %arg5: memref<1x1152xf32, #tpu.memory_space<vmem>>, %arg6: memref<2x32xf32, #tpu.memory_space<vmem>>) attributes {dimension_semantics = [#tpu.dimension_semantics<parallel>], iteration_bounds = array<i64: 1>, scalar_prefetch = 0 : i64, scratch_operands = 0 : i64, tpu.core_type = #tpu.core_type<tc>, window_params = [{transform_indices = @transform_0, window_bounds = array<i64: 2, 32>}, {pipeline_mode = #tpu.pipeline_mode<synchronous>, transform_indices = @transform_1, window_bounds = array<i64: 32, 1152>}, {pipeline_mode = #tpu.pipeline_mode<synchronous>, transform_indices = @transform_2, window_bounds = array<i64: 128, 640>}, {pipeline_mode = #tpu.pipeline_mode<synchronous>, transform_indices = @transform_3, window_bounds = array<i64: 128, 512>}, {pipeline_mode = #tpu.pipeline_mode<synchronous>, transform_indices = @transform_4, window_bounds = array<i64: 1, 1152>}, {transform_indices = @transform_5, window_bounds = array<i64: 2, 32>}]} {
    %c0 = arith.constant 0 : index
    %c0_0 = arith.constant 0 : index
    %0 = vector.load %arg1[%c0, %c0_0] : memref<2x32xf32, #tpu.memory_space<vmem>>, vector<2x32xf32>
    %c0_1 = arith.constant 0 : index
    %c0_2 = arith.constant 0 : index
    %1 = vector.load %arg2[%c0_1, %c0_2] : memref<32x1152xf32, #tpu.memory_space<vmem>>, vector<32x1152xf32>
    %c0_3 = arith.constant 0 : index
    %c0_4 = arith.constant 0 : index
    %2 = vector.load %arg3[%c0_3, %c0_4] : memref<128x640xf32, #tpu.memory_space<vmem>>, vector<128x640xf32>
    %c0_5 = arith.constant 0 : index
    %c0_6 = arith.constant 0 : index
    %3 = vector.load %arg4[%c0_5, %c0_6] : memref<128x512xf32, #tpu.memory_space<vmem>>, vector<128x512xf32>
    %c0_7 = arith.constant 0 : index
    %c0_8 = arith.constant 0 : index
    %4 = vector.load %arg5[%c0_7, %c0_8] : memref<1x1152xf32, #tpu.memory_space<vmem>>, vector<1x1152xf32>
    %cst = arith.constant dense<0.000000e+00> : vector<2x1152xf32>
    %5 = tpu.matmul %0, %1, %cst {dimension_numbers = #tpu.dot_dimension_numbers<[1], [0], [0], [1], [0, 0, 1, 1], [], []>} : vector<2x32xf32>, vector<32x1152xf32>, vector<2x1152xf32> -> vector<2x1152xf32>
    %6 = vector.broadcast %4 : vector<1x1152xf32> to vector<2x1152xf32>
    %7 = arith.addf %5, %6 : vector<2x1152xf32>
    %8 = vector.extract_strided_slice %7 {offsets = [0, 0], sizes = [2, 512], strides = [1, 1]} : vector<2x1152xf32> to vector<2x512xf32>
    %9 = vector.extract_strided_slice %7 {offsets = [0, 512], sizes = [2, 512], strides = [1, 1]} : vector<2x1152xf32> to vector<2x512xf32>
    %10 = arith.addf %8, %9 : vector<2x512xf32>
    %11 = vector.extract_strided_slice %7 {offsets = [0, 1024], sizes = [2, 128], strides = [1, 1]} : vector<2x1152xf32> to vector<2x128xf32>
    %cst_9 = arith.constant 0.000000e+00 : f32
    %12 = vector.broadcast %cst_9 : f32 to vector<2x128xf32>
    %13 = vector.extract_strided_slice %8 {offsets = [0, 0], sizes = [2, 384], strides = [1, 1]} : vector<2x512xf32> to vector<2x384xf32>
    %14 = arith.negf %13 : vector<2x384xf32>
    %15 = math.exp %14 : vector<2x384xf32>
    %cst_10 = arith.constant 1.000000e+00 : f32
    %16 = vector.broadcast %cst_10 : f32 to vector<2x384xf32>
    %17 = arith.addf %16, %15 : vector<2x384xf32>
    %18 = arith.divf %16, %17 : vector<2x384xf32>
    %19 = vector.extract_strided_slice %8 {offsets = [0, 384], sizes = [2, 128], strides = [1, 1]} : vector<2x512xf32> to vector<2x128xf32>
    %20 = math.tanh %19 : vector<2x128xf32>
    %21 = vector.extract_strided_slice %18 {offsets = [0, 0], sizes = [2, 128], strides = [1, 1]} : vector<2x384xf32> to vector<2x128xf32>
    %22 = vector.extract_strided_slice %18 {offsets = [0, 128], sizes = [2, 128], strides = [1, 1]} : vector<2x384xf32> to vector<2x128xf32>
    %23 = vector.extract_strided_slice %18 {offsets = [0, 256], sizes = [2, 128], strides = [1, 1]} : vector<2x384xf32> to vector<2x128xf32>
    %24 = arith.mulf %22, %12 : vector<2x128xf32>
    %25 = arith.mulf %21, %20 : vector<2x128xf32>
    %26 = arith.addf %24, %25 : vector<2x128xf32>
    %27 = math.tanh %26 : vector<2x128xf32>
    %28 = arith.mulf %23, %27 : vector<2x128xf32>
    %cst_11 = arith.constant dense<0.000000e+00> : vector<2x640xf32>
    %29 = tpu.matmul %28, %2, %cst_11 {dimension_numbers = #tpu.dot_dimension_numbers<[1], [0], [0], [1], [0, 0, 1, 1], [], []>} : vector<2x128xf32>, vector<128x640xf32>, vector<2x640xf32> -> vector<2x640xf32>
    %30 = vector.extract_strided_slice %29 {offsets = [0, 512], sizes = [2, 128], strides = [1, 1]} : vector<2x640xf32> to vector<2x128xf32>
    %31 = arith.addf %11, %30 : vector<2x128xf32>
    %cst_12 = arith.constant dense<0xFF800000> : vector<2xf32>
    %32 = vector.multi_reduction <maximumf>, %31, %cst_12 [1] : vector<2x128xf32> to vector<2xf32>
    %33 = vector.shape_cast %32 : vector<2xf32> to vector<2x1xf32>
    %34 = vector.broadcast %33 : vector<2x1xf32> to vector<2x128xf32>
    %35 = arith.subf %31, %34 : vector<2x128xf32>
    %36 = math.exp %35 : vector<2x128xf32>
    %cst_13 = arith.constant dense<0.000000e+00> : vector<2xf32>
    %37 = vector.multi_reduction <add>, %36, %cst_13 [1] : vector<2x128xf32> to vector<2xf32>
    %38 = vector.shape_cast %37 : vector<2xf32> to vector<2x1xf32>
    %39 = tpu.reciprocal %38 {approx = true} : vector<2x1xf32> -> vector<2x1xf32>
    %40 = vector.broadcast %39 : vector<2x1xf32> to vector<2x128xf32>
    %41 = arith.mulf %36, %40 : vector<2x128xf32>
    %42 = vector.extract_strided_slice %29 {offsets = [0, 0], sizes = [2, 512], strides = [1, 1]} : vector<2x640xf32> to vector<2x512xf32>
    %43 = arith.addf %10, %42 : vector<2x512xf32>
    %cst_14 = arith.constant dense<0.000000e+00> : vector<2x512xf32>
    %44 = tpu.matmul %41, %3, %cst_14 {dimension_numbers = #tpu.dot_dimension_numbers<[1], [0], [0], [1], [0, 0, 1, 1], [], []>} : vector<2x128xf32>, vector<128x512xf32>, vector<2x512xf32> -> vector<2x512xf32>
    %45 = arith.addf %43, %44 : vector<2x512xf32>
    %46 = vector.extract_strided_slice %45 {offsets = [0, 0], sizes = [2, 384], strides = [1, 1]} : vector<2x512xf32> to vector<2x384xf32>
    %47 = arith.negf %46 : vector<2x384xf32>
    %48 = math.exp %47 : vector<2x384xf32>
    %cst_15 = arith.constant 1.000000e+00 : f32
    %49 = vector.broadcast %cst_15 : f32 to vector<2x384xf32>
    %50 = arith.addf %49, %48 : vector<2x384xf32>
    %51 = arith.divf %49, %50 : vector<2x384xf32>
    %52 = vector.extract_strided_slice %45 {offsets = [0, 384], sizes = [2, 128], strides = [1, 1]} : vector<2x512xf32> to vector<2x128xf32>
    %53 = math.tanh %52 : vector<2x128xf32>
    %54 = vector.extract_strided_slice %51 {offsets = [0, 0], sizes = [2, 128], strides = [1, 1]} : vector<2x384xf32> to vector<2x128xf32>
    %55 = vector.extract_strided_slice %51 {offsets = [0, 128], sizes = [2, 128], strides = [1, 1]} : vector<2x384xf32> to vector<2x128xf32>
    %56 = vector.extract_strided_slice %51 {offsets = [0, 256], sizes = [2, 128], strides = [1, 1]} : vector<2x384xf32> to vector<2x128xf32>
    %57 = arith.mulf %55, %26 : vector<2x128xf32>
    %58 = arith.mulf %54, %53 : vector<2x128xf32>
    %59 = arith.addf %57, %58 : vector<2x128xf32>
    %60 = math.tanh %59 : vector<2x128xf32>
    %61 = arith.mulf %56, %60 : vector<2x128xf32>
    %cst_16 = arith.constant dense<0.000000e+00> : vector<2x640xf32>
    %62 = tpu.matmul %61, %2, %cst_16 {dimension_numbers = #tpu.dot_dimension_numbers<[1], [0], [0], [1], [0, 0, 1, 1], [], []>} : vector<2x128xf32>, vector<128x640xf32>, vector<2x640xf32> -> vector<2x640xf32>
    %63 = vector.extract_strided_slice %62 {offsets = [0, 512], sizes = [2, 128], strides = [1, 1]} : vector<2x640xf32> to vector<2x128xf32>
    %64 = arith.addf %11, %63 : vector<2x128xf32>
    %cst_17 = arith.constant dense<0xFF800000> : vector<2xf32>
    %65 = vector.multi_reduction <maximumf>, %64, %cst_17 [1] : vector<2x128xf32> to vector<2xf32>
    %66 = vector.shape_cast %65 : vector<2xf32> to vector<2x1xf32>
    %67 = vector.broadcast %66 : vector<2x1xf32> to vector<2x128xf32>
    %68 = arith.subf %64, %67 : vector<2x128xf32>
    %69 = math.exp %68 : vector<2x128xf32>
    %cst_18 = arith.constant dense<0.000000e+00> : vector<2xf32>
    %70 = vector.multi_reduction <add>, %69, %cst_18 [1] : vector<2x128xf32> to vector<2xf32>
    %71 = vector.shape_cast %70 : vector<2xf32> to vector<2x1xf32>
    %72 = tpu.reciprocal %71 {approx = true} : vector<2x1xf32> -> vector<2x1xf32>
    %73 = vector.broadcast %72 : vector<2x1xf32> to vector<2x128xf32>
    %74 = arith.mulf %69, %73 : vector<2x128xf32>
    %75 = vector.extract_strided_slice %62 {offsets = [0, 0], sizes = [2, 512], strides = [1, 1]} : vector<2x640xf32> to vector<2x512xf32>
    %76 = arith.addf %10, %75 : vector<2x512xf32>
    %cst_19 = arith.constant dense<0.000000e+00> : vector<2x512xf32>
    %77 = tpu.matmul %74, %3, %cst_19 {dimension_numbers = #tpu.dot_dimension_numbers<[1], [0], [0], [1], [0, 0, 1, 1], [], []>} : vector<2x128xf32>, vector<128x512xf32>, vector<2x512xf32> -> vector<2x512xf32>
    %78 = arith.addf %76, %77 : vector<2x512xf32>
    %79 = vector.extract_strided_slice %78 {offsets = [0, 0], sizes = [2, 384], strides = [1, 1]} : vector<2x512xf32> to vector<2x384xf32>
    %80 = arith.negf %79 : vector<2x384xf32>
    %81 = math.exp %80 : vector<2x384xf32>
    %cst_20 = arith.constant 1.000000e+00 : f32
    %82 = vector.broadcast %cst_20 : f32 to vector<2x384xf32>
    %83 = arith.addf %82, %81 : vector<2x384xf32>
    %84 = arith.divf %82, %83 : vector<2x384xf32>
    %85 = vector.extract_strided_slice %78 {offsets = [0, 384], sizes = [2, 128], strides = [1, 1]} : vector<2x512xf32> to vector<2x128xf32>
    %86 = math.tanh %85 : vector<2x128xf32>
    %87 = vector.extract_strided_slice %84 {offsets = [0, 0], sizes = [2, 128], strides = [1, 1]} : vector<2x384xf32> to vector<2x128xf32>
    %88 = vector.extract_strided_slice %84 {offsets = [0, 128], sizes = [2, 128], strides = [1, 1]} : vector<2x384xf32> to vector<2x128xf32>
    %89 = vector.extract_strided_slice %84 {offsets = [0, 256], sizes = [2, 128], strides = [1, 1]} : vector<2x384xf32> to vector<2x128xf32>
    %90 = arith.mulf %88, %59 : vector<2x128xf32>
    %91 = arith.mulf %87, %86 : vector<2x128xf32>
    %92 = arith.addf %90, %91 : vector<2x128xf32>
    %93 = math.tanh %92 : vector<2x128xf32>
    %94 = arith.mulf %89, %93 : vector<2x128xf32>
    %cst_21 = arith.constant dense<0.000000e+00> : vector<2x640xf32>
    %95 = tpu.matmul %94, %2, %cst_21 {dimension_numbers = #tpu.dot_dimension_numbers<[1], [0], [0], [1], [0, 0, 1, 1], [], []>} : vector<2x128xf32>, vector<128x640xf32>, vector<2x640xf32> -> vector<2x640xf32>
    %96 = vector.extract_strided_slice %95 {offsets = [0, 512], sizes = [2, 128], strides = [1, 1]} : vector<2x640xf32> to vector<2x128xf32>
    %97 = arith.addf %11, %96 : vector<2x128xf32>
    %cst_22 = arith.constant dense<0xFF800000> : vector<2xf32>
    %98 = vector.multi_reduction <maximumf>, %97, %cst_22 [1] : vector<2x128xf32> to vector<2xf32>
    %99 = vector.shape_cast %98 : vector<2xf32> to vector<2x1xf32>
    %100 = vector.broadcast %99 : vector<2x1xf32> to vector<2x128xf32>
    %101 = arith.subf %97, %100 : vector<2x128xf32>
    %102 = math.exp %101 : vector<2x128xf32>
    %cst_23 = arith.constant dense<0.000000e+00> : vector<2xf32>
    %103 = vector.multi_reduction <add>, %102, %cst_23 [1] : vector<2x128xf32> to vector<2xf32>
    %104 = vector.shape_cast %103 : vector<2xf32> to vector<2x1xf32>
    %105 = tpu.reciprocal %104 {approx = true} : vector<2x1xf32> -> vector<2x1xf32>
    %106 = vector.broadcast %105 : vector<2x1xf32> to vector<2x128xf32>
    %107 = arith.mulf %102, %106 : vector<2x128xf32>
    %108 = vector.extract_strided_slice %95 {offsets = [0, 0], sizes = [2, 512], strides = [1, 1]} : vector<2x640xf32> to vector<2x512xf32>
    %109 = arith.addf %10, %108 : vector<2x512xf32>
    %cst_24 = arith.constant dense<0.000000e+00> : vector<2x512xf32>
    %110 = tpu.matmul %107, %3, %cst_24 {dimension_numbers = #tpu.dot_dimension_numbers<[1], [0], [0], [1], [0, 0, 1, 1], [], []>} : vector<2x128xf32>, vector<128x512xf32>, vector<2x512xf32> -> vector<2x512xf32>
    %111 = arith.addf %109, %110 : vector<2x512xf32>
    %112 = vector.extract_strided_slice %111 {offsets = [0, 0], sizes = [2, 384], strides = [1, 1]} : vector<2x512xf32> to vector<2x384xf32>
    %113 = arith.negf %112 : vector<2x384xf32>
    %114 = math.exp %113 : vector<2x384xf32>
    %cst_25 = arith.constant 1.000000e+00 : f32
    %115 = vector.broadcast %cst_25 : f32 to vector<2x384xf32>
    %116 = arith.addf %115, %114 : vector<2x384xf32>
    %117 = arith.divf %115, %116 : vector<2x384xf32>
    %118 = vector.extract_strided_slice %111 {offsets = [0, 384], sizes = [2, 128], strides = [1, 1]} : vector<2x512xf32> to vector<2x128xf32>
    %119 = math.tanh %118 : vector<2x128xf32>
    %120 = vector.extract_strided_slice %117 {offsets = [0, 0], sizes = [2, 128], strides = [1, 1]} : vector<2x384xf32> to vector<2x128xf32>
    %121 = vector.extract_strided_slice %117 {offsets = [0, 128], sizes = [2, 128], strides = [1, 1]} : vector<2x384xf32> to vector<2x128xf32>
    %122 = vector.extract_strided_slice %117 {offsets = [0, 256], sizes = [2, 128], strides = [1, 1]} : vector<2x384xf32> to vector<2x128xf32>
    %123 = arith.mulf %121, %92 : vector<2x128xf32>
    %124 = arith.mulf %120, %119 : vector<2x128xf32>
    %125 = arith.addf %123, %124 : vector<2x128xf32>
    %126 = math.tanh %125 : vector<2x128xf32>
    %127 = arith.mulf %122, %126 : vector<2x128xf32>
    %128 = vector.extract_strided_slice %127 {offsets = [0, 0], sizes = [2, 32], strides = [1, 1]} : vector<2x128xf32> to vector<2x32xf32>
    %129 = arith.addf %0, %128 : vector<2x32xf32>
    %c0_26 = arith.constant 0 : index
    %c0_27 = arith.constant 0 : index
    %130 = vector.load %arg6[%c0_26, %c0_27] : memref<2x32xf32, #tpu.memory_space<vmem>>, vector<2x32xf32>
    tpu.vector_store %arg6[%c0_26, %c0_27], %129 {strides = array<i32>} : memref<2x32xf32, #tpu.memory_space<vmem>>, vector<2x32xf32>,
    return
  }
  func.func @transform_0(%arg0: i32) -> (i32, i32) {
    %c0_i32 = arith.constant 0 : i32
    %c0_i32_0 = arith.constant 0 : i32
    return %arg0, %c0_i32 : i32, i32
  }
  func.func @transform_1(%arg0: i32) -> (i32, i32) {
    %c0_i32 = arith.constant 0 : i32
    %c0_i32_0 = arith.constant 0 : i32
    %c0_i32_1 = arith.constant 0 : i32
    return %c0_i32, %c0_i32_0 : i32, i32
  }
  func.func @transform_2(%arg0: i32) -> (i32, i32) {
    %c0_i32 = arith.constant 0 : i32
    %c0_i32_0 = arith.constant 0 : i32
    %c0_i32_1 = arith.constant 0 : i32
    return %c0_i32, %c0_i32_0 : i32, i32
  }
  func.func @transform_3(%arg0: i32) -> (i32, i32) {
    %c0_i32 = arith.constant 0 : i32
    %c0_i32_0 = arith.constant 0 : i32
    %c0_i32_1 = arith.constant 0 : i32
    return %c0_i32, %c0_i32_0 : i32, i32
  }
  func.func @transform_4(%arg0: i32) -> (i32, i32) {
    %c0_i32 = arith.constant 0 : i32
    %c0_i32_0 = arith.constant 0 : i32
    %c0_i32_1 = arith.constant 0 : i32
    return %c0_i32, %c0_i32_0 : i32, i32
  }
  func.func @transform_5(%arg0: i32) -> (i32, i32) {
    %c0_i32 = arith.constant 0 : i32
    %c0_i32_0 = arith.constant 0 : i32
    return %arg0, %c0_i32 : i32, i32
  }
}

</mosaic_0001>

<llo_original>
// kernel: tpu_custom_call.1
$region0: #{tpu_custom_call.1}
  #allocation0 [shape = 'u32[]', space=smem, size = 0x4, offset = 0x4, fixed_abs, tag = 'smem constant byte address 0x4 - core index']
  #allocation1 [shape = 'u32[144,128]{1,0:T(1,128)}', space=vmem, size = 0x12000, scoped, tag = 'internal scratch']
  %s0 = inlined_call_operand.hbm [shape: f32[2,32], index: 0, kind: input, shape index: {}]
  %s1 = inlined_call_operand.hbm [shape: f32[32,1152], index: 1, kind: input, shape index: {}]
  %s2 = inlined_call_operand.hbm [shape: f32[128,640], index: 2, kind: input, shape index: {}]
  %s3 = inlined_call_operand.hbm [shape: f32[128,512], index: 3, kind: input, shape index: {}]
  %s4 = inlined_call_operand.vmem [shape: f32[1,1152], index: 4, kind: input, shape index: {}]
  %s5 = inlined_call_operand.hbm [shape: f32[2,32], index: 5, kind: output, shape index: {}]
  %s6 = sld [smem:[#allocation0]]
  $region46: #{tpu_custom_call.1} parent=0
    _
  %s8 = ssub.s32 1, %s6
  %s9 = scalar_select 0, %s8, %s6
  $region1: #{tpu_custom_call.1} parent=0
    #allocation2 [shape = 'u8[1024]{0}', space=vmem, size = 0x400, scoped, tag = 'input window, operand 0, single buffered']
    #allocation3 [shape = 's32[1]{0}', space=sflag, size = 0x4, scoped, tag = 'scoped memory for tpu_custom_call.1']
    #allocation4 [shape = 's32[1]{0}', space=sflag, size = 0x4, scoped, tag = 'scoped memory for tpu_custom_call.1']
    #allocation5 [shape = 'u8[147456]{0}', space=vmem, size = 0x24000, scoped, tag = 'input window, operand 1, single buffered']
    #allocation6 [shape = 's32[1]{0}', space=sflag, size = 0x4, scoped, tag = 'scoped memory for tpu_custom_call.1']
    #allocation7 [shape = 'u8[327680]{0}', space=vmem, size = 0x50000, scoped, tag = 'input window, operand 2, single buffered']
    #allocation8 [shape = 'u8[262144]{0}', space=vmem, size = 0x40000, scoped, tag = 'input window, operand 3, single buffered']
    #allocation9 [shape = 's32[1]{0}', space=sflag, size = 0x4, scoped, tag = 'scoped memory for tpu_custom_call.1']
    #allocation10 [shape = 'u8[1024]{0}', space=vmem, size = 0x400, scoped, tag = 'output window, operand 0, single buffered']
    %10 = vsyncpa [#allocation3], 0
    %11 = vsyncpa [#allocation6], 0
    %12 = vsyncpa [#allocation9], 0
    %13 = vsyncpa [#allocation4], 0
    // Predicated region
    $region2: #{tpu_custom_call.1} parent=1 // pred_check
      _
    $region3: #{tpu_custom_call.1} parent=1 // pred_check_branch
      %15 = sbr.rel (0) target = $region5
    $region4: #{tpu_custom_call.1} parent=1 // pred_region
      %s17 = ssub.s32 32, 32
      %18 = vsyncadd [#allocation3], %s17
      %s20 = sshll.u32 [#allocation2], 4
      %s21 = int_to_ptr.vmem [resolvable:$true] %s20
      %23 = dma.hbm_to_vmem [thread:$0]  %s0, 32, %s21, [#allocation3]
    $region5: #{tpu_custom_call.1} parent=1 // pred_fallthru
      _
    // Predicated region
    $region6: #{tpu_custom_call.1} parent=1 // pred_check
      _
    $region7: #{tpu_custom_call.1} parent=1 // pred_check_branch
      %25 = sbr.rel (0) target = $region9
    $region8: #{tpu_custom_call.1} parent=1 // pred_region
      %s27 = ssub.s32 4608, 4608
      %28 = vsyncadd [#allocation6], %s27
      %s29 = sshll.u32 [#allocation5], 4
      %s30 = int_to_ptr.vmem [resolvable:$true] %s29
      %35 = dma.hbm_to_vmem [thread:$0]  %s1, 4608, %s30, [#allocation6], 1152, 1152, 72
    $region9: #{tpu_custom_call.1} parent=1 // pred_fallthru
      _
    // Predicated region
    $region10: #{tpu_custom_call.1} parent=1 // pred_check
      _
    $region11: #{tpu_custom_call.1} parent=1 // pred_check_branch
      %37 = sbr.rel (0) target = $region13
    $region12: #{tpu_custom_call.1} parent=1 // pred_region
      %s39 = ssub.s32 10240, 10240
      %40 = vsyncadd [#allocation6], %s39
      %s41 = sshll.u32 [#allocation7], 4
      %s42 = int_to_ptr.vmem [resolvable:$true] %s41
      %47 = dma.hbm_to_vmem [thread:$0]  %s2, 10240, %s42, [#allocation6], 640, 640, 40
    $region13: #{tpu_custom_call.1} parent=1 // pred_fallthru
      _
    // Predicated region
    $region14: #{tpu_custom_call.1} parent=1 // pred_check
      _
    $region15: #{tpu_custom_call.1} parent=1 // pred_check_branch
      %49 = sbr.rel (0) target = $region17
    $region16: #{tpu_custom_call.1} parent=1 // pred_region
      %s51 = ssub.s32 8192, 8192
      %52 = vsyncadd [#allocation9], %s51
      %s53 = sshll.u32 [#allocation8], 4
      %s54 = int_to_ptr.vmem [resolvable:$true] %s53
      %59 = dma.hbm_to_vmem [thread:$0]  %s3, 8192, %s54, [#allocation9], 512, 512, 32
    $region17: #{tpu_custom_call.1} parent=1 // pred_fallthru
      _
    // Predicated region
    $region18: #{tpu_custom_call.1} parent=1 // pred_check
      _
    $region19: #{tpu_custom_call.1} parent=1 // pred_check_branch
      %61 = sbr.rel (0) target = $region21
    $region20: #{tpu_custom_call.1} parent=1 // pred_region
      _
    $region21: #{tpu_custom_call.1} parent=1 // pred_fallthru
      _
    // Predicated region
    $region22: #{tpu_custom_call.1} parent=1 // pred_check
      _
    $region23: #{tpu_custom_call.1} parent=1 // pred_check_branch
      %63 = sbr.rel (0) target = $region25
    $region24: #{tpu_custom_call.1} parent=1 // pred_region
      %64 = dma.done [#allocation3], 32
    $region25: #{tpu_custom_call.1} parent=1 // pred_fallthru
      _
    // Predicated region
    $region26: #{tpu_custom_call.1} parent=1 // pred_check
      _
    $region27: #{tpu_custom_call.1} parent=1 // pred_check_branch
      %66 = sbr.rel (0) target = $region29
    $region28: #{tpu_custom_call.1} parent=1 // pred_region
      %67 = dma.done [#allocation6], 4608
    $region29: #{tpu_custom_call.1} parent=1 // pred_fallthru
      _
    // Predicated region
    $region30: #{tpu_custom_call.1} parent=1 // pred_check
      _
    $region31: #{tpu_custom_call.1} parent=1 // pred_check_branch
      %69 = sbr.rel (0) target = $region33
    $region32: #{tpu_custom_call.1} parent=1 // pred_region
      %70 = dma.done [#allocation6], 10240
    $region33: #{tpu_custom_call.1} parent=1 // pred_fallthru
      _
    // Predicated region
    $region34: #{tpu_custom_call.1} parent=1 // pred_check
      _
    $region35: #{tpu_custom_call.1} parent=1 // pred_check_branch
      %72 = sbr.rel (0) target = $region37
    $region36: #{tpu_custom_call.1} parent=1 // pred_region
      %73 = dma.done [#allocation9], 8192
    $region37: #{tpu_custom_call.1} parent=1 // pred_fallthru
      _
    %v74 = vld [vmem:[#allocation2] sm:$0x3]
    %v75 = vld [vmem:[#allocation5] sm:$0xff]
    %v76 = vld [vmem:[#allocation5 + $0x8] sm:$0xff]
    %v77 = vld [vmem:[#allocation5 + $0x10] sm:$0xff]
    %v78 = vld [vmem:[#allocation5 + $0x18] sm:$0xff]
    %v79 = vld [vmem:[#allocation5 + $0x20] sm:$0xff]
    %v80 = vld [vmem:[#allocation5 + $0x28] sm:$0xff]
    %v81 = vld [vmem:[#allocation5 + $0x30] sm:$0xff]
    %v82 = vld [vmem:[#allocation5 + $0x38] sm:$0xff]
    %v83 = vld [vmem:[#allocation5 + $0x40] sm:$0xff]
    %v84 = vld [vmem:[#allocation5 + $0x48] sm:$0xff]
    %v85 = vld [vmem:[#allocation5 + $0x50] sm:$0xff]
    %v86 = vld [vmem:[#allocation5 + $0x58] sm:$0xff]
    %v87 = vld [vmem:[#allocation5 + $0x60] sm:$0xff]
    %v88 = vld [vmem:[#allocation5 + $0x68] sm:$0xff]
    %v89 = vld [vmem:[#allocation5 + $0x70] sm:$0xff]
    %v90 = vld [vmem:[#allocation5 + $0x78] sm:$0xff]
    %v91 = vld [vmem:[#allocation5 + $0x80] sm:$0xff]
    %v92 = vld [vmem:[#allocation5 + $0x88] sm:$0xff]
    %v93 = vld [vmem:[#allocation5 + $0x90] sm:$0xff]
    %v94 = vld [vmem:[#allocation5 + $0x98] sm:$0xff]
    %v95 = vld [vmem:[#allocation5 + $0xa0] sm:$0xff]
    %v96 = vld [vmem:[#allocation5 + $0xa8] sm:$0xff]
    %v97 = vld [vmem:[#allocation5 + $0xb0] sm:$0xff]
    %v98 = vld [vmem:[#allocation5 + $0xb8] sm:$0xff]
    %v99 = vld [vmem:[#allocation5 + $0xc0] sm:$0xff]
    %v100 = vld [vmem:[#allocation5 + $0xc8] sm:$0xff]
    %v101 = vld [vmem:[#allocation5 + $0xd0] sm:$0xff]
    %v102 = vld [vmem:[#allocation5 + $0xd8] sm:$0xff]
    %v103 = vld [vmem:[#allocation5 + $0xe0] sm:$0xff]
    %v104 = vld [vmem:[#allocation5 + $0xe8] sm:$0xff]
    %v105 = vld [vmem:[#allocation5 + $0xf0] sm:$0xff]
    %v106 = vld [vmem:[#allocation5 + $0xf8] sm:$0xff]
    %v107 = vld [vmem:[#allocation5 + $0x100] sm:$0xff]
    %v108 = vld [vmem:[#allocation5 + $0x108] sm:$0xff]
    %v109 = vld [vmem:[#allocation5 + $0x110] sm:$0xff]
    %v110 = vld [vmem:[#allocation5 + $0x118] sm:$0xff]
    %v111 = vld [vmem:[#allocation7] sm:$0xff]
    %v112 = vld [vmem:[#allocation7 + $0x8] sm:$0xff]
    %v113 = vld [vmem:[#allocation7 + $0x10] sm:$0xff]
    %v114 = vld [vmem:[#allocation7 + $0x18] sm:$0xff]
    %v115 = vld [vmem:[#allocation7 + $0x20] sm:$0xff]
    %v116 = vld [vmem:[#allocation7 + $0x28] sm:$0xff]
    %v117 = vld [vmem:[#allocation7 + $0x30] sm:$0xff]
    %v118 = vld [vmem:[#allocation7 + $0x38] sm:$0xff]
    %v119 = vld [vmem:[#allocation7 + $0x40] sm:$0xff]
    %v120 = vld [vmem:[#allocation7 + $0x48] sm:$0xff]
    %v121 = vld [vmem:[#allocation7 + $0x50] sm:$0xff]
    %v122 = vld [vmem:[#allocation7 + $0x58] sm:$0xff]
    %v123 = vld [vmem:[#allocation7 + $0x60] sm:$0xff]
    %v124 = vld [vmem:[#allocation7 + $0x68] sm:$0xff]
    %v125 = vld [vmem:[#allocation7 + $0x70] sm:$0xff]
    %v126 = vld [vmem:[#allocation7 + $0x78] sm:$0xff]
    %v127 = vld [vmem:[#allocation7 + $0x80] sm:$0xff]
    %v128 = vld [vmem:[#allocation7 + $0x88] sm:$0xff]
    %v129 = vld [vmem:[#allocation7 + $0x90] sm:$0xff]
    %v130 = vld [vmem:[#allocation7 + $0x98] sm:$0xff]
    %v131 = vld [vmem:[#allocation7 + $0xa0] sm:$0xff]
    %v132 = vld [vmem:[#allocation7 + $0xa8] sm:$0xff]
    %v133 = vld [vmem:[#allocation7 + $0xb0] sm:$0xff]
    %v134 = vld [vmem:[#allocation7 + $0xb8] sm:$0xff]
    %v135 = vld [vmem:[#allocation7 + $0xc0] sm:$0xff]
    %v136 = vld [vmem:[#allocation7 + $0xc8] sm:$0xff]
    %v137 = vld [vmem:[#allocation7 + $0xd0] sm:$0xff]
    %v138 = vld [vmem:[#allocation7 + $0xd8] sm:$0xff]
    %v139 = vld [vmem:[#allocation7 + $0xe0] sm:$0xff]
    %v140 = vld [vmem:[#allocation7 + $0xe8] sm:$0xff]
    %v141 = vld [vmem:[#allocation7 + $0xf0] sm:$0xff]
    %v142 = vld [vmem:[#allocation7 + $0xf8] sm:$0xff]
    %v143 = vld [vmem:[#allocation7 + $0x100] sm:$0xff]
    %v144 = vld [vmem:[#allocation7 + $0x108] sm:$0xff]
    %v145 = vld [vmem:[#allocation7 + $0x110] sm:$0xff]
    %v146 = vld [vmem:[#allocation7 + $0x118] sm:$0xff]
    %v147 = vld [vmem:[#allocation7 + $0x120] sm:$0xff]
    %v148 = vld [vmem:[#allocation7 + $0x128] sm:$0xff]
    %v149 = vld [vmem:[#allocation7 + $0x130] sm:$0xff]
    %v150 = vld [vmem:[#allocation7 + $0x138] sm:$0xff]
    %v151 = vld [vmem:[#allocation7 + $0x140] sm:$0xff]
    %v152 = vld [vmem:[#allocation7 + $0x148] sm:$0xff]
    %v153 = vld [vmem:[#allocation7 + $0x150] sm:$0xff]
    %v154 = vld [vmem:[#allocation7 + $0x158] sm:$0xff]
    %v155 = vld [vmem:[#allocation7 + $0x160] sm:$0xff]
    %v156 = vld [vmem:[#allocation7 + $0x168] sm:$0xff]
    %v157 = vld [vmem:[#allocation7 + $0x170] sm:$0xff]
    %v158 = vld [vmem:[#allocation7 + $0x178] sm:$0xff]
    %v159 = vld [vmem:[#allocation7 + $0x180] sm:$0xff]
    %v160 = vld [vmem:[#allocation7 + $0x188] sm:$0xff]
    %v161 = vld [vmem:[#allocation7 + $0x190] sm:$0xff]
    %v162 = vld [vmem:[#allocation7 + $0x198] sm:$0xff]
    %v163 = vld [vmem:[#allocation7 + $0x1a0] sm:$0xff]
    %v164 = vld [vmem:[#allocation7 + $0x1a8] sm:$0xff]
    %v165 = vld [vmem:[#allocation7 + $0x1b0] sm:$0xff]
    %v166 = vld [vmem:[#allocation7 + $0x1b8] sm:$0xff]
    %v167 = vld [vmem:[#allocation7 + $0x1c0] sm:$0xff]
    %v168 = vld [vmem:[#allocation7 + $0x1c8] sm:$0xff]
    %v169 = vld [vmem:[#allocation7 + $0x1d0] sm:$0xff]
    %v170 = vld [vmem:[#allocation7 + $0x1d8] sm:$0xff]
    %v171 = vld [vmem:[#allocation7 + $0x1e0] sm:$0xff]
    %v172 = vld [vmem:[#allocation7 + $0x1e8] sm:$0xff]
    %v173 = vld [vmem:[#allocation7 + $0x1f0] sm:$0xff]
    %v174 = vld [vmem:[#allocation7 + $0x1f8] sm:$0xff]
    %v175 = vld [vmem:[#allocation7 + $0x200] sm:$0xff]
    %v176 = vld [vmem:[#allocation7 + $0x208] sm:$0xff]
    %v177 = vld [vmem:[#allocation7 + $0x210] sm:$0xff]
    %v178 = vld [vmem:[#allocation7 + $0x218] sm:$0xff]
    %v179 = vld [vmem:[#allocation7 + $0x220] sm:$0xff]
    %v180 = vld [vmem:[#allocation7 + $0x228] sm:$0xff]
    %v181 = vld [vmem:[#allocation7 + $0x230] sm:$0xff]
    %v182 = vld [vmem:[#allocation7 + $0x238] sm:$0xff]
    %v183 = vld [vmem:[#allocation7 + $0x240] sm:$0xff]
    %v184 = vld [vmem:[#allocation7 + $0x248] sm:$0xff]
    %v185 = vld [vmem:[#allocation7 + $0x250] sm:$0xff]
    %v186 = vld [vmem:[#allocation7 + $0x258] sm:$0xff]
    %v187 = vld [vmem:[#allocation7 + $0x260] sm:$0xff]
    %v188 = vld [vmem:[#allocation7 + $0x268] sm:$0xff]
    %v189 = vld [vmem:[#allocation7 + $0x270] sm:$0xff]
    %v190 = vld [vmem:[#allocation7 + $0x278] sm:$0xff]
    %v191 = vld [vmem:[#allocation8] sm:$0xff]
    %v192 = vld [vmem:[#allocation8 + $0x8] sm:$0xff]
    %v193 = vld [vmem:[#allocation8 + $0x10] sm:$0xff]
    %v194 = vld [vmem:[#allocation8 + $0x18] sm:$0xff]
    %v195 = vld [vmem:[#allocation8 + $0x20] sm:$0xff]
    %v196 = vld [vmem:[#allocation8 + $0x28] sm:$0xff]
    %v197 = vld [vmem:[#allocation8 + $0x30] sm:$0xff]
    %v198 = vld [vmem:[#allocation8 + $0x38] sm:$0xff]
    %v199 = vld [vmem:[#allocation8 + $0x40] sm:$0xff]
    %v200 = vld [vmem:[#allocation8 + $0x48] sm:$0xff]
    %v201 = vld [vmem:[#allocation8 + $0x50] sm:$0xff]
    %v202 = vld [vmem:[#allocation8 + $0x58] sm:$0xff]
    %v203 = vld [vmem:[#allocation8 + $0x60] sm:$0xff]
    %v204 = vld [vmem:[#allocation8 + $0x68] sm:$0xff]
    %v205 = vld [vmem:[#allocation8 + $0x70] sm:$0xff]
    %v206 = vld [vmem:[#allocation8 + $0x78] sm:$0xff]
    %v207 = vld [vmem:[#allocation8 + $0x80] sm:$0xff]
    %v208 = vld [vmem:[#allocation8 + $0x88] sm:$0xff]
    %v209 = vld [vmem:[#allocation8 + $0x90] sm:$0xff]
    %v210 = vld [vmem:[#allocation8 + $0x98] sm:$0xff]
    %v211 = vld [vmem:[#allocation8 + $0xa0] sm:$0xff]
    %v212 = vld [vmem:[#allocation8 + $0xa8] sm:$0xff]
    %v213 = vld [vmem:[#allocation8 + $0xb0] sm:$0xff]
    %v214 = vld [vmem:[#allocation8 + $0xb8] sm:$0xff]
    %v215 = vld [vmem:[#allocation8 + $0xc0] sm:$0xff]
    %v216 = vld [vmem:[#allocation8 + $0xc8] sm:$0xff]
    %v217 = vld [vmem:[#allocation8 + $0xd0] sm:$0xff]
    %v218 = vld [vmem:[#allocation8 + $0xd8] sm:$0xff]
    %v219 = vld [vmem:[#allocation8 + $0xe0] sm:$0xff]
    %v220 = vld [vmem:[#allocation8 + $0xe8] sm:$0xff]
    %v221 = vld [vmem:[#allocation8 + $0xf0] sm:$0xff]
    %v222 = vld [vmem:[#allocation8 + $0xf8] sm:$0xff]
    %v223 = vld [vmem:[#allocation8 + $0x100] sm:$0xff]
    %v224 = vld [vmem:[#allocation8 + $0x108] sm:$0xff]
    %v225 = vld [vmem:[#allocation8 + $0x110] sm:$0xff]
    %v226 = vld [vmem:[#allocation8 + $0x118] sm:$0xff]
    %v227 = vld [vmem:[#allocation8 + $0x120] sm:$0xff]
    %v228 = vld [vmem:[#allocation8 + $0x128] sm:$0xff]
    %v229 = vld [vmem:[#allocation8 + $0x130] sm:$0xff]
    %v230 = vld [vmem:[#allocation8 + $0x138] sm:$0xff]
    %v231 = vld [vmem:[#allocation8 + $0x140] sm:$0xff]
    %v232 = vld [vmem:[#allocation8 + $0x148] sm:$0xff]
    %v233 = vld [vmem:[#allocation8 + $0x150] sm:$0xff]
    %v234 = vld [vmem:[#allocation8 + $0x158] sm:$0xff]
    %v235 = vld [vmem:[#allocation8 + $0x160] sm:$0xff]
    %v236 = vld [vmem:[#allocation8 + $0x168] sm:$0xff]
    %v237 = vld [vmem:[#allocation8 + $0x170] sm:$0xff]
    %v238 = vld [vmem:[#allocation8 + $0x178] sm:$0xff]
    %v239 = vld [vmem:[#allocation8 + $0x180] sm:$0xff]
    %v240 = vld [vmem:[#allocation8 + $0x188] sm:$0xff]
    %v241 = vld [vmem:[#allocation8 + $0x190] sm:$0xff]
    %v242 = vld [vmem:[#allocation8 + $0x198] sm:$0xff]
    %v243 = vld [vmem:[#allocation8 + $0x1a0] sm:$0xff]
    %v244 = vld [vmem:[#allocation8 + $0x1a8] sm:$0xff]
    %v245 = vld [vmem:[#allocation8 + $0x1b0] sm:$0xff]
    %v246 = vld [vmem:[#allocation8 + $0x1b8] sm:$0xff]
    %v247 = vld [vmem:[#allocation8 + $0x1c0] sm:$0xff]
    %v248 = vld [vmem:[#allocation8 + $0x1c8] sm:$0xff]
    %v249 = vld [vmem:[#allocation8 + $0x1d0] sm:$0xff]
    %v250 = vld [vmem:[#allocation8 + $0x1d8] sm:$0xff]
    %v251 = vld [vmem:[#allocation8 + $0x1e0] sm:$0xff]
    %v252 = vld [vmem:[#allocation8 + $0x1e8] sm:$0xff]
    %v253 = vld [vmem:[#allocation8 + $0x1f0] sm:$0xff]
    %v254 = vld [vmem:[#allocation8 + $0x1f8] sm:$0xff]
    %v255 = vld [vmem:[%s4] sm:$0xff]
    %v256 = vld [vmem:[%s4 + $0x8] sm:$0x1]
    %v259 = vlaneseq
    %v260 = vshrl.u32 %v259, 7
    %v261 = vsub.s32 0, %v260
    %v262 = vrot.slane %v255, %v261
    %v263 = vlaneseq
    %v264 = vshrl.u32 %v263, 7
    %v265 = vsub.s32 1, %v264
    %v266 = vrot.slane %v255, %v265
    %v267 = vlaneseq
    %v268 = vshrl.u32 %v267, 7
    %v269 = vsub.s32 2, %v268
    %v270 = vrot.slane %v255, %v269
    %v271 = vlaneseq
    %v272 = vshrl.u32 %v271, 7
    %v273 = vsub.s32 3, %v272
    %v274 = vrot.slane %v255, %v273
    %v275 = vlaneseq
    %v276 = vshrl.u32 %v275, 7
    %v277 = vsub.s32 4, %v276
    %v278 = vrot.slane %v255, %v277
    %v279 = vlaneseq
    %v280 = vshrl.u32 %v279, 7
    %v281 = vsub.s32 5, %v280
    %v282 = vrot.slane %v255, %v281
    %v283 = vlaneseq
    %v284 = vshrl.u32 %v283, 7
    %v285 = vsub.s32 6, %v284
    %v286 = vrot.slane %v255, %v285
    %v287 = vlaneseq
    %v288 = vshrl.u32 %v287, 7
    %v289 = vsub.s32 7, %v288
    %v290 = vrot.slane %v255, %v289
    %v291 = vlaneseq
    %v292 = vshrl.u32 %v291, 7
    %v293 = vsub.s32 0, %v292
    %v294 = vrot.slane %v256, %v293
    %vm304 = vcmask 261120
    %v306 = vsel %vm304, %v74, 0
    %308 = vmatprep.subr.mxu0 %v76
    %309 = vmatpush1.msra.mxu0 %v75
    %310 = vmatprep.subr.mxu0 %v85
    %311 = vmatpush1.msra.mxu0 %v84
    %312 = vmatprep.subr.mxu0 %v94
    %313 = vmatpush1.msra.mxu0 %v93
    %314 = vmatprep.subr.mxu0 %v103
    %315 = vmatpush1.msra.mxu0 %v102
    %316 = vmatprep.subr.mxu0 0.0
    %317 = vmatpush1.msra.mxu0 0.0
    %318 = vmatprep.subr.mxu0 0.0
    %319 = vmatpush1.msra.mxu0 0.0
    %320 = vmatprep.subr.mxu0 0.0
    %321 = vmatpush1.msra.mxu0 0.0
    %322 = vmatprep.subr.mxu0 0.0
    %323 = vmatpush1.msra.mxu0 0.0
    %324 = vmatprep.subr.mxu0 0.0
    %325 = vmatpush1.msra.mxu0 0.0
    %326 = vmatprep.subr.mxu0 0.0
    %327 = vmatpush1.msra.mxu0 0.0
    %328 = vmatprep.subr.mxu0 0.0
    %329 = vmatpush1.msra.mxu0 0.0
    %330 = vmatprep.subr.mxu0 0.0
    %331 = vmatpush1.msra.mxu0 0.0
    %332 = vmatprep.subr.mxu0 0.0
    %333 = vmatpush1.msra.mxu0 0.0
    %334 = vmatprep.subr.mxu0 0.0
    %335 = vmatpush1.msra.mxu0 0.0
    %336 = vmatprep.subr.mxu0 0.0
    %337 = vmatpush1.msra.mxu0 0.0
    %338 = vmatprep.subr.mxu0 0.0
    %339 = vmatpush1.msra.mxu0 0.0
    %340 = vmatprep.subr.mxu0 0.0
    %341 = vmatpush1.msra.mxu0 0.0
    %342 = vmatprep.subr.mxu0 0.0
    %343 = vmatpush1.msra.mxu0 0.0
    %344 = vmatprep.subr.mxu0 0.0
    %345 = vmatpush1.msra.mxu0 0.0
    %346 = vmatprep.subr.mxu0 0.0
    %347 = vmatpush1.msra.mxu0 0.0
    %348 = vmatprep.subr.mxu0 0.0
    %349 = vmatpush1.msra.mxu0 0.0
    %350 = vmatprep.subr.mxu0 0.0
    %351 = vmatpush1.msra.mxu0 0.0
    %352 = vmatprep.subr.mxu0 0.0
    %353 = vmatpush1.msra.mxu0 0.0
    %354 = vmatprep.subr.mxu0 0.0
    %355 = vmatpush1.msra.mxu0 0.0
    %356 = vmatprep.subr.mxu0 0.0
    %357 = vmatpush1.msra.mxu0 0.0
    %358 = vmatprep.subr.mxu0 0.0
    %359 = vmatpush1.msra.mxu0 0.0
    %360 = vmatprep.subr.mxu0 0.0
    %361 = vmatpush1.msra.mxu0 0.0
    %362 = vmatprep.subr.mxu0 0.0
    %363 = vmatpush1.msra.mxu0 0.0
    %364 = vmatprep.subr.mxu0 0.0
    %365 = vmatpush1.msra.mxu0 0.0
    %366 = vmatprep.subr.mxu0 0.0
    %367 = vmatpush1.msra.mxu0 0.0
    %368 = vmatprep.subr.mxu0 0.0
    %369 = vmatpush1.msra.mxu0 0.0
    %370 = vmatprep.subr.mxu0 0.0
    %371 = vmatpush1.msra.mxu0 0.0
    %372 = vmatprep.mubr.f32.mxu0 0.0
    %373 = vmatmul.mubr.f32.gmra.mrb[0].mxu0 %v306
    %v374 = vpop.f32.mrb[0].mxu0
    %v375 = vadd.f32 %v262, %v374
    %v376 = vpop.f32.mrb[0].mxu0
    %v377 = vadd.f32 %v266, %v376
    %378 = vdwg.mxu0
    %379 = vmatprep.subr.mxu0 %v78
    %380 = vmatpush1.msra.mxu0 %v77
    %381 = vmatprep.subr.mxu0 %v87
    %382 = vmatpush1.msra.mxu0 %v86
    %383 = vmatprep.subr.mxu0 %v96
    %384 = vmatpush1.msra.mxu0 %v95
    %385 = vmatprep.subr.mxu0 %v105
    %386 = vmatpush1.msra.mxu0 %v104
    %387 = vmatprep.subr.mxu0 0.0
    %388 = vmatpush1.msra.mxu0 0.0
    %389 = vmatprep.subr.mxu0 0.0
    %390 = vmatpush1.msra.mxu0 0.0
    %391 = vmatprep.subr.mxu0 0.0
    %392 = vmatpush1.msra.mxu0 0.0
    %393 = vmatprep.subr.mxu0 0.0
    %394 = vmatpush1.msra.mxu0 0.0
    %395 = vmatprep.subr.mxu0 0.0
    %396 = vmatpush1.msra.mxu0 0.0
    %397 = vmatprep.subr.mxu0 0.0
    %398 = vmatpush1.msra.mxu0 0.0
    %399 = vmatprep.subr.mxu0 0.0
    %400 = vmatpush1.msra.mxu0 0.0
    %401 = vmatprep.subr.mxu0 0.0
    %402 = vmatpush1.msra.mxu0 0.0
    %403 = vmatprep.subr.mxu0 0.0
    %404 = vmatpush1.msra.mxu0 0.0
    %405 = vmatprep.subr.mxu0 0.0
    %406 = vmatpush1.msra.mxu0 0.0
    %407 = vmatprep.subr.mxu0 0.0
    %408 = vmatpush1.msra.mxu0 0.0
    %409 = vmatprep.subr.mxu0 0.0
    %410 = vmatpush1.msra.mxu0 0.0
    %411 = vmatprep.subr.mxu0 0.0
    %412 = vmatpush1.msra.mxu0 0.0
    %413 = vmatprep.subr.mxu0 0.0
    %414 = vmatpush1.msra.mxu0 0.0
    %415 = vmatprep.subr.mxu0 0.0
    %416 = vmatpush1.msra.mxu0 0.0
    %417 = vmatprep.subr.mxu0 0.0
    %418 = vmatpush1.msra.mxu0 0.0
    %419 = vmatprep.subr.mxu0 0.0
    %420 = vmatpush1.msra.mxu0 0.0
    %421 = vmatprep.subr.mxu0 0.0
    %422 = vmatpush1.msra.mxu0 0.0
    %423 = vmatprep.subr.mxu0 0.0
    %424 = vmatpush1.msra.mxu0 0.0
    %425 = vmatprep.subr.mxu0 0.0
    %426 = vmatpush1.msra.mxu0 0.0
    %427 = vmatprep.subr.mxu0 0.0
    %428 = vmatpush1.msra.mxu0 0.0
    %429 = vmatprep.subr.mxu0 0.0
    %430 = vmatpush1.msra.mxu0 0.0
    %431 = vmatprep.subr.mxu0 0.0
    %432 = vmatpush1.msra.mxu0 0.0
    %433 = vmatprep.subr.mxu0 0.0
    %434 = vmatpush1.msra.mxu0 0.0
    %435 = vmatprep.subr.mxu0 0.0
    %436 = vmatpush1.msra.mxu0 0.0
    %437 = vmatprep.subr.mxu0 0.0
    %438 = vmatpush1.msra.mxu0 0.0
    %439 = vmatprep.subr.mxu0 0.0
    %440 = vmatpush1.msra.mxu0 0.0
    %441 = vmatprep.subr.mxu0 0.0
    %442 = vmatpush1.msra.mxu0 0.0
    %443 = vmatprep.mubr.f32.mxu0 0.0
    %444 = vmatmul.mubr.f32.gmra.mrb[0].mxu0 %v306
    %v445 = vpop.f32.mrb[0].mxu0
    %v446 = vadd.f32 %v270, %v445
    %v447 = vpop.f32.mrb[0].mxu0
    %v448 = vadd.f32 %v274, %v447
    %449 = vdwg.mxu0
    %450 = vmatprep.subr.mxu0 %v80
    %451 = vmatpush1.msra.mxu0 %v79
    %452 = vmatprep.subr.mxu0 %v89
    %453 = vmatpush1.msra.mxu0 %v88
    %454 = vmatprep.subr.mxu0 %v98
    %455 = vmatpush1.msra.mxu0 %v97
    %456 = vmatprep.subr.mxu0 %v107
    %457 = vmatpush1.msra.mxu0 %v106
    %458 = vmatprep.subr.mxu0 0.0
    %459 = vmatpush1.msra.mxu0 0.0
    %460 = vmatprep.subr.mxu0 0.0
    %461 = vmatpush1.msra.mxu0 0.0
    %462 = vmatprep.subr.mxu0 0.0
    %463 = vmatpush1.msra.mxu0 0.0
    %464 = vmatprep.subr.mxu0 0.0
    %465 = vmatpush1.msra.mxu0 0.0
    %466 = vmatprep.subr.mxu0 0.0
    %467 = vmatpush1.msra.mxu0 0.0
    %468 = vmatprep.subr.mxu0 0.0
    %469 = vmatpush1.msra.mxu0 0.0
    %470 = vmatprep.subr.mxu0 0.0
    %471 = vmatpush1.msra.mxu0 0.0
    %472 = vmatprep.subr.mxu0 0.0
    %473 = vmatpush1.msra.mxu0 0.0
    %474 = vmatprep.subr.mxu0 0.0
    %475 = vmatpush1.msra.mxu0 0.0
    %476 = vmatprep.subr.mxu0 0.0
    %477 = vmatpush1.msra.mxu0 0.0
    %478 = vmatprep.subr.mxu0 0.0
    %479 = vmatpush1.msra.mxu0 0.0
    %480 = vmatprep.subr.mxu0 0.0
    %481 = vmatpush1.msra.mxu0 0.0
    %482 = vmatprep.subr.mxu0 0.0
    %483 = vmatpush1.msra.mxu0 0.0
    %484 = vmatprep.subr.mxu0 0.0
    %485 = vmatpush1.msra.mxu0 0.0
    %486 = vmatprep.subr.mxu0 0.0
    %487 = vmatpush1.msra.mxu0 0.0
    %488 = vmatprep.subr.mxu0 0.0
    %489 = vmatpush1.msra.mxu0 0.0
    %490 = vmatprep.subr.mxu0 0.0
    %491 = vmatpush1.msra.mxu0 0.0
    %492 = vmatprep.subr.mxu0 0.0
    %493 = vmatpush1.msra.mxu0 0.0
    %494 = vmatprep.subr.mxu0 0.0
    %495 = vmatpush1.msra.mxu0 0.0
    %496 = vmatprep.subr.mxu0 0.0
    %497 = vmatpush1.msra.mxu0 0.0
    %498 = vmatprep.subr.mxu0 0.0
    %499 = vmatpush1.msra.mxu0 0.0
    %500 = vmatprep.subr.mxu0 0.0
    %501 = vmatpush1.msra.mxu0 0.0
    %502 = vmatprep.subr.mxu0 0.0
    %503 = vmatpush1.msra.mxu0 0.0
    %504 = vmatprep.subr.mxu0 0.0
    %505 = vmatpush1.msra.mxu0 0.0
    %506 = vmatprep.subr.mxu0 0.0
    %507 = vmatpush1.msra.mxu0 0.0
    %508 = vmatprep.subr.mxu0 0.0
    %509 = vmatpush1.msra.mxu0 0.0
    %510 = vmatprep.subr.mxu0 0.0
    %511 = vmatpush1.msra.mxu0 0.0
    %512 = vmatprep.subr.mxu0 0.0
    %513 = vmatpush1.msra.mxu0 0.0
    %514 = vmatprep.mubr.f32.mxu0 0.0
    %515 = vmatmul.mubr.f32.gmra.mrb[0].mxu0 %v306
    %v516 = vpop.f32.mrb[0].mxu0
    %v517 = vadd.f32 %v278, %v516
    %v518 = vpop.f32.mrb[0].mxu0
    %v519 = vadd.f32 %v282, %v518
    %520 = vdwg.mxu0
    %521 = vmatprep.subr.mxu0 %v82
    %522 = vmatpush1.msra.mxu0 %v81
    %523 = vmatprep.subr.mxu0 %v91
    %524 = vmatpush1.msra.mxu0 %v90
    %525 = vmatprep.subr.mxu0 %v100
    %526 = vmatpush1.msra.mxu0 %v99
    %527 = vmatprep.subr.mxu0 %v109
    %528 = vmatpush1.msra.mxu0 %v108
    %529 = vmatprep.subr.mxu0 0.0
    %530 = vmatpush1.msra.mxu0 0.0
    %531 = vmatprep.subr.mxu0 0.0
    %532 = vmatpush1.msra.mxu0 0.0
    %533 = vmatprep.subr.mxu0 0.0
    %534 = vmatpush1.msra.mxu0 0.0
    %535 = vmatprep.subr.mxu0 0.0
    %536 = vmatpush1.msra.mxu0 0.0
    %537 = vmatprep.subr.mxu0 0.0
    %538 = vmatpush1.msra.mxu0 0.0
    %539 = vmatprep.subr.mxu0 0.0
    %540 = vmatpush1.msra.mxu0 0.0
    %541 = vmatprep.subr.mxu0 0.0
    %542 = vmatpush1.msra.mxu0 0.0
    %543 = vmatprep.subr.mxu0 0.0
    %544 = vmatpush1.msra.mxu0 0.0
    %545 = vmatprep.subr.mxu0 0.0
    %546 = vmatpush1.msra.mxu0 0.0
    %547 = vmatprep.subr.mxu0 0.0
    %548 = vmatpush1.msra.mxu0 0.0
    %549 = vmatprep.subr.mxu0 0.0
    %550 = vmatpush1.msra.mxu0 0.0
    %551 = vmatprep.subr.mxu0 0.0
    %552 = vmatpush1.msra.mxu0 0.0
    %553 = vmatprep.subr.mxu0 0.0
    %554 = vmatpush1.msra.mxu0 0.0
    %555 = vmatprep.subr.mxu0 0.0
    %556 = vmatpush1.msra.mxu0 0.0
    %557 = vmatprep.subr.mxu0 0.0
    %558 = vmatpush1.msra.mxu0 0.0
    %559 = vmatprep.subr.mxu0 0.0
    %560 = vmatpush1.msra.mxu0 0.0
    %561 = vmatprep.subr.mxu0 0.0
    %562 = vmatpush1.msra.mxu0 0.0
    %563 = vmatprep.subr.mxu0 0.0
    %564 = vmatpush1.msra.mxu0 0.0
    %565 = vmatprep.subr.mxu0 0.0
    %566 = vmatpush1.msra.mxu0 0.0
    %567 = vmatprep.subr.mxu0 0.0
    %568 = vmatpush1.msra.mxu0 0.0
    %569 = vmatprep.subr.mxu0 0.0
    %570 = vmatpush1.msra.mxu0 0.0
    %571 = vmatprep.subr.mxu0 0.0
    %572 = vmatpush1.msra.mxu0 0.0
    %573 = vmatprep.subr.mxu0 0.0
    %574 = vmatpush1.msra.mxu0 0.0
    %575 = vmatprep.subr.mxu0 0.0
    %576 = vmatpush1.msra.mxu0 0.0
    %577 = vmatprep.subr.mxu0 0.0
    %578 = vmatpush1.msra.mxu0 0.0
    %579 = vmatprep.subr.mxu0 0.0
    %580 = vmatpush1.msra.mxu0 0.0
    %581 = vmatprep.subr.mxu0 0.0
    %582 = vmatpush1.msra.mxu0 0.0
    %583 = vmatprep.subr.mxu0 0.0
    %584 = vmatpush1.msra.mxu0 0.0
    %585 = vmatprep.mubr.f32.mxu0 0.0
    %586 = vmatmul.mubr.f32.gmra.mrb[0].mxu0 %v306
    %v587 = vpop.f32.mrb[0].mxu0
    %v588 = vadd.f32 %v286, %v587
    %v589 = vpop.f32.mrb[0].mxu0
    %v590 = vadd.f32 %v290, %v589
    %591 = vdwg.mxu0
    %592 = vmatprep.subr.mxu0 0.0
    %593 = vmatpush1.msra.mxu0 %v83
    %594 = vmatprep.subr.mxu0 0.0
    %595 = vmatpush1.msra.mxu0 %v92
    %596 = vmatprep.subr.mxu0 0.0
    %597 = vmatpush1.msra.mxu0 %v101
    %598 = vmatprep.subr.mxu0 0.0
    %599 = vmatpush1.msra.mxu0 %v110
    %600 = vmatprep.subr.mxu0 0.0
    %601 = vmatpush1.msra.mxu0 0.0
    %602 = vmatprep.subr.mxu0 0.0
    %603 = vmatpush1.msra.mxu0 0.0
    %604 = vmatprep.subr.mxu0 0.0
    %605 = vmatpush1.msra.mxu0 0.0
    %606 = vmatprep.subr.mxu0 0.0
    %607 = vmatpush1.msra.mxu0 0.0
    %608 = vmatprep.subr.mxu0 0.0
    %609 = vmatpush1.msra.mxu0 0.0
    %610 = vmatprep.subr.mxu0 0.0
    %611 = vmatpush1.msra.mxu0 0.0
    %612 = vmatprep.subr.mxu0 0.0
    %613 = vmatpush1.msra.mxu0 0.0
    %614 = vmatprep.subr.mxu0 0.0
    %615 = vmatpush1.msra.mxu0 0.0
    %616 = vmatprep.subr.mxu0 0.0
    %617 = vmatpush1.msra.mxu0 0.0
    %618 = vmatprep.subr.mxu0 0.0
    %619 = vmatpush1.msra.mxu0 0.0
    %620 = vmatprep.subr.mxu0 0.0
    %621 = vmatpush1.msra.mxu0 0.0
    %622 = vmatprep.subr.mxu0 0.0
    %623 = vmatpush1.msra.mxu0 0.0
    %624 = vmatprep.subr.mxu0 0.0
    %625 = vmatpush1.msra.mxu0 0.0
    %626 = vmatprep.subr.mxu0 0.0
    %627 = vmatpush1.msra.mxu0 0.0
    %628 = vmatprep.subr.mxu0 0.0
    %629 = vmatpush1.msra.mxu0 0.0
    %630 = vmatprep.subr.mxu0 0.0
    %631 = vmatpush1.msra.mxu0 0.0
    %632 = vmatprep.subr.mxu0 0.0
    %633 = vmatpush1.msra.mxu0 0.0
    %634 = vmatprep.subr.mxu0 0.0
    %635 = vmatpush1.msra.mxu0 0.0
    %636 = vmatprep.subr.mxu0 0.0
    %637 = vmatpush1.msra.mxu0 0.0
    %638 = vmatprep.subr.mxu0 0.0
    %639 = vmatpush1.msra.mxu0 0.0
    %640 = vmatprep.subr.mxu0 0.0
    %641 = vmatpush1.msra.mxu0 0.0
    %642 = vmatprep.subr.mxu0 0.0
    %643 = vmatpush1.msra.mxu0 0.0
    %644 = vmatprep.subr.mxu0 0.0
    %645 = vmatpush1.msra.mxu0 0.0
    %646 = vmatprep.subr.mxu0 0.0
    %647 = vmatpush1.msra.mxu0 0.0
    %648 = vmatprep.subr.mxu0 0.0
    %649 = vmatpush1.msra.mxu0 0.0
    %650 = vmatprep.subr.mxu0 0.0
    %651 = vmatpush1.msra.mxu0 0.0
    %652 = vmatprep.subr.mxu0 0.0
    %653 = vmatpush1.msra.mxu0 0.0
    %654 = vmatprep.subr.mxu0 0.0
    %655 = vmatpush1.msra.mxu0 0.0
    %656 = vmatprep.mubr.f32.mxu0 0.0
    %657 = vmatmul.mubr.f32.gmra.mrb[0].mxu0 %v306
    %v658 = vpop.f32.mrb[0].mxu0
    %v659 = vadd.f32 %v294, %v658
    %v660 = vpop.f32.mrb[0].mxu0
    %661 = vdwg.mxu0
    %v662 = vadd.f32 %v375, %v517
    %v663 = vadd.f32 %v377, %v519
    %v664 = vadd.f32 %v446, %v588
    %v665 = vadd.f32 %v448, %v590
    %v666 = vxor.u32 %v375, 2147483648
    %v667 = vxor.u32 %v377, 2147483648
    %v668 = vxor.u32 %v446, 2147483648
    %v669 = vmul.f32 %v666, 1.442695
    %v670 = vpow.pop %v669
    %v671 = vmul.f32 %v667, 1.442695
    %v672 = vpow.pop %v671
    %v673 = vmul.f32 %v668, 1.442695
    %v674 = vpow.pop %v673
    %v675 = vadd.f32 %v670, 1.0
    %v676 = vadd.f32 %v672, 1.0
    %v677 = vadd.f32 %v674, 1.0
    %v678 = vrcp.pop %v675
    %v679 = vmul.f32 1.0, %v678
    %v680 = vrcp.pop %v676
    %v681 = vmul.f32 1.0, %v680
    %v682 = vrcp.pop %v677
    %v683 = vmul.f32 1.0, %v682
    %v684 = vtanh.pop %v448
    %v685 = vmul.f32 %v681, 0.0
    %v686 = vmul.f32 %v679, %v684
    %v687 = vadd.f32 %v685, %v686
    %v688 = vtanh.pop %v687
    %v689 = vmul.f32 %v683, %v688
    %690 = vmatprep.subr.mxu0 %v112
    %691 = vmatpush1.msra.mxu0 %v111
    %692 = vmatprep.subr.mxu0 %v117
    %693 = vmatpush1.msra.mxu0 %v116
    %694 = vmatprep.subr.mxu0 %v122
    %695 = vmatpush1.msra.mxu0 %v121
    %696 = vmatprep.subr.mxu0 %v127
    %697 = vmatpush1.msra.mxu0 %v126
    %698 = vmatprep.subr.mxu0 %v132
    %699 = vmatpush1.msra.mxu0 %v131
    %700 = vmatprep.subr.mxu0 %v137
    %701 = vmatpush1.msra.mxu0 %v136
    %702 = vmatprep.subr.mxu0 %v142
    %703 = vmatpush1.msra.mxu0 %v141
    %704 = vmatprep.subr.mxu0 %v147
    %705 = vmatpush1.msra.mxu0 %v146
    %706 = vmatprep.subr.mxu0 %v152
    %707 = vmatpush1.msra.mxu0 %v151
    %708 = vmatprep.subr.mxu0 %v157
    %709 = vmatpush1.msra.mxu0 %v156
    %710 = vmatprep.subr.mxu0 %v162
    %711 = vmatpush1.msra.mxu0 %v161
    %712 = vmatprep.subr.mxu0 %v167
    %713 = vmatpush1.msra.mxu0 %v166
    %714 = vmatprep.subr.mxu0 %v172
    %715 = vmatpush1.msra.mxu0 %v171
    %716 = vmatprep.subr.mxu0 %v177
    %717 = vmatpush1.msra.mxu0 %v176
    %718 = vmatprep.subr.mxu0 %v182
    %719 = vmatpush1.msra.mxu0 %v181
    %720 = vmatprep.subr.mxu0 %v187
    %721 = vmatpush1.msra.mxu0 %v186
    %722 = vmatprep.subr.mxu0 0.0
    %723 = vmatpush1.msra.mxu0 0.0
    %724 = vmatprep.subr.mxu0 0.0
    %725 = vmatpush1.msra.mxu0 0.0
    %726 = vmatprep.subr.mxu0 0.0
    %727 = vmatpush1.msra.mxu0 0.0
    %728 = vmatprep.subr.mxu0 0.0
    %729 = vmatpush1.msra.mxu0 0.0
    %730 = vmatprep.subr.mxu0 0.0
    %731 = vmatpush1.msra.mxu0 0.0
    %732 = vmatprep.subr.mxu0 0.0
    %733 = vmatpush1.msra.mxu0 0.0
    %734 = vmatprep.subr.mxu0 0.0
    %735 = vmatpush1.msra.mxu0 0.0
    %736 = vmatprep.subr.mxu0 0.0
    %737 = vmatpush1.msra.mxu0 0.0
    %738 = vmatprep.subr.mxu0 0.0
    %739 = vmatpush1.msra.mxu0 0.0
    %740 = vmatprep.subr.mxu0 0.0
    %741 = vmatpush1.msra.mxu0 0.0
    %742 = vmatprep.subr.mxu0 0.0
    %743 = vmatpush1.msra.mxu0 0.0
    %744 = vmatprep.subr.mxu0 0.0
    %745 = vmatpush1.msra.mxu0 0.0
    %746 = vmatprep.subr.mxu0 0.0
    %747 = vmatpush1.msra.mxu0 0.0
    %748 = vmatprep.subr.mxu0 0.0
    %749 = vmatpush1.msra.mxu0 0.0
    %750 = vmatprep.subr.mxu0 0.0
    %751 = vmatpush1.msra.mxu0 0.0
    %752 = vmatprep.subr.mxu0 0.0
    %753 = vmatpush1.msra.mxu0 0.0
    %754 = vmatprep.mubr.f32.mxu0 0.0
    %755 = vmatmul.mubr.f32.gmra.mrb[0].mxu0 %v689
    %v756 = vpop.f32.mrb[0].mxu0
    %v757 = vadd.f32 0.0, %v756
    %v758 = vpop.f32.mrb[0].mxu0
    %v759 = vadd.f32 0.0, %v758
    %760 = vdwg.mxu0
    %761 = vmatprep.subr.mxu0 %v114
    %762 = vmatpush1.msra.mxu0 %v113
    %763 = vmatprep.subr.mxu0 %v119
    %764 = vmatpush1.msra.mxu0 %v118
    %765 = vmatprep.subr.mxu0 %v124
    %766 = vmatpush1.msra.mxu0 %v123
    %767 = vmatprep.subr.mxu0 %v129
    %768 = vmatpush1.msra.mxu0 %v128
    %769 = vmatprep.subr.mxu0 %v134
    %770 = vmatpush1.msra.mxu0 %v133
    %771 = vmatprep.subr.mxu0 %v139
    %772 = vmatpush1.msra.mxu0 %v138
    %773 = vmatprep.subr.mxu0 %v144
    %774 = vmatpush1.msra.mxu0 %v143
    %775 = vmatprep.subr.mxu0 %v149
    %776 = vmatpush1.msra.mxu0 %v148
    %777 = vmatprep.subr.mxu0 %v154
    %778 = vmatpush1.msra.mxu0 %v153
    %779 = vmatprep.subr.mxu0 %v159
    %780 = vmatpush1.msra.mxu0 %v158
    %781 = vmatprep.subr.mxu0 %v164
    %782 = vmatpush1.msra.mxu0 %v163
    %783 = vmatprep.subr.mxu0 %v169
    %784 = vmatpush1.msra.mxu0 %v168
    %785 = vmatprep.subr.mxu0 %v174
    %786 = vmatpush1.msra.mxu0 %v173
    %787 = vmatprep.subr.mxu0 %v179
    %788 = vmatpush1.msra.mxu0 %v178
    %789 = vmatprep.subr.mxu0 %v184
    %790 = vmatpush1.msra.mxu0 %v183
    %791 = vmatprep.subr.mxu0 %v189
    %792 = vmatpush1.msra.mxu0 %v188
    %793 = vmatprep.subr.mxu0 0.0
    %794 = vmatpush1.msra.mxu0 0.0
    %795 = vmatprep.subr.mxu0 0.0
    %796 = vmatpush1.msra.mxu0 0.0
    %797 = vmatprep.subr.mxu0 0.0
    %798 = vmatpush1.msra.mxu0 0.0
    %799 = vmatprep.subr.mxu0 0.0
    %800 = vmatpush1.msra.mxu0 0.0
    %801 = vmatprep.subr.mxu0 0.0
    %802 = vmatpush1.msra.mxu0 0.0
    %803 = vmatprep.subr.mxu0 0.0
    %804 = vmatpush1.msra.mxu0 0.0
    %805 = vmatprep.subr.mxu0 0.0
    %806 = vmatpush1.msra.mxu0 0.0
    %807 = vmatprep.subr.mxu0 0.0
    %808 = vmatpush1.msra.mxu0 0.0
    %809 = vmatprep.subr.mxu0 0.0
    %810 = vmatpush1.msra.mxu0 0.0
    %811 = vmatprep.subr.mxu0 0.0
    %812 = vmatpush1.msra.mxu0 0.0
    %813 = vmatprep.subr.mxu0 0.0
    %814 = vmatpush1.msra.mxu0 0.0
    %815 = vmatprep.subr.mxu0 0.0
    %816 = vmatpush1.msra.mxu0 0.0
    %817 = vmatprep.subr.mxu0 0.0
    %818 = vmatpush1.msra.mxu0 0.0
    %819 = vmatprep.subr.mxu0 0.0
    %820 = vmatpush1.msra.mxu0 0.0
    %821 = vmatprep.subr.mxu0 0.0
    %822 = vmatpush1.msra.mxu0 0.0
    %823 = vmatprep.subr.mxu0 0.0
    %824 = vmatpush1.msra.mxu0 0.0
    %825 = vmatprep.mubr.f32.mxu0 0.0
    %826 = vmatmul.mubr.f32.gmra.mrb[0].mxu0 %v689
    %v827 = vpop.f32.mrb[0].mxu0
    %v828 = vadd.f32 0.0, %v827
    %v829 = vpop.f32.mrb[0].mxu0
    %v830 = vadd.f32 0.0, %v829
    %831 = vdwg.mxu0
    %832 = vmatprep.subr.mxu0 0.0
    %833 = vmatpush1.msra.mxu0 %v115
    %834 = vmatprep.subr.mxu0 0.0
    %835 = vmatpush1.msra.mxu0 %v120
    %836 = vmatprep.subr.mxu0 0.0
    %837 = vmatpush1.msra.mxu0 %v125
    %838 = vmatprep.subr.mxu0 0.0
    %839 = vmatpush1.msra.mxu0 %v130
    %840 = vmatprep.subr.mxu0 0.0
    %841 = vmatpush1.msra.mxu0 %v135
    %842 = vmatprep.subr.mxu0 0.0
    %843 = vmatpush1.msra.mxu0 %v140
    %844 = vmatprep.subr.mxu0 0.0
    %845 = vmatpush1.msra.mxu0 %v145
    %846 = vmatprep.subr.mxu0 0.0
    %847 = vmatpush1.msra.mxu0 %v150
    %848 = vmatprep.subr.mxu0 0.0
    %849 = vmatpush1.msra.mxu0 %v155
    %850 = vmatprep.subr.mxu0 0.0
    %851 = vmatpush1.msra.mxu0 %v160
    %852 = vmatprep.subr.mxu0 0.0
    %853 = vmatpush1.msra.mxu0 %v165
    %854 = vmatprep.subr.mxu0 0.0
    %855 = vmatpush1.msra.mxu0 %v170
    %856 = vmatprep.subr.mxu0 0.0
    %857 = vmatpush1.msra.mxu0 %v175
    %858 = vmatprep.subr.mxu0 0.0
    %859 = vmatpush1.msra.mxu0 %v180
    %860 = vmatprep.subr.mxu0 0.0
    %861 = vmatpush1.msra.mxu0 %v185
    %862 = vmatprep.subr.mxu0 0.0
    %863 = vmatpush1.msra.mxu0 %v190
    %864 = vmatprep.subr.mxu0 0.0
    %865 = vmatpush1.msra.mxu0 0.0
    %866 = vmatprep.subr.mxu0 0.0
    %867 = vmatpush1.msra.mxu0 0.0
    %868 = vmatprep.subr.mxu0 0.0
    %869 = vmatpush1.msra.mxu0 0.0
    %870 = vmatprep.subr.mxu0 0.0
    %871 = vmatpush1.msra.mxu0 0.0
    %872 = vmatprep.subr.mxu0 0.0
    %873 = vmatpush1.msra.mxu0 0.0
    %874 = vmatprep.subr.mxu0 0.0
    %875 = vmatpush1.msra.mxu0 0.0
    %876 = vmatprep.subr.mxu0 0.0
    %877 = vmatpush1.msra.mxu0 0.0
    %878 = vmatprep.subr.mxu0 0.0
    %879 = vmatpush1.msra.mxu0 0.0
    %880 = vmatprep.subr.mxu0 0.0
    %881 = vmatpush1.msra.mxu0 0.0
    %882 = vmatprep.subr.mxu0 0.0
    %883 = vmatpush1.msra.mxu0 0.0
    %884 = vmatprep.subr.mxu0 0.0
    %885 = vmatpush1.msra.mxu0 0.0
    %886 = vmatprep.subr.mxu0 0.0
    %887 = vmatpush1.msra.mxu0 0.0
    %888 = vmatprep.subr.mxu0 0.0
    %889 = vmatpush1.msra.mxu0 0.0
    %890 = vmatprep.subr.mxu0 0.0
    %891 = vmatpush1.msra.mxu0 0.0
    %892 = vmatprep.subr.mxu0 0.0
    %893 = vmatpush1.msra.mxu0 0.0
    %894 = vmatprep.subr.mxu0 0.0
    %895 = vmatpush1.msra.mxu0 0.0
    %896 = vmatprep.mubr.f32.mxu0 0.0
    %897 = vmatmul.mubr.f32.gmra.mrb[0].mxu0 %v689
    %v898 = vpop.f32.mrb[0].mxu0
    %v899 = vadd.f32 0.0, %v898
    %v900 = vpop.f32.mrb[0].mxu0
    %901 = vdwg.mxu0
    %v902 = vadd.f32 %v659, %v899
    %vm903 = vcmask 1041408
    %v904 = vsel %vm903, %v902, -inf
    %905 = vmax.xlane.f32.xlu0 %v904
    %v906 = vpop.xlane.xlu0 %905
    %v907 = vsub.f32 %v902, %v906
    %v908 = vmul.f32 %v907, 1.442695
    %v909 = vpow.pop %v908
    %v910 = vsel %vm903, %v909, 0.0
    %911 = vadd.xlane.f32.xlu0 %v910
    %v912 = vpop.xlane.xlu0 %911
    %v913 = vrcp.pop %v912
    %v914 = vmul.f32 %v909, %v913
    %v915 = vadd.f32 %v662, %v757
    %v916 = vadd.f32 %v663, %v759
    %v917 = vadd.f32 %v664, %v828
    %v918 = vadd.f32 %v665, %v830
    %919 = vmatprep.subr.mxu0 %v192
    %920 = vmatpush1.msra.mxu0 %v191
    %921 = vmatprep.subr.mxu0 %v196
    %922 = vmatpush1.msra.mxu0 %v195
    %923 = vmatprep.subr.mxu0 %v200
    %924 = vmatpush1.msra.mxu0 %v199
    %925 = vmatprep.subr.mxu0 %v204
    %926 = vmatpush1.msra.mxu0 %v203
    %927 = vmatprep.subr.mxu0 %v208
    %928 = vmatpush1.msra.mxu0 %v207
    %929 = vmatprep.subr.mxu0 %v212
    %930 = vmatpush1.msra.mxu0 %v211
    %931 = vmatprep.subr.mxu0 %v216
    %932 = vmatpush1.msra.mxu0 %v215
    %933 = vmatprep.subr.mxu0 %v220
    %934 = vmatpush1.msra.mxu0 %v219
    %935 = vmatprep.subr.mxu0 %v224
    %936 = vmatpush1.msra.mxu0 %v223
    %937 = vmatprep.subr.mxu0 %v228
    %938 = vmatpush1.msra.mxu0 %v227
    %939 = vmatprep.subr.mxu0 %v232
    %940 = vmatpush1.msra.mxu0 %v231
    %941 = vmatprep.subr.mxu0 %v236
    %942 = vmatpush1.msra.mxu0 %v235
    %943 = vmatprep.subr.mxu0 %v240
    %944 = vmatpush1.msra.mxu0 %v239
    %945 = vmatprep.subr.mxu0 %v244
    %946 = vmatpush1.msra.mxu0 %v243
    %947 = vmatprep.subr.mxu0 %v248
    %948 = vmatpush1.msra.mxu0 %v247
    %949 = vmatprep.subr.mxu0 %v252
    %950 = vmatpush1.msra.mxu0 %v251
    %951 = vmatprep.subr.mxu0 0.0
    %952 = vmatpush1.msra.mxu0 0.0
    %953 = vmatprep.subr.mxu0 0.0
    %954 = vmatpush1.msra.mxu0 0.0
    %955 = vmatprep.subr.mxu0 0.0
    %956 = vmatpush1.msra.mxu0 0.0
    %957 = vmatprep.subr.mxu0 0.0
    %958 = vmatpush1.msra.mxu0 0.0
    %959 = vmatprep.subr.mxu0 0.0
    %960 = vmatpush1.msra.mxu0 0.0
    %961 = vmatprep.subr.mxu0 0.0
    %962 = vmatpush1.msra.mxu0 0.0
    %963 = vmatprep.subr.mxu0 0.0
    %964 = vmatpush1.msra.mxu0 0.0
    %965 = vmatprep.subr.mxu0 0.0
    %966 = vmatpush1.msra.mxu0 0.0
    %967 = vmatprep.subr.mxu0 0.0
    %968 = vmatpush1.msra.mxu0 0.0
    %969 = vmatprep.subr.mxu0 0.0
    %970 = vmatpush1.msra.mxu0 0.0
    %971 = vmatprep.subr.mxu0 0.0
    %972 = vmatpush1.msra.mxu0 0.0
    %973 = vmatprep.subr.mxu0 0.0
    %974 = vmatpush1.msra.mxu0 0.0
    %975 = vmatprep.subr.mxu0 0.0
    %976 = vmatpush1.msra.mxu0 0.0
    %977 = vmatprep.subr.mxu0 0.0
    %978 = vmatpush1.msra.mxu0 0.0
    %979 = vmatprep.subr.mxu0 0.0
    %980 = vmatpush1.msra.mxu0 0.0
    %981 = vmatprep.subr.mxu0 0.0
    %982 = vmatpush1.msra.mxu0 0.0
    %983 = vmatprep.mubr.f32.mxu0 0.0
    %984 = vmatmul.mubr.f32.gmra.mrb[0].mxu0 %v914
    %v985 = vpop.f32.mrb[0].mxu0
    %v986 = vadd.f32 0.0, %v985
    %v987 = vpop.f32.mrb[0].mxu0
    %v988 = vadd.f32 0.0, %v987
    %989 = vdwg.mxu0
    %990 = vmatprep.subr.mxu0 %v194
    %991 = vmatpush1.msra.mxu0 %v193
    %992 = vmatprep.subr.mxu0 %v198
    %993 = vmatpush1.msra.mxu0 %v197
    %994 = vmatprep.subr.mxu0 %v202
    %995 = vmatpush1.msra.mxu0 %v201
    %996 = vmatprep.subr.mxu0 %v206
    %997 = vmatpush1.msra.mxu0 %v205
    %998 = vmatprep.subr.mxu0 %v210
    %999 = vmatpush1.msra.mxu0 %v209
    %1000 = vmatprep.subr.mxu0 %v214
    %1001 = vmatpush1.msra.mxu0 %v213
    %1002 = vmatprep.subr.mxu0 %v218
    %1003 = vmatpush1.msra.mxu0 %v217
    %1004 = vmatprep.subr.mxu0 %v222
    %1005 = vmatpush1.msra.mxu0 %v221
    %1006 = vmatprep.subr.mxu0 %v226
    %1007 = vmatpush1.msra.mxu0 %v225
    %1008 = vmatprep.subr.mxu0 %v230
    %1009 = vmatpush1.msra.mxu0 %v229
    %1010 = vmatprep.subr.mxu0 %v234
    %1011 = vmatpush1.msra.mxu0 %v233
    %1012 = vmatprep.subr.mxu0 %v238
    %1013 = vmatpush1.msra.mxu0 %v237
    %1014 = vmatprep.subr.mxu0 %v242
    %1015 = vmatpush1.msra.mxu0 %v241
    %1016 = vmatprep.subr.mxu0 %v246
    %1017 = vmatpush1.msra.mxu0 %v245
    %1018 = vmatprep.subr.mxu0 %v250
    %1019 = vmatpush1.msra.mxu0 %v249
    %1020 = vmatprep.subr.mxu0 %v254
    %1021 = vmatpush1.msra.mxu0 %v253
    %1022 = vmatprep.subr.mxu0 0.0
    %1023 = vmatpush1.msra.mxu0 0.0
    %1024 = vmatprep.subr.mxu0 0.0
    %1025 = vmatpush1.msra.mxu0 0.0
    %1026 = vmatprep.subr.mxu0 0.0
    %1027 = vmatpush1.msra.mxu0 0.0
    %1028 = vmatprep.subr.mxu0 0.0
    %1029 = vmatpush1.msra.mxu0 0.0
    %1030 = vmatprep.subr.mxu0 0.0
    %1031 = vmatpush1.msra.mxu0 0.0
    %1032 = vmatprep.subr.mxu0 0.0
    %1033 = vmatpush1.msra.mxu0 0.0
    %1034 = vmatprep.subr.mxu0 0.0
    %1035 = vmatpush1.msra.mxu0 0.0
    %1036 = vmatprep.subr.mxu0 0.0
    %1037 = vmatpush1.msra.mxu0 0.0
    %1038 = vmatprep.subr.mxu0 0.0
    %1039 = vmatpush1.msra.mxu0 0.0
    %1040 = vmatprep.subr.mxu0 0.0
    %1041 = vmatpush1.msra.mxu0 0.0
    %1042 = vmatprep.subr.mxu0 0.0
    %1043 = vmatpush1.msra.mxu0 0.0
    %1044 = vmatprep.subr.mxu0 0.0
    %1045 = vmatpush1.msra.mxu0 0.0
    %1046 = vmatprep.subr.mxu0 0.0
    %1047 = vmatpush1.msra.mxu0 0.0
    %1048 = vmatprep.subr.mxu0 0.0
    %1049 = vmatpush1.msra.mxu0 0.0
    %1050 = vmatprep.subr.mxu0 0.0
    %1051 = vmatpush1.msra.mxu0 0.0
    %1052 = vmatprep.subr.mxu0 0.0
    %1053 = vmatpush1.msra.mxu0 0.0
    %1054 = vmatprep.mubr.f32.mxu0 0.0
    %1055 = vmatmul.mubr.f32.gmra.mrb[0].mxu0 %v914
    %v1056 = vpop.f32.mrb[0].mxu0
    %v1057 = vadd.f32 0.0, %v1056
    %v1058 = vpop.f32.mrb[0].mxu0
    %v1059 = vadd.f32 0.0, %v1058
    %1060 = vdwg.mxu0
    %v1061 = vadd.f32 %v915, %v986
    %v1062 = vadd.f32 %v916, %v988
    %v1063 = vadd.f32 %v917, %v1057
    %v1064 = vadd.f32 %v918, %v1059
    %v1065 = vxor.u32 %v1061, 2147483648
    %v1066 = vxor.u32 %v1062, 2147483648
    %v1067 = vxor.u32 %v1063, 2147483648
    %v1068 = vmul.f32 %v1065, 1.442695
    %v1069 = vpow.pop %v1068
    %v1070 = vmul.f32 %v1066, 1.442695
    %v1071 = vpow.pop %v1070
    %v1072 = vmul.f32 %v1067, 1.442695
    %v1073 = vpow.pop %v1072
    %v1074 = vadd.f32 %v1069, 1.0
    %v1075 = vadd.f32 %v1071, 1.0
    %v1076 = vadd.f32 %v1073, 1.0
    %v1077 = vrcp.pop %v1074
    %v1078 = vmul.f32 1.0, %v1077
    %v1079 = vrcp.pop %v1075
    %v1080 = vmul.f32 1.0, %v1079
    %v1081 = vrcp.pop %v1076
    %v1082 = vmul.f32 1.0, %v1081
    %v1083 = vtanh.pop %v1064
    %v1084 = vmul.f32 %v1080, %v687
    %v1085 = vmul.f32 %v1078, %v1083
    %v1086 = vadd.f32 %v1084, %v1085
    %v1087 = vtanh.pop %v1086
    %v1088 = vmul.f32 %v1082, %v1087
    %1089 = vmatprep.subr.mxu0 %v112
    %1090 = vmatpush1.msra.mxu0 %v111
    %1091 = vmatprep.subr.mxu0 %v117
    %1092 = vmatpush1.msra.mxu0 %v116
    %1093 = vmatprep.subr.mxu0 %v122
    %1094 = vmatpush1.msra.mxu0 %v121
    %1095 = vmatprep.subr.mxu0 %v127
    %1096 = vmatpush1.msra.mxu0 %v126
    %1097 = vmatprep.subr.mxu0 %v132
    %1098 = vmatpush1.msra.mxu0 %v131
    %1099 = vmatprep.subr.mxu0 %v137
    %1100 = vmatpush1.msra.mxu0 %v136
    %1101 = vmatprep.subr.mxu0 %v142
    %1102 = vmatpush1.msra.mxu0 %v141
    %1103 = vmatprep.subr.mxu0 %v147
    %1104 = vmatpush1.msra.mxu0 %v146
    %1105 = vmatprep.subr.mxu0 %v152
    %1106 = vmatpush1.msra.mxu0 %v151
    %1107 = vmatprep.subr.mxu0 %v157
    %1108 = vmatpush1.msra.mxu0 %v156
    %1109 = vmatprep.subr.mxu0 %v162
    %1110 = vmatpush1.msra.mxu0 %v161
    %1111 = vmatprep.subr.mxu0 %v167
    %1112 = vmatpush1.msra.mxu0 %v166
    %1113 = vmatprep.subr.mxu0 %v172
    %1114 = vmatpush1.msra.mxu0 %v171
    %1115 = vmatprep.subr.mxu0 %v177
    %1116 = vmatpush1.msra.mxu0 %v176
    %1117 = vmatprep.subr.mxu0 %v182
    %1118 = vmatpush1.msra.mxu0 %v181
    %1119 = vmatprep.subr.mxu0 %v187
    %1120 = vmatpush1.msra.mxu0 %v186
    %1121 = vmatprep.subr.mxu0 0.0
    %1122 = vmatpush1.msra.mxu0 0.0
    %1123 = vmatprep.subr.mxu0 0.0
    %1124 = vmatpush1.msra.mxu0 0.0
    %1125 = vmatprep.subr.mxu0 0.0
    %1126 = vmatpush1.msra.mxu0 0.0
    %1127 = vmatprep.subr.mxu0 0.0
    %1128 = vmatpush1.msra.mxu0 0.0
    %1129 = vmatprep.subr.mxu0 0.0
    %1130 = vmatpush1.msra.mxu0 0.0
    %1131 = vmatprep.subr.mxu0 0.0
    %1132 = vmatpush1.msra.mxu0 0.0
    %1133 = vmatprep.subr.mxu0 0.0
    %1134 = vmatpush1.msra.mxu0 0.0
    %1135 = vmatprep.subr.mxu0 0.0
    %1136 = vmatpush1.msra.mxu0 0.0
    %1137 = vmatprep.subr.mxu0 0.0
    %1138 = vmatpush1.msra.mxu0 0.0
    %1139 = vmatprep.subr.mxu0 0.0
    %1140 = vmatpush1.msra.mxu0 0.0
    %1141 = vmatprep.subr.mxu0 0.0
    %1142 = vmatpush1.msra.mxu0 0.0
    %1143 = vmatprep.subr.mxu0 0.0
    %1144 = vmatpush1.msra.mxu0 0.0
    %1145 = vmatprep.subr.mxu0 0.0
    %1146 = vmatpush1.msra.mxu0 0.0
    %1147 = vmatprep.subr.mxu0 0.0
    %1148 = vmatpush1.msra.mxu0 0.0
    %1149 = vmatprep.subr.mxu0 0.0
    %1150 = vmatpush1.msra.mxu0 0.0
    %1151 = vmatprep.subr.mxu0 0.0
    %1152 = vmatpush1.msra.mxu0 0.0
    %1153 = vmatprep.mubr.f32.mxu0 0.0
    %1154 = vmatmul.mubr.f32.gmra.mrb[0].mxu0 %v1088
    %v1155 = vpop.f32.mrb[0].mxu0
    %v1156 = vadd.f32 0.0, %v1155
    %v1157 = vpop.f32.mrb[0].mxu0
    %v1158 = vadd.f32 0.0, %v1157
    %1159 = vdwg.mxu0
    %1160 = vmatprep.subr.mxu0 %v114
    %1161 = vmatpush1.msra.mxu0 %v113
    %1162 = vmatprep.subr.mxu0 %v119
    %1163 = vmatpush1.msra.mxu0 %v118
    %1164 = vmatprep.subr.mxu0 %v124
    %1165 = vmatpush1.msra.mxu0 %v123
    %1166 = vmatprep.subr.mxu0 %v129
    %1167 = vmatpush1.msra.mxu0 %v128
    %1168 = vmatprep.subr.mxu0 %v134
    %1169 = vmatpush1.msra.mxu0 %v133
    %1170 = vmatprep.subr.mxu0 %v139
    %1171 = vmatpush1.msra.mxu0 %v138
    %1172 = vmatprep.subr.mxu0 %v144
    %1173 = vmatpush1.msra.mxu0 %v143
    %1174 = vmatprep.subr.mxu0 %v149
    %1175 = vmatpush1.msra.mxu0 %v148
    %1176 = vmatprep.subr.mxu0 %v154
    %1177 = vmatpush1.msra.mxu0 %v153
    %1178 = vmatprep.subr.mxu0 %v159
    %1179 = vmatpush1.msra.mxu0 %v158
    %1180 = vmatprep.subr.mxu0 %v164
    %1181 = vmatpush1.msra.mxu0 %v163
    %1182 = vmatprep.subr.mxu0 %v169
    %1183 = vmatpush1.msra.mxu0 %v168
    %1184 = vmatprep.subr.mxu0 %v174
    %1185 = vmatpush1.msra.mxu0 %v173
    %1186 = vmatprep.subr.mxu0 %v179
    %1187 = vmatpush1.msra.mxu0 %v178
    %1188 = vmatprep.subr.mxu0 %v184
    %1189 = vmatpush1.msra.mxu0 %v183
    %1190 = vmatprep.subr.mxu0 %v189
    %1191 = vmatpush1.msra.mxu0 %v188
    %1192 = vmatprep.subr.mxu0 0.0
    %1193 = vmatpush1.msra.mxu0 0.0
    %1194 = vmatprep.subr.mxu0 0.0
    %1195 = vmatpush1.msra.mxu0 0.0
    %1196 = vmatprep.subr.mxu0 0.0
    %1197 = vmatpush1.msra.mxu0 0.0
    %1198 = vmatprep.subr.mxu0 0.0
    %1199 = vmatpush1.msra.mxu0 0.0
    %1200 = vmatprep.subr.mxu0 0.0
    %1201 = vmatpush1.msra.mxu0 0.0
    %1202 = vmatprep.subr.mxu0 0.0
    %1203 = vmatpush1.msra.mxu0 0.0
    %1204 = vmatprep.subr.mxu0 0.0
    %1205 = vmatpush1.msra.mxu0 0.0
    %1206 = vmatprep.subr.mxu0 0.0
    %1207 = vmatpush1.msra.mxu0 0.0
    %1208 = vmatprep.subr.mxu0 0.0
    %1209 = vmatpush1.msra.mxu0 0.0
    %1210 = vmatprep.subr.mxu0 0.0
    %1211 = vmatpush1.msra.mxu0 0.0
    %1212 = vmatprep.subr.mxu0 0.0
    %1213 = vmatpush1.msra.mxu0 0.0
    %1214 = vmatprep.subr.mxu0 0.0
    %1215 = vmatpush1.msra.mxu0 0.0
    %1216 = vmatprep.subr.mxu0 0.0
    %1217 = vmatpush1.msra.mxu0 0.0
    %1218 = vmatprep.subr.mxu0 0.0
    %1219 = vmatpush1.msra.mxu0 0.0
    %1220 = vmatprep.subr.mxu0 0.0
    %1221 = vmatpush1.msra.mxu0 0.0
    %1222 = vmatprep.subr.mxu0 0.0
    %1223 = vmatpush1.msra.mxu0 0.0
    %1224 = vmatprep.mubr.f32.mxu0 0.0
    %1225 = vmatmul.mubr.f32.gmra.mrb[0].mxu0 %v1088
    %v1226 = vpop.f32.mrb[0].mxu0
    %v1227 = vadd.f32 0.0, %v1226
    %v1228 = vpop.f32.mrb[0].mxu0
    %v1229 = vadd.f32 0.0, %v1228
    %1230 = vdwg.mxu0
    %1231 = vmatprep.subr.mxu0 0.0
    %1232 = vmatpush1.msra.mxu0 %v115
    %1233 = vmatprep.subr.mxu0 0.0
    %1234 = vmatpush1.msra.mxu0 %v120
    %1235 = vmatprep.subr.mxu0 0.0
    %1236 = vmatpush1.msra.mxu0 %v125
    %1237 = vmatprep.subr.mxu0 0.0
    %1238 = vmatpush1.msra.mxu0 %v130
    %1239 = vmatprep.subr.mxu0 0.0
    %1240 = vmatpush1.msra.mxu0 %v135
    %1241 = vmatprep.subr.mxu0 0.0
    %1242 = vmatpush1.msra.mxu0 %v140
    %1243 = vmatprep.subr.mxu0 0.0
    %1244 = vmatpush1.msra.mxu0 %v145
    %1245 = vmatprep.subr.mxu0 0.0
    %1246 = vmatpush1.msra.mxu0 %v150
    %1247 = vmatprep.subr.mxu0 0.0
    %1248 = vmatpush1.msra.mxu0 %v155
    %1249 = vmatprep.subr.mxu0 0.0
    %1250 = vmatpush1.msra.mxu0 %v160
    %1251 = vmatprep.subr.mxu0 0.0
    %1252 = vmatpush1.msra.mxu0 %v165
    %1253 = vmatprep.subr.mxu0 0.0
    %1254 = vmatpush1.msra.mxu0 %v170
    %1255 = vmatprep.subr.mxu0 0.0
    %1256 = vmatpush1.msra.mxu0 %v175
    %1257 = vmatprep.subr.mxu0 0.0
    %1258 = vmatpush1.msra.mxu0 %v180
    %1259 = vmatprep.subr.mxu0 0.0
    %1260 = vmatpush1.msra.mxu0 %v185
    %1261 = vmatprep.subr.mxu0 0.0
    %1262 = vmatpush1.msra.mxu0 %v190
    %1263 = vmatprep.subr.mxu0 0.0
    %1264 = vmatpush1.msra.mxu0 0.0
    %1265 = vmatprep.subr.mxu0 0.0
    %1266 = vmatpush1.msra.mxu0 0.0
    %1267 = vmatprep.subr.mxu0 0.0
    %1268 = vmatpush1.msra.mxu0 0.0
    %1269 = vmatprep.subr.mxu0 0.0
    %1270 = vmatpush1.msra.mxu0 0.0
    %1271 = vmatprep.subr.mxu0 0.0
    %1272 = vmatpush1.msra.mxu0 0.0
    %1273 = vmatprep.subr.mxu0 0.0
    %1274 = vmatpush1.msra.mxu0 0.0
    %1275 = vmatprep.subr.mxu0 0.0
    %1276 = vmatpush1.msra.mxu0 0.0
    %1277 = vmatprep.subr.mxu0 0.0
    %1278 = vmatpush1.msra.mxu0 0.0
    %1279 = vmatprep.subr.mxu0 0.0
    %1280 = vmatpush1.msra.mxu0 0.0
    %1281 = vmatprep.subr.mxu0 0.0
    %1282 = vmatpush1.msra.mxu0 0.0
    %1283 = vmatprep.subr.mxu0 0.0
    %1284 = vmatpush1.msra.mxu0 0.0
    %1285 = vmatprep.subr.mxu0 0.0
    %1286 = vmatpush1.msra.mxu0 0.0
    %1287 = vmatprep.subr.mxu0 0.0
    %1288 = vmatpush1.msra.mxu0 0.0
    %1289 = vmatprep.subr.mxu0 0.0
    %1290 = vmatpush1.msra.mxu0 0.0
    %1291 = vmatprep.subr.mxu0 0.0
    %1292 = vmatpush1.msra.mxu0 0.0
    %1293 = vmatprep.subr.mxu0 0.0
    %1294 = vmatpush1.msra.mxu0 0.0
    %1295 = vmatprep.mubr.f32.mxu0 0.0
    %1296 = vmatmul.mubr.f32.gmra.mrb[0].mxu0 %v1088
    %v1297 = vpop.f32.mrb[0].mxu0
    %v1298 = vadd.f32 0.0, %v1297
    %v1299 = vpop.f32.mrb[0].mxu0
    %1300 = vdwg.mxu0
    %v1301 = vadd.f32 %v659, %v1298
    %v1302 = vsel %vm903, %v1301, -inf
    %1303 = vmax.xlane.f32.xlu0 %v1302
    %v1304 = vpop.xlane.xlu0 %1303
    %v1305 = vsub.f32 %v1301, %v1304
    %v1306 = vmul.f32 %v1305, 1.442695
    %v1307 = vpow.pop %v1306
    %v1308 = vsel %vm903, %v1307, 0.0
    %1309 = vadd.xlane.f32.xlu0 %v1308
    %v1310 = vpop.xlane.xlu0 %1309
    %v1311 = vrcp.pop %v1310
    %v1312 = vmul.f32 %v1307, %v1311
    %v1313 = vadd.f32 %v662, %v1156
    %v1314 = vadd.f32 %v663, %v1158
    %v1315 = vadd.f32 %v664, %v1227
    %v1316 = vadd.f32 %v665, %v1229
    %1317 = vmatprep.subr.mxu0 %v192
    %1318 = vmatpush1.msra.mxu0 %v191
    %1319 = vmatprep.subr.mxu0 %v196
    %1320 = vmatpush1.msra.mxu0 %v195
    %1321 = vmatprep.subr.mxu0 %v200
    %1322 = vmatpush1.msra.mxu0 %v199
    %1323 = vmatprep.subr.mxu0 %v204
    %1324 = vmatpush1.msra.mxu0 %v203
    %1325 = vmatprep.subr.mxu0 %v208
    %1326 = vmatpush1.msra.mxu0 %v207
    %1327 = vmatprep.subr.mxu0 %v212
    %1328 = vmatpush1.msra.mxu0 %v211
    %1329 = vmatprep.subr.mxu0 %v216
    %1330 = vmatpush1.msra.mxu0 %v215
    %1331 = vmatprep.subr.mxu0 %v220
    %1332 = vmatpush1.msra.mxu0 %v219
    %1333 = vmatprep.subr.mxu0 %v224
    %1334 = vmatpush1.msra.mxu0 %v223
    %1335 = vmatprep.subr.mxu0 %v228
    %1336 = vmatpush1.msra.mxu0 %v227
    %1337 = vmatprep.subr.mxu0 %v232
    %1338 = vmatpush1.msra.mxu0 %v231
    %1339 = vmatprep.subr.mxu0 %v236
    %1340 = vmatpush1.msra.mxu0 %v235
    %1341 = vmatprep.subr.mxu0 %v240
    %1342 = vmatpush1.msra.mxu0 %v239
    %1343 = vmatprep.subr.mxu0 %v244
    %1344 = vmatpush1.msra.mxu0 %v243
    %1345 = vmatprep.subr.mxu0 %v248
    %1346 = vmatpush1.msra.mxu0 %v247
    %1347 = vmatprep.subr.mxu0 %v252
    %1348 = vmatpush1.msra.mxu0 %v251
    %1349 = vmatprep.subr.mxu0 0.0
    %1350 = vmatpush1.msra.mxu0 0.0
    %1351 = vmatprep.subr.mxu0 0.0
    %1352 = vmatpush1.msra.mxu0 0.0
    %1353 = vmatprep.subr.mxu0 0.0
    %1354 = vmatpush1.msra.mxu0 0.0
    %1355 = vmatprep.subr.mxu0 0.0
    %1356 = vmatpush1.msra.mxu0 0.0
    %1357 = vmatprep.subr.mxu0 0.0
    %1358 = vmatpush1.msra.mxu0 0.0
    %1359 = vmatprep.subr.mxu0 0.0
    %1360 = vmatpush1.msra.mxu0 0.0
    %1361 = vmatprep.subr.mxu0 0.0
    %1362 = vmatpush1.msra.mxu0 0.0
    %1363 = vmatprep.subr.mxu0 0.0
    %1364 = vmatpush1.msra.mxu0 0.0
    %1365 = vmatprep.subr.mxu0 0.0
    %1366 = vmatpush1.msra.mxu0 0.0
    %1367 = vmatprep.subr.mxu0 0.0
    %1368 = vmatpush1.msra.mxu0 0.0
    %1369 = vmatprep.subr.mxu0 0.0
    %1370 = vmatpush1.msra.mxu0 0.0
    %1371 = vmatprep.subr.mxu0 0.0
    %1372 = vmatpush1.msra.mxu0 0.0
    %1373 = vmatprep.subr.mxu0 0.0
    %1374 = vmatpush1.msra.mxu0 0.0
    %1375 = vmatprep.subr.mxu0 0.0
    %1376 = vmatpush1.msra.mxu0 0.0
    %1377 = vmatprep.subr.mxu0 0.0
    %1378 = vmatpush1.msra.mxu0 0.0
    %1379 = vmatprep.subr.mxu0 0.0
    %1380 = vmatpush1.msra.mxu0 0.0
    %1381 = vmatprep.mubr.f32.mxu0 0.0
    %1382 = vmatmul.mubr.f32.gmra.mrb[0].mxu0 %v1312
    %v1383 = vpop.f32.mrb[0].mxu0
    %v1384 = vadd.f32 0.0, %v1383
    %v1385 = vpop.f32.mrb[0].mxu0
    %v1386 = vadd.f32 0.0, %v1385
    %1387 = vdwg.mxu0
    %1388 = vmatprep.subr.mxu0 %v194
    %1389 = vmatpush1.msra.mxu0 %v193
    %1390 = vmatprep.subr.mxu0 %v198
    %1391 = vmatpush1.msra.mxu0 %v197
    %1392 = vmatprep.subr.mxu0 %v202
    %1393 = vmatpush1.msra.mxu0 %v201
    %1394 = vmatprep.subr.mxu0 %v206
    %1395 = vmatpush1.msra.mxu0 %v205
    %1396 = vmatprep.subr.mxu0 %v210
    %1397 = vmatpush1.msra.mxu0 %v209
    %1398 = vmatprep.subr.mxu0 %v214
    %1399 = vmatpush1.msra.mxu0 %v213
    %1400 = vmatprep.subr.mxu0 %v218
    %1401 = vmatpush1.msra.mxu0 %v217
    %1402 = vmatprep.subr.mxu0 %v222
    %1403 = vmatpush1.msra.mxu0 %v221
    %1404 = vmatprep.subr.mxu0 %v226
    %1405 = vmatpush1.msra.mxu0 %v225
    %1406 = vmatprep.subr.mxu0 %v230
    %1407 = vmatpush1.msra.mxu0 %v229
    %1408 = vmatprep.subr.mxu0 %v234
    %1409 = vmatpush1.msra.mxu0 %v233
    %1410 = vmatprep.subr.mxu0 %v238
    %1411 = vmatpush1.msra.mxu0 %v237
    %1412 = vmatprep.subr.mxu0 %v242
    %1413 = vmatpush1.msra.mxu0 %v241
    %1414 = vmatprep.subr.mxu0 %v246
    %1415 = vmatpush1.msra.mxu0 %v245
    %1416 = vmatprep.subr.mxu0 %v250
    %1417 = vmatpush1.msra.mxu0 %v249
    %1418 = vmatprep.subr.mxu0 %v254
    %1419 = vmatpush1.msra.mxu0 %v253
    %1420 = vmatprep.subr.mxu0 0.0
    %1421 = vmatpush1.msra.mxu0 0.0
    %1422 = vmatprep.subr.mxu0 0.0
    %1423 = vmatpush1.msra.mxu0 0.0
    %1424 = vmatprep.subr.mxu0 0.0
    %1425 = vmatpush1.msra.mxu0 0.0
    %1426 = vmatprep.subr.mxu0 0.0
    %1427 = vmatpush1.msra.mxu0 0.0
    %1428 = vmatprep.subr.mxu0 0.0
    %1429 = vmatpush1.msra.mxu0 0.0
    %1430 = vmatprep.subr.mxu0 0.0
    %1431 = vmatpush1.msra.mxu0 0.0
    %1432 = vmatprep.subr.mxu0 0.0
    %1433 = vmatpush1.msra.mxu0 0.0
    %1434 = vmatprep.subr.mxu0 0.0
    %1435 = vmatpush1.msra.mxu0 0.0
    %1436 = vmatprep.subr.mxu0 0.0
    %1437 = vmatpush1.msra.mxu0 0.0
    %1438 = vmatprep.subr.mxu0 0.0
    %1439 = vmatpush1.msra.mxu0 0.0
    %1440 = vmatprep.subr.mxu0 0.0
    %1441 = vmatpush1.msra.mxu0 0.0
    %1442 = vmatprep.subr.mxu0 0.0
    %1443 = vmatpush1.msra.mxu0 0.0
    %1444 = vmatprep.subr.mxu0 0.0
    %1445 = vmatpush1.msra.mxu0 0.0
    %1446 = vmatprep.subr.mxu0 0.0
    %1447 = vmatpush1.msra.mxu0 0.0
    %1448 = vmatprep.subr.mxu0 0.0
    %1449 = vmatpush1.msra.mxu0 0.0
    %1450 = vmatprep.subr.mxu0 0.0
    %1451 = vmatpush1.msra.mxu0 0.0
    %1452 = vmatprep.mubr.f32.mxu0 0.0
    %1453 = vmatmul.mubr.f32.gmra.mrb[0].mxu0 %v1312
    %v1454 = vpop.f32.mrb[0].mxu0
    %v1455 = vadd.f32 0.0, %v1454
    %v1456 = vpop.f32.mrb[0].mxu0
    %v1457 = vadd.f32 0.0, %v1456
    %1458 = vdwg.mxu0
    %v1459 = vadd.f32 %v1313, %v1384
    %v1460 = vadd.f32 %v1314, %v1386
    %v1461 = vadd.f32 %v1315, %v1455
    %v1462 = vadd.f32 %v1316, %v1457
    %v1463 = vxor.u32 %v1459, 2147483648
    %v1464 = vxor.u32 %v1460, 2147483648
    %v1465 = vxor.u32 %v1461, 2147483648
    %v1466 = vmul.f32 %v1463, 1.442695
    %v1467 = vpow.pop %v1466
    %v1468 = vmul.f32 %v1464, 1.442695
    %v1469 = vpow.pop %v1468
    %v1470 = vmul.f32 %v1465, 1.442695
    %v1471 = vpow.pop %v1470
    %v1472 = vadd.f32 %v1467, 1.0
    %v1473 = vadd.f32 %v1469, 1.0
    %v1474 = vadd.f32 %v1471, 1.0
    %v1475 = vrcp.pop %v1472
    %v1476 = vmul.f32 1.0, %v1475
    %v1477 = vrcp.pop %v1473
    %v1478 = vmul.f32 1.0, %v1477
    %v1479 = vrcp.pop %v1474
    %v1480 = vmul.f32 1.0, %v1479
    %v1481 = vtanh.pop %v1462
    %v1482 = vmul.f32 %v1478, %v1086
    %v1483 = vmul.f32 %v1476, %v1481
    %v1484 = vadd.f32 %v1482, %v1483
    %v1485 = vtanh.pop %v1484
    %v1486 = vmul.f32 %v1480, %v1485
    %1487 = vmatprep.subr.mxu0 %v112
    %1488 = vmatpush1.msra.mxu0 %v111
    %1489 = vmatprep.subr.mxu0 %v117
    %1490 = vmatpush1.msra.mxu0 %v116
    %1491 = vmatprep.subr.mxu0 %v122
    %1492 = vmatpush1.msra.mxu0 %v121
    %1493 = vmatprep.subr.mxu0 %v127
    %1494 = vmatpush1.msra.mxu0 %v126
    %1495 = vmatprep.subr.mxu0 %v132
    %1496 = vmatpush1.msra.mxu0 %v131
    %1497 = vmatprep.subr.mxu0 %v137
    %1498 = vmatpush1.msra.mxu0 %v136
    %1499 = vmatprep.subr.mxu0 %v142
    %1500 = vmatpush1.msra.mxu0 %v141
    %1501 = vmatprep.subr.mxu0 %v147
    %1502 = vmatpush1.msra.mxu0 %v146
    %1503 = vmatprep.subr.mxu0 %v152
    %1504 = vmatpush1.msra.mxu0 %v151
    %1505 = vmatprep.subr.mxu0 %v157
    %1506 = vmatpush1.msra.mxu0 %v156
    %1507 = vmatprep.subr.mxu0 %v162
    %1508 = vmatpush1.msra.mxu0 %v161
    %1509 = vmatprep.subr.mxu0 %v167
    %1510 = vmatpush1.msra.mxu0 %v166
    %1511 = vmatprep.subr.mxu0 %v172
    %1512 = vmatpush1.msra.mxu0 %v171
    %1513 = vmatprep.subr.mxu0 %v177
    %1514 = vmatpush1.msra.mxu0 %v176
    %1515 = vmatprep.subr.mxu0 %v182
    %1516 = vmatpush1.msra.mxu0 %v181
    %1517 = vmatprep.subr.mxu0 %v187
    %1518 = vmatpush1.msra.mxu0 %v186
    %1519 = vmatprep.subr.mxu0 0.0
    %1520 = vmatpush1.msra.mxu0 0.0
    %1521 = vmatprep.subr.mxu0 0.0
    %1522 = vmatpush1.msra.mxu0 0.0
    %1523 = vmatprep.subr.mxu0 0.0
    %1524 = vmatpush1.msra.mxu0 0.0
    %1525 = vmatprep.subr.mxu0 0.0
    %1526 = vmatpush1.msra.mxu0 0.0
    %1527 = vmatprep.subr.mxu0 0.0
    %1528 = vmatpush1.msra.mxu0 0.0
    %1529 = vmatprep.subr.mxu0 0.0
    %1530 = vmatpush1.msra.mxu0 0.0
    %1531 = vmatprep.subr.mxu0 0.0
    %1532 = vmatpush1.msra.mxu0 0.0
    %1533 = vmatprep.subr.mxu0 0.0
    %1534 = vmatpush1.msra.mxu0 0.0
    %1535 = vmatprep.subr.mxu0 0.0
    %1536 = vmatpush1.msra.mxu0 0.0
    %1537 = vmatprep.subr.mxu0 0.0
    %1538 = vmatpush1.msra.mxu0 0.0
    %1539 = vmatprep.subr.mxu0 0.0
    %1540 = vmatpush1.msra.mxu0 0.0
    %1541 = vmatprep.subr.mxu0 0.0
    %1542 = vmatpush1.msra.mxu0 0.0
    %1543 = vmatprep.subr.mxu0 0.0
    %1544 = vmatpush1.msra.mxu0 0.0
    %1545 = vmatprep.subr.mxu0 0.0
    %1546 = vmatpush1.msra.mxu0 0.0
    %1547 = vmatprep.subr.mxu0 0.0
    %1548 = vmatpush1.msra.mxu0 0.0
    %1549 = vmatprep.subr.mxu0 0.0
    %1550 = vmatpush1.msra.mxu0 0.0
    %1551 = vmatprep.mubr.f32.mxu0 0.0
    %1552 = vmatmul.mubr.f32.gmra.mrb[0].mxu0 %v1486
    %v1553 = vpop.f32.mrb[0].mxu0
    %v1554 = vadd.f32 0.0, %v1553
    %v1555 = vpop.f32.mrb[0].mxu0
    %v1556 = vadd.f32 0.0, %v1555
    %1557 = vdwg.mxu0
    %1558 = vmatprep.subr.mxu0 %v114
    %1559 = vmatpush1.msra.mxu0 %v113
    %1560 = vmatprep.subr.mxu0 %v119
    %1561 = vmatpush1.msra.mxu0 %v118
    %1562 = vmatprep.subr.mxu0 %v124
    %1563 = vmatpush1.msra.mxu0 %v123
    %1564 = vmatprep.subr.mxu0 %v129
    %1565 = vmatpush1.msra.mxu0 %v128
    %1566 = vmatprep.subr.mxu0 %v134
    %1567 = vmatpush1.msra.mxu0 %v133
    %1568 = vmatprep.subr.mxu0 %v139
    %1569 = vmatpush1.msra.mxu0 %v138
    %1570 = vmatprep.subr.mxu0 %v144
    %1571 = vmatpush1.msra.mxu0 %v143
    %1572 = vmatprep.subr.mxu0 %v149
    %1573 = vmatpush1.msra.mxu0 %v148
    %1574 = vmatprep.subr.mxu0 %v154
    %1575 = vmatpush1.msra.mxu0 %v153
    %1576 = vmatprep.subr.mxu0 %v159
    %1577 = vmatpush1.msra.mxu0 %v158
    %1578 = vmatprep.subr.mxu0 %v164
    %1579 = vmatpush1.msra.mxu0 %v163
    %1580 = vmatprep.subr.mxu0 %v169
    %1581 = vmatpush1.msra.mxu0 %v168
    %1582 = vmatprep.subr.mxu0 %v174
    %1583 = vmatpush1.msra.mxu0 %v173
    %1584 = vmatprep.subr.mxu0 %v179
    %1585 = vmatpush1.msra.mxu0 %v178
    %1586 = vmatprep.subr.mxu0 %v184
    %1587 = vmatpush1.msra.mxu0 %v183
    %1588 = vmatprep.subr.mxu0 %v189
    %1589 = vmatpush1.msra.mxu0 %v188
    %1590 = vmatprep.subr.mxu0 0.0
    %1591 = vmatpush1.msra.mxu0 0.0
    %1592 = vmatprep.subr.mxu0 0.0
    %1593 = vmatpush1.msra.mxu0 0.0
    %1594 = vmatprep.subr.mxu0 0.0
    %1595 = vmatpush1.msra.mxu0 0.0
    %1596 = vmatprep.subr.mxu0 0.0
    %1597 = vmatpush1.msra.mxu0 0.0
    %1598 = vmatprep.subr.mxu0 0.0
    %1599 = vmatpush1.msra.mxu0 0.0
    %1600 = vmatprep.subr.mxu0 0.0
    %1601 = vmatpush1.msra.mxu0 0.0
    %1602 = vmatprep.subr.mxu0 0.0
    %1603 = vmatpush1.msra.mxu0 0.0
    %1604 = vmatprep.subr.mxu0 0.0
    %1605 = vmatpush1.msra.mxu0 0.0
    %1606 = vmatprep.subr.mxu0 0.0
    %1607 = vmatpush1.msra.mxu0 0.0
    %1608 = vmatprep.subr.mxu0 0.0
    %1609 = vmatpush1.msra.mxu0 0.0
    %1610 = vmatprep.subr.mxu0 0.0
    %1611 = vmatpush1.msra.mxu0 0.0
    %1612 = vmatprep.subr.mxu0 0.0
    %1613 = vmatpush1.msra.mxu0 0.0
    %1614 = vmatprep.subr.mxu0 0.0
    %1615 = vmatpush1.msra.mxu0 0.0
    %1616 = vmatprep.subr.mxu0 0.0
    %1617 = vmatpush1.msra.mxu0 0.0
    %1618 = vmatprep.subr.mxu0 0.0
    %1619 = vmatpush1.msra.mxu0 0.0
    %1620 = vmatprep.subr.mxu0 0.0
    %1621 = vmatpush1.msra.mxu0 0.0
    %1622 = vmatprep.mubr.f32.mxu0 0.0
    %1623 = vmatmul.mubr.f32.gmra.mrb[0].mxu0 %v1486
    %v1624 = vpop.f32.mrb[0].mxu0
    %v1625 = vadd.f32 0.0, %v1624
    %v1626 = vpop.f32.mrb[0].mxu0
    %v1627 = vadd.f32 0.0, %v1626
    %1628 = vdwg.mxu0
    %1629 = vmatprep.subr.mxu0 0.0
    %1630 = vmatpush1.msra.mxu0 %v115
    %1631 = vmatprep.subr.mxu0 0.0
    %1632 = vmatpush1.msra.mxu0 %v120
    %1633 = vmatprep.subr.mxu0 0.0
    %1634 = vmatpush1.msra.mxu0 %v125
    %1635 = vmatprep.subr.mxu0 0.0
    %1636 = vmatpush1.msra.mxu0 %v130
    %1637 = vmatprep.subr.mxu0 0.0
    %1638 = vmatpush1.msra.mxu0 %v135
    %1639 = vmatprep.subr.mxu0 0.0
    %1640 = vmatpush1.msra.mxu0 %v140
    %1641 = vmatprep.subr.mxu0 0.0
    %1642 = vmatpush1.msra.mxu0 %v145
    %1643 = vmatprep.subr.mxu0 0.0
    %1644 = vmatpush1.msra.mxu0 %v150
    %1645 = vmatprep.subr.mxu0 0.0
    %1646 = vmatpush1.msra.mxu0 %v155
    %1647 = vmatprep.subr.mxu0 0.0
    %1648 = vmatpush1.msra.mxu0 %v160
    %1649 = vmatprep.subr.mxu0 0.0
    %1650 = vmatpush1.msra.mxu0 %v165
    %1651 = vmatprep.subr.mxu0 0.0
    %1652 = vmatpush1.msra.mxu0 %v170
    %1653 = vmatprep.subr.mxu0 0.0
    %1654 = vmatpush1.msra.mxu0 %v175
    %1655 = vmatprep.subr.mxu0 0.0
    %1656 = vmatpush1.msra.mxu0 %v180
    %1657 = vmatprep.subr.mxu0 0.0
    %1658 = vmatpush1.msra.mxu0 %v185
    %1659 = vmatprep.subr.mxu0 0.0
    %1660 = vmatpush1.msra.mxu0 %v190
    %1661 = vmatprep.subr.mxu0 0.0
    %1662 = vmatpush1.msra.mxu0 0.0
    %1663 = vmatprep.subr.mxu0 0.0
    %1664 = vmatpush1.msra.mxu0 0.0
    %1665 = vmatprep.subr.mxu0 0.0
    %1666 = vmatpush1.msra.mxu0 0.0
    %1667 = vmatprep.subr.mxu0 0.0
    %1668 = vmatpush1.msra.mxu0 0.0
    %1669 = vmatprep.subr.mxu0 0.0
    %1670 = vmatpush1.msra.mxu0 0.0
    %1671 = vmatprep.subr.mxu0 0.0
    %1672 = vmatpush1.msra.mxu0 0.0
    %1673 = vmatprep.subr.mxu0 0.0
    %1674 = vmatpush1.msra.mxu0 0.0
    %1675 = vmatprep.subr.mxu0 0.0
    %1676 = vmatpush1.msra.mxu0 0.0
    %1677 = vmatprep.subr.mxu0 0.0
    %1678 = vmatpush1.msra.mxu0 0.0
    %1679 = vmatprep.subr.mxu0 0.0
    %1680 = vmatpush1.msra.mxu0 0.0
    %1681 = vmatprep.subr.mxu0 0.0
    %1682 = vmatpush1.msra.mxu0 0.0
    %1683 = vmatprep.subr.mxu0 0.0
    %1684 = vmatpush1.msra.mxu0 0.0
    %1685 = vmatprep.subr.mxu0 0.0
    %1686 = vmatpush1.msra.mxu0 0.0
    %1687 = vmatprep.subr.mxu0 0.0
    %1688 = vmatpush1.msra.mxu0 0.0
    %1689 = vmatprep.subr.mxu0 0.0
    %1690 = vmatpush1.msra.mxu0 0.0
    %1691 = vmatprep.subr.mxu0 0.0
    %1692 = vmatpush1.msra.mxu0 0.0
    %1693 = vmatprep.mubr.f32.mxu0 0.0
    %1694 = vmatmul.mubr.f32.gmra.mrb[0].mxu0 %v1486
    %v1695 = vpop.f32.mrb[0].mxu0
    %v1696 = vadd.f32 0.0, %v1695
    %v1697 = vpop.f32.mrb[0].mxu0
    %1698 = vdwg.mxu0
    %v1699 = vadd.f32 %v659, %v1696
    %v1700 = vsel %vm903, %v1699, -inf
    %1701 = vmax.xlane.f32.xlu0 %v1700
    %v1702 = vpop.xlane.xlu0 %1701
    %v1703 = vsub.f32 %v1699, %v1702
    %v1704 = vmul.f32 %v1703, 1.442695
    %v1705 = vpow.pop %v1704
    %v1706 = vsel %vm903, %v1705, 0.0
    %1707 = vadd.xlane.f32.xlu0 %v1706
    %v1708 = vpop.xlane.xlu0 %1707
    %v1709 = vrcp.pop %v1708
    %v1710 = vmul.f32 %v1705, %v1709
    %v1711 = vadd.f32 %v662, %v1554
    %v1712 = vadd.f32 %v663, %v1556
    %v1713 = vadd.f32 %v664, %v1625
    %v1714 = vadd.f32 %v665, %v1627
    %1715 = vmatprep.subr.mxu0 %v192
    %1716 = vmatpush1.msra.mxu0 %v191
    %1717 = vmatprep.subr.mxu0 %v196
    %1718 = vmatpush1.msra.mxu0 %v195
    %1719 = vmatprep.subr.mxu0 %v200
    %1720 = vmatpush1.msra.mxu0 %v199
    %1721 = vmatprep.subr.mxu0 %v204
    %1722 = vmatpush1.msra.mxu0 %v203
    %1723 = vmatprep.subr.mxu0 %v208
    %1724 = vmatpush1.msra.mxu0 %v207
    %1725 = vmatprep.subr.mxu0 %v212
    %1726 = vmatpush1.msra.mxu0 %v211
    %1727 = vmatprep.subr.mxu0 %v216
    %1728 = vmatpush1.msra.mxu0 %v215
    %1729 = vmatprep.subr.mxu0 %v220
    %1730 = vmatpush1.msra.mxu0 %v219
    %1731 = vmatprep.subr.mxu0 %v224
    %1732 = vmatpush1.msra.mxu0 %v223
    %1733 = vmatprep.subr.mxu0 %v228
    %1734 = vmatpush1.msra.mxu0 %v227
    %1735 = vmatprep.subr.mxu0 %v232
    %1736 = vmatpush1.msra.mxu0 %v231
    %1737 = vmatprep.subr.mxu0 %v236
    %1738 = vmatpush1.msra.mxu0 %v235
    %1739 = vmatprep.subr.mxu0 %v240
    %1740 = vmatpush1.msra.mxu0 %v239
    %1741 = vmatprep.subr.mxu0 %v244
    %1742 = vmatpush1.msra.mxu0 %v243
    %1743 = vmatprep.subr.mxu0 %v248
    %1744 = vmatpush1.msra.mxu0 %v247
    %1745 = vmatprep.subr.mxu0 %v252
    %1746 = vmatpush1.msra.mxu0 %v251
    %1747 = vmatprep.subr.mxu0 0.0
    %1748 = vmatpush1.msra.mxu0 0.0
    %1749 = vmatprep.subr.mxu0 0.0
    %1750 = vmatpush1.msra.mxu0 0.0
    %1751 = vmatprep.subr.mxu0 0.0
    %1752 = vmatpush1.msra.mxu0 0.0
    %1753 = vmatprep.subr.mxu0 0.0
    %1754 = vmatpush1.msra.mxu0 0.0
    %1755 = vmatprep.subr.mxu0 0.0
    %1756 = vmatpush1.msra.mxu0 0.0
    %1757 = vmatprep.subr.mxu0 0.0
    %1758 = vmatpush1.msra.mxu0 0.0
    %1759 = vmatprep.subr.mxu0 0.0
    %1760 = vmatpush1.msra.mxu0 0.0
    %1761 = vmatprep.subr.mxu0 0.0
    %1762 = vmatpush1.msra.mxu0 0.0
    %1763 = vmatprep.subr.mxu0 0.0
    %1764 = vmatpush1.msra.mxu0 0.0
    %1765 = vmatprep.subr.mxu0 0.0
    %1766 = vmatpush1.msra.mxu0 0.0
    %1767 = vmatprep.subr.mxu0 0.0
    %1768 = vmatpush1.msra.mxu0 0.0
    %1769 = vmatprep.subr.mxu0 0.0
    %1770 = vmatpush1.msra.mxu0 0.0
    %1771 = vmatprep.subr.mxu0 0.0
    %1772 = vmatpush1.msra.mxu0 0.0
    %1773 = vmatprep.subr.mxu0 0.0
    %1774 = vmatpush1.msra.mxu0 0.0
    %1775 = vmatprep.subr.mxu0 0.0
    %1776 = vmatpush1.msra.mxu0 0.0
    %1777 = vmatprep.subr.mxu0 0.0
    %1778 = vmatpush1.msra.mxu0 0.0
    %1779 = vmatprep.mubr.f32.mxu0 0.0
    %1780 = vmatmul.mubr.f32.gmra.mrb[0].mxu0 %v1710
    %v1781 = vpop.f32.mrb[0].mxu0
    %v1782 = vadd.f32 0.0, %v1781
    %v1783 = vpop.f32.mrb[0].mxu0
    %v1784 = vadd.f32 0.0, %v1783
    %1785 = vdwg.mxu0
    %1786 = vmatprep.subr.mxu0 %v194
    %1787 = vmatpush1.msra.mxu0 %v193
    %1788 = vmatprep.subr.mxu0 %v198
    %1789 = vmatpush1.msra.mxu0 %v197
    %1790 = vmatprep.subr.mxu0 %v202
    %1791 = vmatpush1.msra.mxu0 %v201
    %1792 = vmatprep.subr.mxu0 %v206
    %1793 = vmatpush1.msra.mxu0 %v205
    %1794 = vmatprep.subr.mxu0 %v210
    %1795 = vmatpush1.msra.mxu0 %v209
    %1796 = vmatprep.subr.mxu0 %v214
    %1797 = vmatpush1.msra.mxu0 %v213
    %1798 = vmatprep.subr.mxu0 %v218
    %1799 = vmatpush1.msra.mxu0 %v217
    %1800 = vmatprep.subr.mxu0 %v222
    %1801 = vmatpush1.msra.mxu0 %v221
    %1802 = vmatprep.subr.mxu0 %v226
    %1803 = vmatpush1.msra.mxu0 %v225
    %1804 = vmatprep.subr.mxu0 %v230
    %1805 = vmatpush1.msra.mxu0 %v229
    %1806 = vmatprep.subr.mxu0 %v234
    %1807 = vmatpush1.msra.mxu0 %v233
    %1808 = vmatprep.subr.mxu0 %v238
    %1809 = vmatpush1.msra.mxu0 %v237
    %1810 = vmatprep.subr.mxu0 %v242
    %1811 = vmatpush1.msra.mxu0 %v241
    %1812 = vmatprep.subr.mxu0 %v246
    %1813 = vmatpush1.msra.mxu0 %v245
    %1814 = vmatprep.subr.mxu0 %v250
    %1815 = vmatpush1.msra.mxu0 %v249
    %1816 = vmatprep.subr.mxu0 %v254
    %1817 = vmatpush1.msra.mxu0 %v253
    %1818 = vmatprep.subr.mxu0 0.0
    %1819 = vmatpush1.msra.mxu0 0.0
    %1820 = vmatprep.subr.mxu0 0.0
    %1821 = vmatpush1.msra.mxu0 0.0
    %1822 = vmatprep.subr.mxu0 0.0
    %1823 = vmatpush1.msra.mxu0 0.0
    %1824 = vmatprep.subr.mxu0 0.0
    %1825 = vmatpush1.msra.mxu0 0.0
    %1826 = vmatprep.subr.mxu0 0.0
    %1827 = vmatpush1.msra.mxu0 0.0
    %1828 = vmatprep.subr.mxu0 0.0
    %1829 = vmatpush1.msra.mxu0 0.0
    %1830 = vmatprep.subr.mxu0 0.0
    %1831 = vmatpush1.msra.mxu0 0.0
    %1832 = vmatprep.subr.mxu0 0.0
    %1833 = vmatpush1.msra.mxu0 0.0
    %1834 = vmatprep.subr.mxu0 0.0
    %1835 = vmatpush1.msra.mxu0 0.0
    %1836 = vmatprep.subr.mxu0 0.0
    %1837 = vmatpush1.msra.mxu0 0.0
    %1838 = vmatprep.subr.mxu0 0.0
    %1839 = vmatpush1.msra.mxu0 0.0
    %1840 = vmatprep.subr.mxu0 0.0
    %1841 = vmatpush1.msra.mxu0 0.0
    %1842 = vmatprep.subr.mxu0 0.0
    %1843 = vmatpush1.msra.mxu0 0.0
    %1844 = vmatprep.subr.mxu0 0.0
    %1845 = vmatpush1.msra.mxu0 0.0
    %1846 = vmatprep.subr.mxu0 0.0
    %1847 = vmatpush1.msra.mxu0 0.0
    %1848 = vmatprep.subr.mxu0 0.0
    %1849 = vmatpush1.msra.mxu0 0.0
    %1850 = vmatprep.mubr.f32.mxu0 0.0
    %1851 = vmatmul.mubr.f32.gmra.mrb[0].mxu0 %v1710
    %v1852 = vpop.f32.mrb[0].mxu0
    %v1853 = vadd.f32 0.0, %v1852
    %v1854 = vpop.f32.mrb[0].mxu0
    %v1855 = vadd.f32 0.0, %v1854
    %1856 = vdwg.mxu0
    %v1857 = vadd.f32 %v1711, %v1782
    %v1858 = vadd.f32 %v1712, %v1784
    %v1859 = vadd.f32 %v1713, %v1853
    %v1860 = vadd.f32 %v1714, %v1855
    %v1861 = vxor.u32 %v1857, 2147483648
    %v1862 = vxor.u32 %v1858, 2147483648
    %v1863 = vxor.u32 %v1859, 2147483648
    %v1864 = vmul.f32 %v1861, 1.442695
    %v1865 = vpow.pop %v1864
    %v1866 = vmul.f32 %v1862, 1.442695
    %v1867 = vpow.pop %v1866
    %v1868 = vmul.f32 %v1863, 1.442695
    %v1869 = vpow.pop %v1868
    %v1870 = vadd.f32 %v1865, 1.0
    %v1871 = vadd.f32 %v1867, 1.0
    %v1872 = vadd.f32 %v1869, 1.0
    %v1873 = vrcp.pop %v1870
    %v1874 = vmul.f32 1.0, %v1873
    %v1875 = vrcp.pop %v1871
    %v1876 = vmul.f32 1.0, %v1875
    %v1877 = vrcp.pop %v1872
    %v1878 = vmul.f32 1.0, %v1877
    %v1879 = vtanh.pop %v1860
    %v1880 = vmul.f32 %v1876, %v1484
    %v1881 = vmul.f32 %v1874, %v1879
    %v1882 = vadd.f32 %v1880, %v1881
    %v1883 = vtanh.pop %v1882
    %v1884 = vmul.f32 %v1878, %v1883
    %v1885 = vadd.f32 %v74, %v1884
    %vm1886 = vcmask 254976
    %1887 = vst.msk [vmem:[#allocation10] sm:$0x3] %vm1886, %v1885
    // Predicated region
    $region38: #{tpu_custom_call.1} parent=1 // pred_check
      _
    $region39: #{tpu_custom_call.1} parent=1 // pred_check_branch
      %1889 = sbr.rel (0) target = $region41
    $region40: #{tpu_custom_call.1} parent=1 // pred_region
      %s1891 = ssub.s32 32, 32
      %1892 = vsyncadd [#allocation4], %s1891
      %s1894 = sshll.u32 [#allocation10], 4
      %s1895 = int_to_ptr.vmem [resolvable:$true] %s1894
      %1897 = dma.vmem_to_hbm [thread:$0]  %s1895, 32, %s5, [#allocation4]
    $region41: #{tpu_custom_call.1} parent=1 // pred_fallthru
      _
    // Predicated region
    $region42: #{tpu_custom_call.1} parent=1 // pred_check
      _
    $region43: #{tpu_custom_call.1} parent=1 // pred_check_branch
      %1899 = sbr.rel (0) target = $region45
    $region44: #{tpu_custom_call.1} parent=1 // pred_region
      %1900 = dma.done [#allocation4], 32
    $region45: #{tpu_custom_call.1} parent=1 // pred_fallthru
      _
    %1901 = vsyncpa [#allocation3], 1
    %1902 = vsyncpa [#allocation6], 1
    %1903 = vsyncpa [#allocation9], 1
    %1904 = vsyncpa [#allocation4], 1

// kernel: tpu_custom_call.1
$region0: #{tpu_custom_call.1}
  #allocation0 [shape = 'u32[]', space=smem, size = 0x4, offset = 0x4, fixed_abs, tag = 'smem constant byte address 0x4 - core index']
  #allocation1 [shape = 'u32[144,128]{1,0:T(1,128)}', space=vmem, size = 0x12000, scoped, tag = 'internal scratch']
  %s0 = inlined_call_operand.hbm [shape: f32[2,32], index: 0, kind: input, shape index: {}]
  %s1 = inlined_call_operand.hbm [shape: f32[32,1152], index: 1, kind: input, shape index: {}]
  %s2 = inlined_call_operand.hbm [shape: f32[128,640], index: 2, kind: input, shape index: {}]
  %s3 = inlined_call_operand.hbm [shape: f32[128,512], index: 3, kind: input, shape index: {}]
  %s4 = inlined_call_operand.vmem [shape: f32[1,1152], index: 4, kind: input, shape index: {}]
  %s5 = inlined_call_operand.hbm [shape: f32[2,32], index: 5, kind: output, shape index: {}]
  %s6 = sld [smem:[#allocation0]]
  $region46: #{tpu_custom_call.1} parent=0
    _
  %s8 = ssub.s32 1, %s6
  %s9 = scalar_select 0, %s8, %s6
  $region1: #{tpu_custom_call.1} parent=0
    #allocation2 [shape = 'u8[1024]{0}', space=vmem, size = 0x400, scoped, tag = 'input window, operand 0, single buffered']
    #allocation3 [shape = 's32[1]{0}', space=sflag, size = 0x4, scoped, tag = 'scoped memory for tpu_custom_call.1']
    #allocation4 [shape = 's32[1]{0}', space=sflag, size = 0x4, scoped, tag = 'scoped memory for tpu_custom_call.1']
    #allocation5 [shape = 'u8[147456]{0}', space=vmem, size = 0x24000, scoped, tag = 'input window, operand 1, single buffered']
    #allocation6 [shape = 's32[1]{0}', space=sflag, size = 0x4, scoped, tag = 'scoped memory for tpu_custom_call.1']
    #allocation7 [shape = 'u8[327680]{0}', space=vmem, size = 0x50000, scoped, tag = 'input window, operand 2, single buffered']
    #allocation8 [shape = 'u8[262144]{0}', space=vmem, size = 0x40000, scoped, tag = 'input window, operand 3, single buffered']
    #allocation9 [shape = 's32[1]{0}', space=sflag, size = 0x4, scoped, tag = 'scoped memory for tpu_custom_call.1']
    #allocation10 [shape = 'u8[1024]{0}', space=vmem, size = 0x400, scoped, tag = 'output window, operand 0, single buffered']
    %10 = vsyncpa [#allocation3], 0
    %11 = vsyncpa [#allocation6], 0
    %12 = vsyncpa [#allocation9], 0
    %13 = vsyncpa [#allocation4], 0
    // Predicated region
    $region2: #{tpu_custom_call.1} parent=1 // pred_check
      _
    $region3: #{tpu_custom_call.1} parent=1 // pred_check_branch
      %15 = sbr.rel (0) target = $region5
    $region4: #{tpu_custom_call.1} parent=1 // pred_region
      %s17 = ssub.s32 32, 32
      %18 = vsyncadd [#allocation3], %s17
      %s20 = sshll.u32 [#allocation2], 4
      %s21 = int_to_ptr.vmem [resolvable:$true] %s20
      %23 = dma.hbm_to_vmem [thread:$0]  %s0, 32, %s21, [#allocation3]
    $region5: #{tpu_custom_call.1} parent=1 // pred_fallthru
      _
    // Predicated region
    $region6: #{tpu_custom_call.1} parent=1 // pred_check
      _
    $region7: #{tpu_custom_call.1} parent=1 // pred_check_branch
      %25 = sbr.rel (0) target = $region9
    $region8: #{tpu_custom_call.1} parent=1 // pred_region
      %s27 = ssub.s32 4608, 4608
      %28 = vsyncadd [#allocation6], %s27
      %s29 = sshll.u32 [#allocation5], 4
      %s30 = int_to_ptr.vmem [resolvable:$true] %s29
      %35 = dma.hbm_to_vmem [thread:$0]  %s1, 4608, %s30, [#allocation6], 1152, 1152, 72
    $region9: #{tpu_custom_call.1} parent=1 // pred_fallthru
      _
    // Predicated region
    $region10: #{tpu_custom_call.1} parent=1 // pred_check
      _
    $region11: #{tpu_custom_call.1} parent=1 // pred_check_branch
      %37 = sbr.rel (0) target = $region13
    $region12: #{tpu_custom_call.1} parent=1 // pred_region
      %s39 = ssub.s32 10240, 10240
      %40 = vsyncadd [#allocation6], %s39
      %s41 = sshll.u32 [#allocation7], 4
      %s42 = int_to_ptr.vmem [resolvable:$true] %s41
      %47 = dma.hbm_to_vmem [thread:$0]  %s2, 10240, %s42, [#allocation6], 640, 640, 40
    $region13: #{tpu_custom_call.1} parent=1 // pred_fallthru
      _
    // Predicated region
    $region14: #{tpu_custom_call.1} parent=1 // pred_check
      _
    $region15: #{tpu_custom_call.1} parent=1 // pred_check_branch
      %49 = sbr.rel (0) target = $region17
    $region16: #{tpu_custom_call.1} parent=1 // pred_region
      %s51 = ssub.s32 8192, 8192
      %52 = vsyncadd [#allocation9], %s51
      %s53 = sshll.u32 [#allocation8], 4
      %s54 = int_to_ptr.vmem [resolvable:$true] %s53
      %59 = dma.hbm_to_vmem [thread:$0]  %s3, 8192, %s54, [#allocation9], 512, 512, 32
    $region17: #{tpu_custom_call.1} parent=1 // pred_fallthru
      _
    // Predicated region
    $region18: #{tpu_custom_call.1} parent=1 // pred_check
      _
    $region19: #{tpu_custom_call.1} parent=1 // pred_check_branch
      %61 = sbr.rel (0) target = $region21
    $region20: #{tpu_custom_call.1} parent=1 // pred_region
      _
    $region21: #{tpu_custom_call.1} parent=1 // pred_fallthru
      _
    // Predicated region
    $region22: #{tpu_custom_call.1} parent=1 // pred_check
      _
    $region23: #{tpu_custom_call.1} parent=1 // pred_check_branch
      %63 = sbr.rel (0) target = $region25
    $region24: #{tpu_custom_call.1} parent=1 // pred_region
      %64 = dma.done [#allocation3], 32
    $region25: #{tpu_custom_call.1} parent=1 // pred_fallthru
      _
    // Predicated region
    $region26: #{tpu_custom_call.1} parent=1 // pred_check
      _
    $region27: #{tpu_custom_call.1} parent=1 // pred_check_branch
      %66 = sbr.rel (0) target = $region29
    $region28: #{tpu_custom_call.1} parent=1 // pred_region
      %67 = dma.done [#allocation6], 4608
    $region29: #{tpu_custom_call.1} parent=1 // pred_fallthru
      _
    // Predicated region
    $region30: #{tpu_custom_call.1} parent=1 // pred_check
      _
    $region31: #{tpu_custom_call.1} parent=1 // pred_check_branch
      %69 = sbr.rel (0) target = $region33
    $region32: #{tpu_custom_call.1} parent=1 // pred_region
      %70 = dma.done [#allocation6], 10240
    $region33: #{tpu_custom_call.1} parent=1 // pred_fallthru
      _
    // Predicated region
    $region34: #{tpu_custom_call.1} parent=1 // pred_check
      _
    $region35: #{tpu_custom_call.1} parent=1 // pred_check_branch
      %72 = sbr.rel (0) target = $region37
    $region36: #{tpu_custom_call.1} parent=1 // pred_region
      %73 = dma.done [#allocation9], 8192
    $region37: #{tpu_custom_call.1} parent=1 // pred_fallthru
      _
    %v74 = vld [vmem:[#allocation2] sm:$0x3]
    %v75 = vld [vmem:[#allocation5] sm:$0xff]
    %v76 = vld [vmem:[#allocation5 + $0x8] sm:$0xff]
    %v77 = vld [vmem:[#allocation5 + $0x10] sm:$0xff]
    %v78 = vld [vmem:[#allocation5 + $0x18] sm:$0xff]
    %v79 = vld [vmem:[#allocation5 + $0x20] sm:$0xff]
    %v80 = vld [vmem:[#allocation5 + $0x28] sm:$0xff]
    %v81 = vld [vmem:[#allocation5 + $0x30] sm:$0xff]
    %v82 = vld [vmem:[#allocation5 + $0x38] sm:$0xff]
    %v83 = vld [vmem:[#allocation5 + $0x40] sm:$0xff]
    %v84 = vld [vmem:[#allocation5 + $0x48] sm:$0xff]
    %v85 = vld [vmem:[#allocation5 + $0x50] sm:$0xff]
    %v86 = vld [vmem:[#allocation5 + $0x58] sm:$0xff]
    %v87 = vld [vmem:[#allocation5 + $0x60] sm:$0xff]
    %v88 = vld [vmem:[#allocation5 + $0x68] sm:$0xff]
    %v89 = vld [vmem:[#allocation5 + $0x70] sm:$0xff]
    %v90 = vld [vmem:[#allocation5 + $0x78] sm:$0xff]
    %v91 = vld [vmem:[#allocation5 + $0x80] sm:$0xff]
    %v92 = vld [vmem:[#allocation5 + $0x88] sm:$0xff]
    %v93 = vld [vmem:[#allocation5 + $0x90] sm:$0xff]
    %v94 = vld [vmem:[#allocation5 + $0x98] sm:$0xff]
    %v95 = vld [vmem:[#allocation5 + $0xa0] sm:$0xff]
    %v96 = vld [vmem:[#allocation5 + $0xa8] sm:$0xff]
    %v97 = vld [vmem:[#allocation5 + $0xb0] sm:$0xff]
    %v98 = vld [vmem:[#allocation5 + $0xb8] sm:$0xff]
    %v99 = vld [vmem:[#allocation5 + $0xc0] sm:$0xff]
    %v100 = vld [vmem:[#allocation5 + $0xc8] sm:$0xff]
    %v101 = vld [vmem:[#allocation5 + $0xd0] sm:$0xff]
    %v102 = vld [vmem:[#allocation5 + $0xd8] sm:$0xff]
    %v103 = vld [vmem:[#allocation5 + $0xe0] sm:$0xff]
    %v104 = vld [vmem:[#allocation5 + $0xe8] sm:$0xff]
    %v105 = vld [vmem:[#allocation5 + $0xf0] sm:$0xff]
    %v106 = vld [vmem:[#allocation5 + $0xf8] sm:$0xff]
    %v107 = vld [vmem:[#allocation5 + $0x100] sm:$0xff]
    %v108 = vld [vmem:[#allocation5 + $0x108] sm:$0xff]
    %v109 = vld [vmem:[#allocation5 + $0x110] sm:$0xff]
    %v110 = vld [vmem:[#allocation5 + $0x118] sm:$0xff]
    %v111 = vld [vmem:[#allocation7] sm:$0xff]
    %v112 = vld [vmem:[#allocation7 + $0x8] sm:$0xff]
    %v113 = vld [vmem:[#allocation7 + $0x10] sm:$0xff]
    %v114 = vld [vmem:[#allocation7 + $0x18] sm:$0xff]
    %v115 = vld [vmem:[#allocation7 + $0x20] sm:$0xff]
    %v116 = vld [vmem:[#allocation7 + $0x28] sm:$0xff]
    %v117 = vld [vmem:[#allocation7 + $0x30] sm:$0xff]
    %v118 = vld [vmem:[#allocation7 + $0x38] sm:$0xff]
    %v119 = vld [vmem:[#allocation7 + $0x40] sm:$0xff]
    %v120 = vld [vmem:[#allocation7 + $0x48] sm:$0xff]
    %v121 = vld [vmem:[#allocation7 + $0x50] sm:$0xff]
    %v122 = vld [vmem:[#allocation7 + $0x58] sm:$0xff]
    %v123 = vld [vmem:[#allocation7 + $0x60] sm:$0xff]
    %v124 = vld [vmem:[#allocation7 + $0x68] sm:$0xff]
    %v125 = vld [vmem:[#allocation7 + $0x70] sm:$0xff]
    %v126 = vld [vmem:[#allocation7 + $0x78] sm:$0xff]
    %v127 = vld [vmem:[#allocation7 + $0x80] sm:$0xff]
    %v128 = vld [vmem:[#allocation7 + $0x88] sm:$0xff]
    %v129 = vld [vmem:[#allocation7 + $0x90] sm:$0xff]
    %v130 = vld [vmem:[#allocation7 + $0x98] sm:$0xff]
    %v131 = vld [vmem:[#allocation7 + $0xa0] sm:$0xff]
    %v132 = vld [vmem:[#allocation7 + $0xa8] sm:$0xff]
    %v133 = vld [vmem:[#allocation7 + $0xb0] sm:$0xff]
    %v134 = vld [vmem:[#allocation7 + $0xb8] sm:$0xff]
    %v135 = vld [vmem:[#allocation7 + $0xc0] sm:$0xff]
    %v136 = vld [vmem:[#allocation7 + $0xc8] sm:$0xff]
    %v137 = vld [vmem:[#allocation7 + $0xd0] sm:$0xff]
    %v138 = vld [vmem:[#allocation7 + $0xd8] sm:$0xff]
    %v139 = vld [vmem:[#allocation7 + $0xe0] sm:$0xff]
    %v140 = vld [vmem:[#allocation7 + $0xe8] sm:$0xff]
    %v141 = vld [vmem:[#allocation7 + $0xf0] sm:$0xff]
    %v142 = vld [vmem:[#allocation7 + $0xf8] sm:$0xff]
    %v143 = vld [vmem:[#allocation7 + $0x100] sm:$0xff]
    %v144 = vld [vmem:[#allocation7 + $0x108] sm:$0xff]
    %v145 = vld [vmem:[#allocation7 + $0x110] sm:$0xff]
    %v146 = vld [vmem:[#allocation7 + $0x118] sm:$0xff]
    %v147 = vld [vmem:[#allocation7 + $0x120] sm:$0xff]
    %v148 = vld [vmem:[#allocation7 + $0x128] sm:$0xff]
    %v149 = vld [vmem:[#allocation7 + $0x130] sm:$0xff]
    %v150 = vld [vmem:[#allocation7 + $0x138] sm:$0xff]
    %v151 = vld [vmem:[#allocation7 + $0x140] sm:$0xff]
    %v152 = vld [vmem:[#allocation7 + $0x148] sm:$0xff]
    %v153 = vld [vmem:[#allocation7 + $0x150] sm:$0xff]
    %v154 = vld [vmem:[#allocation7 + $0x158] sm:$0xff]
    %v155 = vld [vmem:[#allocation7 + $0x160] sm:$0xff]
    %v156 = vld [vmem:[#allocation7 + $0x168] sm:$0xff]
    %v157 = vld [vmem:[#allocation7 + $0x170] sm:$0xff]
    %v158 = vld [vmem:[#allocation7 + $0x178] sm:$0xff]
    %v159 = vld [vmem:[#allocation7 + $0x180] sm:$0xff]
    %v160 = vld [vmem:[#allocation7 + $0x188] sm:$0xff]
    %v161 = vld [vmem:[#allocation7 + $0x190] sm:$0xff]
    %v162 = vld [vmem:[#allocation7 + $0x198] sm:$0xff]
    %v163 = vld [vmem:[#allocation7 + $0x1a0] sm:$0xff]
    %v164 = vld [vmem:[#allocation7 + $0x1a8] sm:$0xff]
    %v165 = vld [vmem:[#allocation7 + $0x1b0] sm:$0xff]
    %v166 = vld [vmem:[#allocation7 + $0x1b8] sm:$0xff]
    %v167 = vld [vmem:[#allocation7 + $0x1c0] sm:$0xff]
    %v168 = vld [vmem:[#allocation7 + $0x1c8] sm:$0xff]
    %v169 = vld [vmem:[#allocation7 + $0x1d0] sm:$0xff]
    %v170 = vld [vmem:[#allocation7 + $0x1d8] sm:$0xff]
    %v171 = vld [vmem:[#allocation7 + $0x1e0] sm:$0xff]
    %v172 = vld [vmem:[#allocation7 + $0x1e8] sm:$0xff]
    %v173 = vld [vmem:[#allocation7 + $0x1f0] sm:$0xff]
    %v174 = vld [vmem:[#allocation7 + $0x1f8] sm:$0xff]
    %v175 = vld [vmem:[#allocation7 + $0x200] sm:$0xff]
    %v176 = vld [vmem:[#allocation7 + $0x208] sm:$0xff]
    %v177 = vld [vmem:[#allocation7 + $0x210] sm:$0xff]
    %v178 = vld [vmem:[#allocation7 + $0x218] sm:$0xff]
    %v179 = vld [vmem:[#allocation7 + $0x220] sm:$0xff]
    %v180 = vld [vmem:[#allocation7 + $0x228] sm:$0xff]
    %v181 = vld [vmem:[#allocation7 + $0x230] sm:$0xff]
    %v182 = vld [vmem:[#allocation7 + $0x238] sm:$0xff]
    %v183 = vld [vmem:[#allocation7 + $0x240] sm:$0xff]
    %v184 = vld [vmem:[#allocation7 + $0x248] sm:$0xff]
    %v185 = vld [vmem:[#allocation7 + $0x250] sm:$0xff]
    %v186 = vld [vmem:[#allocation7 + $0x258] sm:$0xff]
    %v187 = vld [vmem:[#allocation7 + $0x260] sm:$0xff]
    %v188 = vld [vmem:[#allocation7 + $0x268] sm:$0xff]
    %v189 = vld [vmem:[#allocation7 + $0x270] sm:$0xff]
    %v190 = vld [vmem:[#allocation7 + $0x278] sm:$0xff]
    %v191 = vld [vmem:[#allocation8] sm:$0xff]
    %v192 = vld [vmem:[#allocation8 + $0x8] sm:$0xff]
    %v193 = vld [vmem:[#allocation8 + $0x10] sm:$0xff]
    %v194 = vld [vmem:[#allocation8 + $0x18] sm:$0xff]
    %v195 = vld [vmem:[#allocation8 + $0x20] sm:$0xff]
    %v196 = vld [vmem:[#allocation8 + $0x28] sm:$0xff]
    %v197 = vld [vmem:[#allocation8 + $0x30] sm:$0xff]
    %v198 = vld [vmem:[#allocation8 + $0x38] sm:$0xff]
    %v199 = vld [vmem:[#allocation8 + $0x40] sm:$0xff]
    %v200 = vld [vmem:[#allocation8 + $0x48] sm:$0xff]
    %v201 = vld [vmem:[#allocation8 + $0x50] sm:$0xff]
    %v202 = vld [vmem:[#allocation8 + $0x58] sm:$0xff]
    %v203 = vld [vmem:[#allocation8 + $0x60] sm:$0xff]
    %v204 = vld [vmem:[#allocation8 + $0x68] sm:$0xff]
    %v205 = vld [vmem:[#allocation8 + $0x70] sm:$0xff]
    %v206 = vld [vmem:[#allocation8 + $0x78] sm:$0xff]
    %v207 = vld [vmem:[#allocation8 + $0x80] sm:$0xff]
    %v208 = vld [vmem:[#allocation8 + $0x88] sm:$0xff]
    %v209 = vld [vmem:[#allocation8 + $0x90] sm:$0xff]
    %v210 = vld [vmem:[#allocation8 + $0x98] sm:$0xff]
    %v211 = vld [vmem:[#allocation8 + $0xa0] sm:$0xff]
    %v212 = vld [vmem:[#allocation8 + $0xa8] sm:$0xff]
    %v213 = vld [vmem:[#allocation8 + $0xb0] sm:$0xff]
    %v214 = vld [vmem:[#allocation8 + $0xb8] sm:$0xff]
    %v215 = vld [vmem:[#allocation8 + $0xc0] sm:$0xff]
    %v216 = vld [vmem:[#allocation8 + $0xc8] sm:$0xff]
    %v217 = vld [vmem:[#allocation8 + $0xd0] sm:$0xff]
    %v218 = vld [vmem:[#allocation8 + $0xd8] sm:$0xff]
    %v219 = vld [vmem:[#allocation8 + $0xe0] sm:$0xff]
    %v220 = vld [vmem:[#allocation8 + $0xe8] sm:$0xff]
    %v221 = vld [vmem:[#allocation8 + $0xf0] sm:$0xff]
    %v222 = vld [vmem:[#allocation8 + $0xf8] sm:$0xff]
    %v223 = vld [vmem:[#allocation8 + $0x100] sm:$0xff]
    %v224 = vld [vmem:[#allocation8 + $0x108] sm:$0xff]
    %v225 = vld [vmem:[#allocation8 + $0x110] sm:$0xff]
    %v226 = vld [vmem:[#allocation8 + $0x118] sm:$0xff]
    %v227 = vld [vmem:[#allocation8 + $0x120] sm:$0xff]
    %v228 = vld [vmem:[#allocation8 + $0x128] sm:$0xff]
    %v229 = vld [vmem:[#allocation8 + $0x130] sm:$0xff]
    %v230 = vld [vmem:[#allocation8 + $0x138] sm:$0xff]
    %v231 = vld [vmem:[#allocation8 + $0x140] sm:$0xff]
    %v232 = vld [vmem:[#allocation8 + $0x148] sm:$0xff]
    %v233 = vld [vmem:[#allocation8 + $0x150] sm:$0xff]
    %v234 = vld [vmem:[#allocation8 + $0x158] sm:$0xff]
    %v235 = vld [vmem:[#allocation8 + $0x160] sm:$0xff]
    %v236 = vld [vmem:[#allocation8 + $0x168] sm:$0xff]
    %v237 = vld [vmem:[#allocation8 + $0x170] sm:$0xff]
    %v238 = vld [vmem:[#allocation8 + $0x178] sm:$0xff]
    %v239 = vld [vmem:[#allocation8 + $0x180] sm:$0xff]
    %v240 = vld [vmem:[#allocation8 + $0x188] sm:$0xff]
    %v241 = vld [vmem:[#allocation8 + $0x190] sm:$0xff]
    %v242 = vld [vmem:[#allocation8 + $0x198] sm:$0xff]
    %v243 = vld [vmem:[#allocation8 + $0x1a0] sm:$0xff]
    %v244 = vld [vmem:[#allocation8 + $0x1a8] sm:$0xff]
    %v245 = vld [vmem:[#allocation8 + $0x1b0] sm:$0xff]
    %v246 = vld [vmem:[#allocation8 + $0x1b8] sm:$0xff]
    %v247 = vld [vmem:[#allocation8 + $0x1c0] sm:$0xff]
    %v248 = vld [vmem:[#allocation8 + $0x1c8] sm:$0xff]
    %v249 = vld [vmem:[#allocation8 + $0x1d0] sm:$0xff]
    %v250 = vld [vmem:[#allocation8 + $0x1d8] sm:$0xff]
    %v251 = vld [vmem:[#allocation8 + $0x1e0] sm:$0xff]
    %v252 = vld [vmem:[#allocation8 + $0x1e8] sm:$0xff]
    %v253 = vld [vmem:[#allocation8 + $0x1f0] sm:$0xff]
    %v254 = vld [vmem:[#allocation8 + $0x1f8] sm:$0xff]
    %v255 = vld [vmem:[%s4] sm:$0xff]
    %v256 = vld [vmem:[%s4 + $0x8] sm:$0x1]
    %v259 = vlaneseq
    %v260 = vshrl.u32 %v259, 7
    %v261 = vsub.s32 0, %v260
    %v262 = vrot.slane %v255, %v261
    %v263 = vlaneseq
    %v264 = vshrl.u32 %v263, 7
    %v265 = vsub.s32 1, %v264
    %v266 = vrot.slane %v255, %v265
    %v267 = vlaneseq
    %v268 = vshrl.u32 %v267, 7
    %v269 = vsub.s32 2, %v268
    %v270 = vrot.slane %v255, %v269
    %v271 = vlaneseq
    %v272 = vshrl.u32 %v271, 7
    %v273 = vsub.s32 3, %v272
    %v274 = vrot.slane %v255, %v273
    %v275 = vlaneseq
    %v276 = vshrl.u32 %v275, 7
    %v277 = vsub.s32 4, %v276
    %v278 = vrot.slane %v255, %v277
    %v279 = vlaneseq
    %v280 = vshrl.u32 %v279, 7
    %v281 = vsub.s32 5, %v280
    %v282 = vrot.slane %v255, %v281
    %v283 = vlaneseq
    %v284 = vshrl.u32 %v283, 7
    %v285 = vsub.s32 6, %v284
    %v286 = vrot.slane %v255, %v285
    %v287 = vlaneseq
    %v288 = vshrl.u32 %v287, 7
    %v289 = vsub.s32 7, %v288
    %v290 = vrot.slane %v255, %v289
    %v291 = vlaneseq
    %v292 = vshrl.u32 %v291, 7
    %v293 = vsub.s32 0, %v292
    %v294 = vrot.slane %v256, %v293
    %vm304 = vcmask 261120
    %v306 = vsel %vm304, %v74, 0
    %308 = vmatprep.subr.mxu0 %v76
    %309 = vmatpush1.msra.mxu0 %v75
    %310 = vmatprep.subr.mxu0 %v85
    %311 = vmatpush1.msra.mxu0 %v84
    %312 = vmatprep.subr.mxu0 %v94
    %313 = vmatpush1.msra.mxu0 %v93
    %314 = vmatprep.subr.mxu0 %v103
    %315 = vmatpush1.msra.mxu0 %v102
    %316 = vmatprep.subr.mxu0 0.0
    %317 = vmatpush1.msra.mxu0 0.0
    %318 = vmatprep.subr.mxu0 0.0
    %319 = vmatpush1.msra.mxu0 0.0
    %320 = vmatprep.subr.mxu0 0.0
    %321 = vmatpush1.msra.mxu0 0.0
    %322 = vmatprep.subr.mxu0 0.0
    %323 = vmatpush1.msra.mxu0 0.0
    %324 = vmatprep.subr.mxu0 0.0
    %325 = vmatpush1.msra.mxu0 0.0
    %326 = vmatprep.subr.mxu0 0.0
    %327 = vmatpush1.msra.mxu0 0.0
    %328 = vmatprep.subr.mxu0 0.0
    %329 = vmatpush1.msra.mxu0 0.0
    %330 = vmatprep.subr.mxu0 0.0
    %331 = vmatpush1.msra.mxu0 0.0
    %332 = vmatprep.subr.mxu0 0.0
    %333 = vmatpush1.msra.mxu0 0.0
    %334 = vmatprep.subr.mxu0 0.0
    %335 = vmatpush1.msra.mxu0 0.0
    %336 = vmatprep.subr.mxu0 0.0
    %337 = vmatpush1.msra.mxu0 0.0
    %338 = vmatprep.subr.mxu0 0.0
    %339 = vmatpush1.msra.mxu0 0.0
    %340 = vmatprep.subr.mxu0 0.0
    %341 = vmatpush1.msra.mxu0 0.0
    %342 = vmatprep.subr.mxu0 0.0
    %343 = vmatpush1.msra.mxu0 0.0
    %344 = vmatprep.subr.mxu0 0.0
    %345 = vmatpush1.msra.mxu0 0.0
    %346 = vmatprep.subr.mxu0 0.0
    %347 = vmatpush1.msra.mxu0 0.0
    %348 = vmatprep.subr.mxu0 0.0
    %349 = vmatpush1.msra.mxu0 0.0
    %350 = vmatprep.subr.mxu0 0.0
    %351 = vmatpush1.msra.mxu0 0.0
    %352 = vmatprep.subr.mxu0 0.0
    %353 = vmatpush1.msra.mxu0 0.0
    %354 = vmatprep.subr.mxu0 0.0
    %355 = vmatpush1.msra.mxu0 0.0
    %356 = vmatprep.subr.mxu0 0.0
    %357 = vmatpush1.msra.mxu0 0.0
    %358 = vmatprep.subr.mxu0 0.0
    %359 = vmatpush1.msra.mxu0 0.0
    %360 = vmatprep.subr.mxu0 0.0
    %361 = vmatpush1.msra.mxu0 0.0
    %362 = vmatprep.subr.mxu0 0.0
    %363 = vmatpush1.msra.mxu0 0.0
    %364 = vmatprep.subr.mxu0 0.0
    %365 = vmatpush1.msra.mxu0 0.0
    %366 = vmatprep.subr.mxu0 0.0
    %367 = vmatpush1.msra.mxu0 0.0
    %368 = vmatprep.subr.mxu0 0.0
    %369 = vmatpush1.msra.mxu0 0.0
    %370 = vmatprep.subr.mxu0 0.0
    %371 = vmatpush1.msra.mxu0 0.0
    %372 = vmatprep.mubr.f32.mxu0 0.0
    %373 = vmatmul.mubr.f32.gmra.mrb[0].mxu0 %v306
    %v374 = vpop.f32.mrb[0].mxu0
    %v375 = vadd.f32 %v262, %v374
    %v376 = vpop.f32.mrb[0].mxu0
    %v377 = vadd.f32 %v266, %v376
    %378 = vdwg.mxu0
    %379 = vmatprep.subr.mxu0 %v78
    %380 = vmatpush1.msra.mxu0 %v77
    %381 = vmatprep.subr.mxu0 %v87
    %382 = vmatpush1.msra.mxu0 %v86
    %383 = vmatprep.subr.mxu0 %v96
    %384 = vmatpush1.msra.mxu0 %v95
    %385 = vmatprep.subr.mxu0 %v105
    %386 = vmatpush1.msra.mxu0 %v104
    %387 = vmatprep.subr.mxu0 0.0
    %388 = vmatpush1.msra.mxu0 0.0
    %389 = vmatprep.subr.mxu0 0.0
    %390 = vmatpush1.msra.mxu0 0.0
    %391 = vmatprep.subr.mxu0 0.0
    %392 = vmatpush1.msra.mxu0 0.0
    %393 = vmatprep.subr.mxu0 0.0
    %394 = vmatpush1.msra.mxu0 0.0
    %395 = vmatprep.subr.mxu0 0.0
    %396 = vmatpush1.msra.mxu0 0.0
    %397 = vmatprep.subr.mxu0 0.0
    %398 = vmatpush1.msra.mxu0 0.0
    %399 = vmatprep.subr.mxu0 0.0
    %400 = vmatpush1.msra.mxu0 0.0
    %401 = vmatprep.subr.mxu0 0.0
    %402 = vmatpush1.msra.mxu0 0.0
    %403 = vmatprep.subr.mxu0 0.0
    %404 = vmatpush1.msra.mxu0 0.0
    %405 = vmatprep.subr.mxu0 0.0
    %406 = vmatpush1.msra.mxu0 0.0
    %407 = vmatprep.subr.mxu0 0.0
    %408 = vmatpush1.msra.mxu0 0.0
    %409 = vmatprep.subr.mxu0 0.0
    %410 = vmatpush1.msra.mxu0 0.0
    %411 = vmatprep.subr.mxu0 0.0
    %412 = vmatpush1.msra.mxu0 0.0
    %413 = vmatprep.subr.mxu0 0.0
    %414 = vmatpush1.msra.mxu0 0.0
    %415 = vmatprep.subr.mxu0 0.0
    %416 = vmatpush1.msra.mxu0 0.0
    %417 = vmatprep.subr.mxu0 0.0
    %418 = vmatpush1.msra.mxu0 0.0
    %419 = vmatprep.subr.mxu0 0.0
    %420 = vmatpush1.msra.mxu0 0.0
    %421 = vmatprep.subr.mxu0 0.0
    %422 = vmatpush1.msra.mxu0 0.0
    %423 = vmatprep.subr.mxu0 0.0
    %424 = vmatpush1.msra.mxu0 0.0
    %425 = vmatprep.subr.mxu0 0.0
    %426 = vmatpush1.msra.mxu0 0.0
    %427 = vmatprep.subr.mxu0 0.0
    %428 = vmatpush1.msra.mxu0 0.0
    %429 = vmatprep.subr.mxu0 0.0
    %430 = vmatpush1.msra.mxu0 0.0
    %431 = vmatprep.subr.mxu0 0.0
    %432 = vmatpush1.msra.mxu0 0.0
    %433 = vmatprep.subr.mxu0 0.0
    %434 = vmatpush1.msra.mxu0 0.0
    %435 = vmatprep.subr.mxu0 0.0
    %436 = vmatpush1.msra.mxu0 0.0
    %437 = vmatprep.subr.mxu0 0.0
    %438 = vmatpush1.msra.mxu0 0.0
    %439 = vmatprep.subr.mxu0 0.0
    %440 = vmatpush1.msra.mxu0 0.0
    %441 = vmatprep.subr.mxu0 0.0
    %442 = vmatpush1.msra.mxu0 0.0
    %443 = vmatprep.mubr.f32.mxu0 0.0
    %444 = vmatmul.mubr.f32.gmra.mrb[0].mxu0 %v306
    %v445 = vpop.f32.mrb[0].mxu0
    %v446 = vadd.f32 %v270, %v445
    %v447 = vpop.f32.mrb[0].mxu0
    %v448 = vadd.f32 %v274, %v447
    %449 = vdwg.mxu0
    %450 = vmatprep.subr.mxu0 %v80
    %451 = vmatpush1.msra.mxu0 %v79
    %452 = vmatprep.subr.mxu0 %v89
    %453 = vmatpush1.msra.mxu0 %v88
    %454 = vmatprep.subr.mxu0 %v98
    %455 = vmatpush1.msra.mxu0 %v97
    %456 = vmatprep.subr.mxu0 %v107
    %457 = vmatpush1.msra.mxu0 %v106
    %458 = vmatprep.subr.mxu0 0.0
    %459 = vmatpush1.msra.mxu0 0.0
    %460 = vmatprep.subr.mxu0 0.0
    %461 = vmatpush1.msra.mxu0 0.0
    %462 = vmatprep.subr.mxu0 0.0
    %463 = vmatpush1.msra.mxu0 0.0
    %464 = vmatprep.subr.mxu0 0.0
    %465 = vmatpush1.msra.mxu0 0.0
    %466 = vmatprep.subr.mxu0 0.0
    %467 = vmatpush1.msra.mxu0 0.0
    %468 = vmatprep.subr.mxu0 0.0
    %469 = vmatpush1.msra.mxu0 0.0
    %470 = vmatprep.subr.mxu0 0.0
    %471 = vmatpush1.msra.mxu0 0.0
    %472 = vmatprep.subr.mxu0 0.0
    %473 = vmatpush1.msra.mxu0 0.0
    %474 = vmatprep.subr.mxu0 0.0
    %475 = vmatpush1.msra.mxu0 0.0
    %476 = vmatprep.subr.mxu0 0.0
    %477 = vmatpush1.msra.mxu0 0.0
    %478 = vmatprep.subr.mxu0 0.0
    %479 = vmatpush1.msra.mxu0 0.0
    %480 = vmatprep.subr.mxu0 0.0
    %481 = vmatpush1.msra.mxu0 0.0
    %482 = vmatprep.subr.mxu0 0.0
    %483 = vmatpush1.msra.mxu0 0.0
    %484 = vmatprep.subr.mxu0 0.0
    %485 = vmatpush1.msra.mxu0 0.0
    %486 = vmatprep.subr.mxu0 0.0
    %487 = vmatpush1.msra.mxu0 0.0
    %488 = vmatprep.subr.mxu0 0.0
    %489 = vmatpush1.msra.mxu0 0.0
    %490 = vmatprep.subr.mxu0 0.0
    %491 = vmatpush1.msra.mxu0 0.0
    %492 = vmatprep.subr.mxu0 0.0
    %493 = vmatpush1.msra.mxu0 0.0
    %494 = vmatprep.subr.mxu0 0.0
    %495 = vmatpush1.msra.mxu0 0.0
    %496 = vmatprep.subr.mxu0 0.0
    %497 = vmatpush1.msra.mxu0 0.0
    %498 = vmatprep.subr.mxu0 0.0
    %499 = vmatpush1.msra.mxu0 0.0
    %500 = vmatprep.subr.mxu0 0.0
    %501 = vmatpush1.msra.mxu0 0.0
    %502 = vmatprep.subr.mxu0 0.0
    %503 = vmatpush1.msra.mxu0 0.0
    %504 = vmatprep.subr.mxu0 0.0
    %505 = vmatpush1.msra.mxu0 0.0
    %506 = vmatprep.subr.mxu0 0.0
    %507 = vmatpush1.msra.mxu0 0.0
    %508 = vmatprep.subr.mxu0 0.0
    %509 = vmatpush1.msra.mxu0 0.0
    %510 = vmatprep.subr.mxu0 0.0
    %511 = vmatpush1.msra.mxu0 0.0
    %512 = vmatprep.subr.mxu0 0.0
    %513 = vmatpush1.msra.mxu0 0.0
    %514 = vmatprep.mubr.f32.mxu0 0.0
    %515 = vmatmul.mubr.f32.gmra.mrb[0].mxu0 %v306
    %v516 = vpop.f32.mrb[0].mxu0
    %v517 = vadd.f32 %v278, %v516
    %v518 = vpop.f32.mrb[0].mxu0
    %v519 = vadd.f32 %v282, %v518
    %520 = vdwg.mxu0
    %521 = vmatprep.subr.mxu0 %v82
    %522 = vmatpush1.msra.mxu0 %v81
    %523 = vmatprep.subr.mxu0 %v91
    %524 = vmatpush1.msra.mxu0 %v90
    %525 = vmatprep.subr.mxu0 %v100
    %526 = vmatpush1.msra.mxu0 %v99
    %527 = vmatprep.subr.mxu0 %v109
    %528 = vmatpush1.msra.mxu0 %v108
    %529 = vmatprep.subr.mxu0 0.0
    %530 = vmatpush1.msra.mxu0 0.0
    %531 = vmatprep.subr.mxu0 0.0
    %532 = vmatpush1.msra.mxu0 0.0
    %533 = vmatprep.subr.mxu0 0.0
    %534 = vmatpush1.msra.mxu0 0.0
    %535 = vmatprep.subr.mxu0 0.0
    %536 = vmatpush1.msra.mxu0 0.0
    %537 = vmatprep.subr.mxu0 0.0
    %538 = vmatpush1.msra.mxu0 0.0
    %539 = vmatprep.subr.mxu0 0.0
    %540 = vmatpush1.msra.mxu0 0.0
    %541 = vmatprep.subr.mxu0 0.0
    %542 = vmatpush1.msra.mxu0 0.0
    %543 = vmatprep.subr.mxu0 0.0
    %544 = vmatpush1.msra.mxu0 0.0
    %545 = vmatprep.subr.mxu0 0.0
    %546 = vmatpush1.msra.mxu0 0.0
    %547 = vmatprep.subr.mxu0 0.0
    %548 = vmatpush1.msra.mxu0 0.0
    %549 = vmatprep.subr.mxu0 0.0
    %550 = vmatpush1.msra.mxu0 0.0
    %551 = vmatprep.subr.mxu0 0.0
    %552 = vmatpush1.msra.mxu0 0.0
    %553 = vmatprep.subr.mxu0 0.0
    %554 = vmatpush1.msra.mxu0 0.0
    %555 = vmatprep.subr.mxu0 0.0
    %556 = vmatpush1.msra.mxu0 0.0
    %557 = vmatprep.subr.mxu0 0.0
    %558 = vmatpush1.msra.mxu0 0.0
    %559 = vmatprep.subr.mxu0 0.0
    %560 = vmatpush1.msra.mxu0 0.0
    %561 = vmatprep.subr.mxu0 0.0
    %562 = vmatpush1.msra.mxu0 0.0
    %563 = vmatprep.subr.mxu0 0.0
    %564 = vmatpush1.msra.mxu0 0.0
    %565 = vmatprep.subr.mxu0 0.0
    %566 = vmatpush1.msra.mxu0 0.0
    %567 = vmatprep.subr.mxu0 0.0
    %568 = vmatpush1.msra.mxu0 0.0
    %569 = vmatprep.subr.mxu0 0.0
    %570 = vmatpush1.msra.mxu0 0.0
    %571 = vmatprep.subr.mxu0 0.0
    %572 = vmatpush1.msra.mxu0 0.0
    %573 = vmatprep.subr.mxu0 0.0
    %574 = vmatpush1.msra.mxu0 0.0
    %575 = vmatprep.subr.mxu0 0.0
    %576 = vmatpush1.msra.mxu0 0.0
    %577 = vmatprep.subr.mxu0 0.0
    %578 = vmatpush1.msra.mxu0 0.0
    %579 = vmatprep.subr.mxu0 0.0
    %580 = vmatpush1.msra.mxu0 0.0
    %581 = vmatprep.subr.mxu0 0.0
    %582 = vmatpush1.msra.mxu0 0.0
    %583 = vmatprep.subr.mxu0 0.0
    %584 = vmatpush1.msra.mxu0 0.0
    %585 = vmatprep.mubr.f32.mxu0 0.0
    %586 = vmatmul.mubr.f32.gmra.mrb[0].mxu0 %v306
    %v587 = vpop.f32.mrb[0].mxu0
    %v588 = vadd.f32 %v286, %v587
    %v589 = vpop.f32.mrb[0].mxu0
    %v590 = vadd.f32 %v290, %v589
    %591 = vdwg.mxu0
    %592 = vmatprep.subr.mxu0 0.0
    %593 = vmatpush1.msra.mxu0 %v83
    %594 = vmatprep.subr.mxu0 0.0
    %595 = vmatpush1.msra.mxu0 %v92
    %596 = vmatprep.subr.mxu0 0.0
    %597 = vmatpush1.msra.mxu0 %v101
    %598 = vmatprep.subr.mxu0 0.0
    %599 = vmatpush1.msra.mxu0 %v110
    %600 = vmatprep.subr.mxu0 0.0
    %601 = vmatpush1.msra.mxu0 0.0
    %602 = vmatprep.subr.mxu0 0.0
    %603 = vmatpush1.msra.mxu0 0.0
    %604 = vmatprep.subr.mxu0 0.0
    %605 = vmatpush1.msra.mxu0 0.0
    %606 = vmatprep.subr.mxu0 0.0
    %607 = vmatpush1.msra.mxu0 0.0
    %608 = vmatprep.subr.mxu0 0.0
    %609 = vmatpush1.msra.mxu0 0.0
    %610 = vmatprep.subr.mxu0 0.0
    %611 = vmatpush1.msra.mxu0 0.0
    %612 = vmatprep.subr.mxu0 0.0
    %613 = vmatpush1.msra.mxu0 0.0
    %614 = vmatprep.subr.mxu0 0.0
    %615 = vmatpush1.msra.mxu0 0.0
    %616 = vmatprep.subr.mxu0 0.0
    %617 = vmatpush1.msra.mxu0 0.0
    %618 = vmatprep.subr.mxu0 0.0
    %619 = vmatpush1.msra.mxu0 0.0
    %620 = vmatprep.subr.mxu0 0.0
    %621 = vmatpush1.msra.mxu0 0.0
    %622 = vmatprep.subr.mxu0 0.0
    %623 = vmatpush1.msra.mxu0 0.0
    %624 = vmatprep.subr.mxu0 0.0
    %625 = vmatpush1.msra.mxu0 0.0
    %626 = vmatprep.subr.mxu0 0.0
    %627 = vmatpush1.msra.mxu0 0.0
    %628 = vmatprep.subr.mxu0 0.0
    %629 = vmatpush1.msra.mxu0 0.0
    %630 = vmatprep.subr.mxu0 0.0
    %631 = vmatpush1.msra.mxu0 0.0
    %632 = vmatprep.subr.mxu0 0.0
    %633 = vmatpush1.msra.mxu0 0.0
    %634 = vmatprep.subr.mxu0 0.0
    %635 = vmatpush1.msra.mxu0 0.0
    %636 = vmatprep.subr.mxu0 0.0
    %637 = vmatpush1.msra.mxu0 0.0
    %638 = vmatprep.subr.mxu0 0.0
    %639 = vmatpush1.msra.mxu0 0.0
    %640 = vmatprep.subr.mxu0 0.0
    %641 = vmatpush1.msra.mxu0 0.0
    %642 = vmatprep.subr.mxu0 0.0
    %643 = vmatpush1.msra.mxu0 0.0
    %644 = vmatprep.subr.mxu0 0.0
    %645 = vmatpush1.msra.mxu0 0.0
    %646 = vmatprep.subr.mxu0 0.0
    %647 = vmatpush1.msra.mxu0 0.0
    %648 = vmatprep.subr.mxu0 0.0
    %649 = vmatpush1.msra.mxu0 0.0
    %650 = vmatprep.subr.mxu0 0.0
    %651 = vmatpush1.msra.mxu0 0.0
    %652 = vmatprep.subr.mxu0 0.0
    %653 = vmatpush1.msra.mxu0 0.0
    %654 = vmatprep.subr.mxu0 0.0
    %655 = vmatpush1.msra.mxu0 0.0
    %656 = vmatprep.mubr.f32.mxu0 0.0
    %657 = vmatmul.mubr.f32.gmra.mrb[0].mxu0 %v306
    %v658 = vpop.f32.mrb[0].mxu0
    %v659 = vadd.f32 %v294, %v658
    %v660 = vpop.f32.mrb[0].mxu0
    %661 = vdwg.mxu0
    %v662 = vadd.f32 %v375, %v517
    %v663 = vadd.f32 %v377, %v519
    %v664 = vadd.f32 %v446, %v588
    %v665 = vadd.f32 %v448, %v590
    %v666 = vxor.u32 %v375, 2147483648
    %v667 = vxor.u32 %v377, 2147483648
    %v668 = vxor.u32 %v446, 2147483648
    %v669 = vmul.f32 %v666, 1.442695
    %v670 = vpow.pop %v669
    %v671 = vmul.f32 %v667, 1.442695
    %v672 = vpow.pop %v671
    %v673 = vmul.f32 %v668, 1.442695
    %v674 = vpow.pop %v673
    %v675 = vadd.f32 %v670, 1.0
    %v676 = vadd.f32 %v672, 1.0
    %v677 = vadd.f32 %v674, 1.0
    %v678 = vrcp.pop %v675
    %v679 = vmul.f32 1.0, %v678
    %v680 = vrcp.pop %v676
    %v681 = vmul.f32 1.0, %v680
    %v682 = vrcp.pop %v677
    %v683 = vmul.f32 1.0, %v682
    %v684 = vtanh.pop %v448
    %v685 = vmul.f32 %v681, 0.0
    %v686 = vmul.f32 %v679, %v684
    %v687 = vadd.f32 %v685, %v686
    %v688 = vtanh.pop %v687
    %v689 = vmul.f32 %v683, %v688
    %690 = vmatprep.subr.mxu0 %v112
    %691 = vmatpush1.msra.mxu0 %v111
    %692 = vmatprep.subr.mxu0 %v117
    %693 = vmatpush1.msra.mxu0 %v116
    %694 = vmatprep.subr.mxu0 %v122
    %695 = vmatpush1.msra.mxu0 %v121
    %696 = vmatprep.subr.mxu0 %v127
    %697 = vmatpush1.msra.mxu0 %v126
    %698 = vmatprep.subr.mxu0 %v132
    %699 = vmatpush1.msra.mxu0 %v131
    %700 = vmatprep.subr.mxu0 %v137
    %701 = vmatpush1.msra.mxu0 %v136
    %702 = vmatprep.subr.mxu0 %v142
    %703 = vmatpush1.msra.mxu0 %v141
    %704 = vmatprep.subr.mxu0 %v147
    %705 = vmatpush1.msra.mxu0 %v146
    %706 = vmatprep.subr.mxu0 %v152
    %707 = vmatpush1.msra.mxu0 %v151
    %708 = vmatprep.subr.mxu0 %v157
    %709 = vmatpush1.msra.mxu0 %v156
    %710 = vmatprep.subr.mxu0 %v162
    %711 = vmatpush1.msra.mxu0 %v161
    %712 = vmatprep.subr.mxu0 %v167
    %713 = vmatpush1.msra.mxu0 %v166
    %714 = vmatprep.subr.mxu0 %v172
    %715 = vmatpush1.msra.mxu0 %v171
    %716 = vmatprep.subr.mxu0 %v177
    %717 = vmatpush1.msra.mxu0 %v176
    %718 = vmatprep.subr.mxu0 %v182
    %719 = vmatpush1.msra.mxu0 %v181
    %720 = vmatprep.subr.mxu0 %v187
    %721 = vmatpush1.msra.mxu0 %v186
    %722 = vmatprep.subr.mxu0 0.0
    %723 = vmatpush1.msra.mxu0 0.0
    %724 = vmatprep.subr.mxu0 0.0
    %725 = vmatpush1.msra.mxu0 0.0
    %726 = vmatprep.subr.mxu0 0.0
    %727 = vmatpush1.msra.mxu0 0.0
    %728 = vmatprep.subr.mxu0 0.0
    %729 = vmatpush1.msra.mxu0 0.0
    %730 = vmatprep.subr.mxu0 0.0
    %731 = vmatpush1.msra.mxu0 0.0
    %732 = vmatprep.subr.mxu0 0.0
    %733 = vmatpush1.msra.mxu0 0.0
    %734 = vmatprep.subr.mxu0 0.0
    %735 = vmatpush1.msra.mxu0 0.0
    %736 = vmatprep.subr.mxu0 0.0
    %737 = vmatpush1.msra.mxu0 0.0
    %738 = vmatprep.subr.mxu0 0.0
    %739 = vmatpush1.msra.mxu0 0.0
    %740 = vmatprep.subr.mxu0 0.0
    %741 = vmatpush1.msra.mxu0 0.0
    %742 = vmatprep.subr.mxu0 0.0
    %743 = vmatpush1.msra.mxu0 0.0
    %744 = vmatprep.subr.mxu0 0.0
    %745 = vmatpush1.msra.mxu0 0.0
    %746 = vmatprep.subr.mxu0 0.0
    %747 = vmatpush1.msra.mxu0 0.0
    %748 = vmatprep.subr.mxu0 0.0
    %749 = vmatpush1.msra.mxu0 0.0
    %750 = vmatprep.subr.mxu0 0.0
    %751 = vmatpush1.msra.mxu0 0.0
    %752 = vmatprep.subr.mxu0 0.0
    %753 = vmatpush1.msra.mxu0 0.0
    %754 = vmatprep.mubr.f32.mxu0 0.0
    %755 = vmatmul.mubr.f32.gmra.mrb[0].mxu0 %v689
    %v756 = vpop.f32.mrb[0].mxu0
    %v757 = vadd.f32 0.0, %v756
    %v758 = vpop.f32.mrb[0].mxu0
    %v759 = vadd.f32 0.0, %v758
    %760 = vdwg.mxu0
    %761 = vmatprep.subr.mxu0 %v114
    %762 = vmatpush1.msra.mxu0 %v113
    %763 = vmatprep.subr.mxu0 %v119
    %764 = vmatpush1.msra.mxu0 %v118
    %765 = vmatprep.subr.mxu0 %v124
    %766 = vmatpush1.msra.mxu0 %v123
    %767 = vmatprep.subr.mxu0 %v129
    %768 = vmatpush1.msra.mxu0 %v128
    %769 = vmatprep.subr.mxu0 %v134
    %770 = vmatpush1.msra.mxu0 %v133
    %771 = vmatprep.subr.mxu0 %v139
    %772 = vmatpush1.msra.mxu0 %v138
    %773 = vmatprep.subr.mxu0 %v144
    %774 = vmatpush1.msra.mxu0 %v143
    %775 = vmatprep.subr.mxu0 %v149
    %776 = vmatpush1.msra.mxu0 %v148
    %777 = vmatprep.subr.mxu0 %v154
    %778 = vmatpush1.msra.mxu0 %v153
    %779 = vmatprep.subr.mxu0 %v159
    %780 = vmatpush1.msra.mxu0 %v158
    %781 = vmatprep.subr.mxu0 %v164
    %782 = vmatpush1.msra.mxu0 %v163
    %783 = vmatprep.subr.mxu0 %v169
    %784 = vmatpush1.msra.mxu0 %v168
    %785 = vmatprep.subr.mxu0 %v174
    %786 = vmatpush1.msra.mxu0 %v173
    %787 = vmatprep.subr.mxu0 %v179
    %788 = vmatpush1.msra.mxu0 %v178
    %789 = vmatprep.subr.mxu0 %v184
    %790 = vmatpush1.msra.mxu0 %v183
    %791 = vmatprep.subr.mxu0 %v189
    %792 = vmatpush1.msra.mxu0 %v188
    %793 = vmatprep.subr.mxu0 0.0
    %794 = vmatpush1.msra.mxu0 0.0
    %795 = vmatprep.subr.mxu0 0.0
    %796 = vmatpush1.msra.mxu0 0.0
    %797 = vmatprep.subr.mxu0 0.0
    %798 = vmatpush1.msra.mxu0 0.0
    %799 = vmatprep.subr.mxu0 0.0
    %800 = vmatpush1.msra.mxu0 0.0
    %801 = vmatprep.subr.mxu0 0.0
    %802 = vmatpush1.msra.mxu0 0.0
    %803 = vmatprep.subr.mxu0 0.0
    %804 = vmatpush1.msra.mxu0 0.0
    %805 = vmatprep.subr.mxu0 0.0
    %806 = vmatpush1.msra.mxu0 0.0
    %807 = vmatprep.subr.mxu0 0.0
    %808 = vmatpush1.msra.mxu0 0.0
    %809 = vmatprep.subr.mxu0 0.0
    %810 = vmatpush1.msra.mxu0 0.0
    %811 = vmatprep.subr.mxu0 0.0
    %812 = vmatpush1.msra.mxu0 0.0
    %813 = vmatprep.subr.mxu0 0.0
    %814 = vmatpush1.msra.mxu0 0.0
    %815 = vmatprep.subr.mxu0 0.0
    %816 = vmatpush1.msra.mxu0 0.0
    %817 = vmatprep.subr.mxu0 0.0
    %818 = vmatpush1.msra.mxu0 0.0
    %819 = vmatprep.subr.mxu0 0.0
    %820 = vmatpush1.msra.mxu0 0.0
    %821 = vmatprep.subr.mxu0 0.0
    %822 = vmatpush1.msra.mxu0 0.0
    %823 = vmatprep.subr.mxu0 0.0
    %824 = vmatpush1.msra.mxu0 0.0
    %825 = vmatprep.mubr.f32.mxu0 0.0
    %826 = vmatmul.mubr.f32.gmra.mrb[0].mxu0 %v689
    %v827 = vpop.f32.mrb[0].mxu0
    %v828 = vadd.f32 0.0, %v827
    %v829 = vpop.f32.mrb[0].mxu0
    %v830 = vadd.f32 0.0, %v829
    %831 = vdwg.mxu0
    %832 = vmatprep.subr.mxu0 0.0
    %833 = vmatpush1.msra.mxu0 %v115
    %834 = vmatprep.subr.mxu0 0.0
    %835 = vmatpush1.msra.mxu0 %v120
    %836 = vmatprep.subr.mxu0 0.0
    %837 = vmatpush1.msra.mxu0 %v125
    %838 = vmatprep.subr.mxu0 0.0
    %839 = vmatpush1.msra.mxu0 %v130
    %840 = vmatprep.subr.mxu0 0.0
    %841 = vmatpush1.msra.mxu0 %v135
    %842 = vmatprep.subr.mxu0 0.0
    %843 = vmatpush1.msra.mxu0 %v140
    %844 = vmatprep.subr.mxu0 0.0
    %845 = vmatpush1.msra.mxu0 %v145
    %846 = vmatprep.subr.mxu0 0.0
    %847 = vmatpush1.msra.mxu0 %v150
    %848 = vmatprep.subr.mxu0 0.0
    %849 = vmatpush1.msra.mxu0 %v155
    %850 = vmatprep.subr.mxu0 0.0
    %851 = vmatpush1.msra.mxu0 %v160
    %852 = vmatprep.subr.mxu0 0.0
    %853 = vmatpush1.msra.mxu0 %v165
    %854 = vmatprep.subr.mxu0 0.0
    %855 = vmatpush1.msra.mxu0 %v170
    %856 = vmatprep.subr.mxu0 0.0
    %857 = vmatpush1.msra.mxu0 %v175
    %858 = vmatprep.subr.mxu0 0.0
    %859 = vmatpush1.msra.mxu0 %v180
    %860 = vmatprep.subr.mxu0 0.0
    %861 = vmatpush1.msra.mxu0 %v185
    %862 = vmatprep.subr.mxu0 0.0
    %863 = vmatpush1.msra.mxu0 %v190
    %864 = vmatprep.subr.mxu0 0.0
    %865 = vmatpush1.msra.mxu0 0.0
    %866 = vmatprep.subr.mxu0 0.0
    %867 = vmatpush1.msra.mxu0 0.0
    %868 = vmatprep.subr.mxu0 0.0
    %869 = vmatpush1.msra.mxu0 0.0
    %870 = vmatprep.subr.mxu0 0.0
    %871 = vmatpush1.msra.mxu0 0.0
    %872 = vmatprep.subr.mxu0 0.0
    %873 = vmatpush1.msra.mxu0 0.0
    %874 = vmatprep.subr.mxu0 0.0
    %875 = vmatpush1.msra.mxu0 0.0
    %876 = vmatprep.subr.mxu0 0.0
    %877 = vmatpush1.msra.mxu0 0.0
    %878 = vmatprep.subr.mxu0 0.0
    %879 = vmatpush1.msra.mxu0 0.0
    %880 = vmatprep.subr.mxu0 0.0
    %881 = vmatpush1.msra.mxu0 0.0
    %882 = vmatprep.subr.mxu0 0.0
    %883 = vmatpush1.msra.mxu0 0.0
    %884 = vmatprep.subr.mxu0 0.0
    %885 = vmatpush1.msra.mxu0 0.0
    %886 = vmatprep.subr.mxu0 0.0
    %887 = vmatpush1.msra.mxu0 0.0
    %888 = vmatprep.subr.mxu0 0.0
    %889 = vmatpush1.msra.mxu0 0.0
    %890 = vmatprep.subr.mxu0 0.0
    %891 = vmatpush1.msra.mxu0 0.0
    %892 = vmatprep.subr.mxu0 0.0
    %893 = vmatpush1.msra.mxu0 0.0
    %894 = vmatprep.subr.mxu0 0.0
    %895 = vmatpush1.msra.mxu0 0.0
    %896 = vmatprep.mubr.f32.mxu0 0.0
    %897 = vmatmul.mubr.f32.gmra.mrb[0].mxu0 %v689
    %v898 = vpop.f32.mrb[0].mxu0
    %v899 = vadd.f32 0.0, %v898
    %v900 = vpop.f32.mrb[0].mxu0
    %901 = vdwg.mxu0
    %v902 = vadd.f32 %v659, %v899
    %vm903 = vcmask 1041408
    %v904 = vsel %vm903, %v902, -inf
    %905 = vmax.xlane.f32.xlu0 %v904
    %v906 = vpop.xlane.xlu0 %905
    %v907 = vsub.f32 %v902, %v906
    %v908 = vmul.f32 %v907, 1.442695
    %v909 = vpow.pop %v908
    %v910 = vsel %vm903, %v909, 0.0
    %911 = vadd.xlane.f32.xlu0 %v910
    %v912 = vpop.xlane.xlu0 %911
    %v913 = vrcp.pop %v912
    %v914 = vmul.f32 %v909, %v913
    %v915 = vadd.f32 %v662, %v757
    %v916 = vadd.f32 %v663, %v759
    %v917 = vadd.f32 %v664, %v828
    %v918 = vadd.f32 %v665, %v830
    %919 = vmatprep.subr.mxu0 %v192
    %920 = vmatpush1.msra.mxu0 %v191
    %921 = vmatprep.subr.mxu0 %v196
    %922 = vmatpush1.msra.mxu0 %v195
    %923 = vmatprep.subr.mxu0 %v200
    %924 = vmatpush1.msra.mxu0 %v199
    %925 = vmatprep.subr.mxu0 %v204
    %926 = vmatpush1.msra.mxu0 %v203
    %927 = vmatprep.subr.mxu0 %v208
    %928 = vmatpush1.msra.mxu0 %v207
    %929 = vmatprep.subr.mxu0 %v212
    %930 = vmatpush1.msra.mxu0 %v211
    %931 = vmatprep.subr.mxu0 %v216
    %932 = vmatpush1.msra.mxu0 %v215
    %933 = vmatprep.subr.mxu0 %v220
    %934 = vmatpush1.msra.mxu0 %v219
    %935 = vmatprep.subr.mxu0 %v224
    %936 = vmatpush1.msra.mxu0 %v223
    %937 = vmatprep.subr.mxu0 %v228
    %938 = vmatpush1.msra.mxu0 %v227
    %939 = vmatprep.subr.mxu0 %v232
    %940 = vmatpush1.msra.mxu0 %v231
    %941 = vmatprep.subr.mxu0 %v236
    %942 = vmatpush1.msra.mxu0 %v235
    %943 = vmatprep.subr.mxu0 %v240
    %944 = vmatpush1.msra.mxu0 %v239
    %945 = vmatprep.subr.mxu0 %v244
    %946 = vmatpush1.msra.mxu0 %v243
    %947 = vmatprep.subr.mxu0 %v248
    %948 = vmatpush1.msra.mxu0 %v247
    %949 = vmatprep.subr.mxu0 %v252
    %950 = vmatpush1.msra.mxu0 %v251
    %951 = vmatprep.subr.mxu0 0.0
    %952 = vmatpush1.msra.mxu0 0.0
    %953 = vmatprep.subr.mxu0 0.0
    %954 = vmatpush1.msra.mxu0 0.0
    %955 = vmatprep.subr.mxu0 0.0
    %956 = vmatpush1.msra.mxu0 0.0
    %957 = vmatprep.subr.mxu0 0.0
    %958 = vmatpush1.msra.mxu0 0.0
    %959 = vmatprep.subr.mxu0 0.0
    %960 = vmatpush1.msra.mxu0 0.0
    %961 = vmatprep.subr.mxu0 0.0
    %962 = vmatpush1.msra.mxu0 0.0
    %963 = vmatprep.subr.mxu0 0.0
    %964 = vmatpush1.msra.mxu0 0.0
    %965 = vmatprep.subr.mxu0 0.0
    %966 = vmatpush1.msra.mxu0 0.0
    %967 = vmatprep.subr.mxu0 0.0
    %968 = vmatpush1.msra.mxu0 0.0
    %969 = vmatprep.subr.mxu0 0.0
    %970 = vmatpush1.msra.mxu0 0.0
    %971 = vmatprep.subr.mxu0 0.0
    %972 = vmatpush1.msra.mxu0 0.0
    %973 = vmatprep.subr.mxu0 0.0
    %974 = vmatpush1.msra.mxu0 0.0
    %975 = vmatprep.subr.mxu0 0.0
    %976 = vmatpush1.msra.mxu0 0.0
    %977 = vmatprep.subr.mxu0 0.0
    %978 = vmatpush1.msra.mxu0 0.0
    %979 = vmatprep.subr.mxu0 0.0
    %980 = vmatpush1.msra.mxu0 0.0
    %981 = vmatprep.subr.mxu0 0.0
    %982 = vmatpush1.msra.mxu0 0.0
    %983 = vmatprep.mubr.f32.mxu0 0.0
    %984 = vmatmul.mubr.f32.gmra.mrb[0].mxu0 %v914
    %v985 = vpop.f32.mrb[0].mxu0
    %v986 = vadd.f32 0.0, %v985
    %v987 = vpop.f32.mrb[0].mxu0
    %v988 = vadd.f32 0.0, %v987
    %989 = vdwg.mxu0
    %990 = vmatprep.subr.mxu0 %v194
    %991 = vmatpush1.msra.mxu0 %v193
    %992 = vmatprep.subr.mxu0 %v198
    %993 = vmatpush1.msra.mxu0 %v197
    %994 = vmatprep.subr.mxu0 %v202
    %995 = vmatpush1.msra.mxu0 %v201
    %996 = vmatprep.subr.mxu0 %v206
    %997 = vmatpush1.msra.mxu0 %v205
    %998 = vmatprep.subr.mxu0 %v210
    %999 = vmatpush1.msra.mxu0 %v209
    %1000 = vmatprep.subr.mxu0 %v214
    %1001 = vmatpush1.msra.mxu0 %v213
    %1002 = vmatprep.subr.mxu0 %v218
    %1003 = vmatpush1.msra.mxu0 %v217
    %1004 = vmatprep.subr.mxu0 %v222
    %1005 = vmatpush1.msra.mxu0 %v221
    %1006 = vmatprep.subr.mxu0 %v226
    %1007 = vmatpush1.msra.mxu0 %v225
    %1008 = vmatprep.subr.mxu0 %v230
    %1009 = vmatpush1.msra.mxu0 %v229
    %1010 = vmatprep.subr.mxu0 %v234
    %1011 = vmatpush1.msra.mxu0 %v233
    %1012 = vmatprep.subr.mxu0 %v238
    %1013 = vmatpush1.msra.mxu0 %v237
    %1014 = vmatprep.subr.mxu0 %v242
    %1015 = vmatpush1.msra.mxu0 %v241
    %1016 = vmatprep.subr.mxu0 %v246
    %1017 = vmatpush1.msra.mxu0 %v245
    %1018 = vmatprep.subr.mxu0 %v250
    %1019 = vmatpush1.msra.mxu0 %v249
    %1020 = vmatprep.subr.mxu0 %v254
    %1021 = vmatpush1.msra.mxu0 %v253
    %1022 = vmatprep.subr.mxu0 0.0
    %1023 = vmatpush1.msra.mxu0 0.0
    %1024 = vmatprep.subr.mxu0 0.0
    %1025 = vmatpush1.msra.mxu0 0.0
    %1026 = vmatprep.subr.mxu0 0.0
    %1027 = vmatpush1.msra.mxu0 0.0
    %1028 = vmatprep.subr.mxu0 0.0
    %1029 = vmatpush1.msra.mxu0 0.0
    %1030 = vmatprep.subr.mxu0 0.0
    %1031 = vmatpush1.msra.mxu0 0.0
    %1032 = vmatprep.subr.mxu0 0.0
    %1033 = vmatpush1.msra.mxu0 0.0
    %1034 = vmatprep.subr.mxu0 0.0
    %1035 = vmatpush1.msra.mxu0 0.0
    %1036 = vmatprep.subr.mxu0 0.0
    %1037 = vmatpush1.msra.mxu0 0.0
    %1038 = vmatprep.subr.mxu0 0.0
    %1039 = vmatpush1.msra.mxu0 0.0
    %1040 = vmatprep.subr.mxu0 0.0
    %1041 = vmatpush1.msra.mxu0 0.0
    %1042 = vmatprep.subr.mxu0 0.0
    %1043 = vmatpush1.msra.mxu0 0.0
    %1044 = vmatprep.subr.mxu0 0.0
    %1045 = vmatpush1.msra.mxu0 0.0
    %1046 = vmatprep.subr.mxu0 0.0
    %1047 = vmatpush1.msra.mxu0 0.0
    %1048 = vmatprep.subr.mxu0 0.0
    %1049 = vmatpush1.msra.mxu0 0.0
    %1050 = vmatprep.subr.mxu0 0.0
    %1051 = vmatpush1.msra.mxu0 0.0
    %1052 = vmatprep.subr.mxu0 0.0
    %1053 = vmatpush1.msra.mxu0 0.0
    %1054 = vmatprep.mubr.f32.mxu0 0.0
    %1055 = vmatmul.mubr.f32.gmra.mrb[0].mxu0 %v914
    %v1056 = vpop.f32.mrb[0].mxu0
    %v1057 = vadd.f32 0.0, %v1056
    %v1058 = vpop.f32.mrb[0].mxu0
    %v1059 = vadd.f32 0.0, %v1058
    %1060 = vdwg.mxu0
    %v1061 = vadd.f32 %v915, %v986
    %v1062 = vadd.f32 %v916, %v988
    %v1063 = vadd.f32 %v917, %v1057
    %v1064 = vadd.f32 %v918, %v1059
    %v1065 = vxor.u32 %v1061, 2147483648
    %v1066 = vxor.u32 %v1062, 2147483648
    %v1067 = vxor.u32 %v1063, 2147483648
    %v1068 = vmul.f32 %v1065, 1.442695
    %v1069 = vpow.pop %v1068
    %v1070 = vmul.f32 %v1066, 1.442695
    %v1071 = vpow.pop %v1070
    %v1072 = vmul.f32 %v1067, 1.442695
    %v1073 = vpow.pop %v1072
    %v1074 = vadd.f32 %v1069, 1.0
    %v1075 = vadd.f32 %v1071, 1.0
    %v1076 = vadd.f32 %v1073, 1.0
    %v1077 = vrcp.pop %v1074
    %v1078 = vmul.f32 1.0, %v1077
    %v1079 = vrcp.pop %v1075
    %v1080 = vmul.f32 1.0, %v1079
    %v1081 = vrcp.pop %v1076
    %v1082 = vmul.f32 1.0, %v1081
    %v1083 = vtanh.pop %v1064
    %v1084 = vmul.f32 %v1080, %v687
    %v1085 = vmul.f32 %v1078, %v1083
    %v1086 = vadd.f32 %v1084, %v1085
    %v1087 = vtanh.pop %v1086
    %v1088 = vmul.f32 %v1082, %v1087
    %1089 = vmatprep.subr.mxu0 %v112
    %1090 = vmatpush1.msra.mxu0 %v111
    %1091 = vmatprep.subr.mxu0 %v117
    %1092 = vmatpush1.msra.mxu0 %v116
    %1093 = vmatprep.subr.mxu0 %v122
    %1094 = vmatpush1.msra.mxu0 %v121
    %1095 = vmatprep.subr.mxu0 %v127
    %1096 = vmatpush1.msra.mxu0 %v126
    %1097 = vmatprep.subr.mxu0 %v132
    %1098 = vmatpush1.msra.mxu0 %v131
    %1099 = vmatprep.subr.mxu0 %v137
    %1100 = vmatpush1.msra.mxu0 %v136
    %1101 = vmatprep.subr.mxu0 %v142
    %1102 = vmatpush1.msra.mxu0 %v141
    %1103 = vmatprep.subr.mxu0 %v147
    %1104 = vmatpush1.msra.mxu0 %v146
    %1105 = vmatprep.subr.mxu0 %v152
    %1106 = vmatpush1.msra.mxu0 %v151
    %1107 = vmatprep.subr.mxu0 %v157
    %1108 = vmatpush1.msra.mxu0 %v156
    %1109 = vmatprep.subr.mxu0 %v162
    %1110 = vmatpush1.msra.mxu0 %v161
    %1111 = vmatprep.subr.mxu0 %v167
    %1112 = vmatpush1.msra.mxu0 %v166
    %1113 = vmatprep.subr.mxu0 %v172
    %1114 = vmatpush1.msra.mxu0 %v171
    %1115 = vmatprep.subr.mxu0 %v177
    %1116 = vmatpush1.msra.mxu0 %v176
    %1117 = vmatprep.subr.mxu0 %v182
    %1118 = vmatpush1.msra.mxu0 %v181
    %1119 = vmatprep.subr.mxu0 %v187
    %1120 = vmatpush1.msra.mxu0 %v186
    %1121 = vmatprep.subr.mxu0 0.0
    %1122 = vmatpush1.msra.mxu0 0.0
    %1123 = vmatprep.subr.mxu0 0.0
    %1124 = vmatpush1.msra.mxu0 0.0
    %1125 = vmatprep.subr.mxu0 0.0
    %1126 = vmatpush1.msra.mxu0 0.0
    %1127 = vmatprep.subr.mxu0 0.0
    %1128 = vmatpush1.msra.mxu0 0.0
    %1129 = vmatprep.subr.mxu0 0.0
    %1130 = vmatpush1.msra.mxu0 0.0
    %1131 = vmatprep.subr.mxu0 0.0
    %1132 = vmatpush1.msra.mxu0 0.0
    %1133 = vmatprep.subr.mxu0 0.0
    %1134 = vmatpush1.msra.mxu0 0.0
    %1135 = vmatprep.subr.mxu0 0.0
    %1136 = vmatpush1.msra.mxu0 0.0
    %1137 = vmatprep.subr.mxu0 0.0
    %1138 = vmatpush1.msra.mxu0 0.0
    %1139 = vmatprep.subr.mxu0 0.0
    %1140 = vmatpush1.msra.mxu0 0.0
    %1141 = vmatprep.subr.mxu0 0.0
    %1142 = vmatpush1.msra.mxu0 0.0
    %1143 = vmatprep.subr.mxu0 0.0
    %1144 = vmatpush1.msra.mxu0 0.0
    %1145 = vmatprep.subr.mxu0 0.0
    %1146 = vmatpush1.msra.mxu0 0.0
    %1147 = vmatprep.subr.mxu0 0.0
    %1148 = vmatpush1.msra.mxu0 0.0
    %1149 = vmatprep.subr.mxu0 0.0
    %1150 = vmatpush1.msra.mxu0 0.0
    %1151 = vmatprep.subr.mxu0 0.0
    %1152 = vmatpush1.msra.mxu0 0.0
    %1153 = vmatprep.mubr.f32.mxu0 0.0
    %1154 = vmatmul.mubr.f32.gmra.mrb[0].mxu0 %v1088
    %v1155 = vpop.f32.mrb[0].mxu0
    %v1156 = vadd.f32 0.0, %v1155
    %v1157 = vpop.f32.mrb[0].mxu0
    %v1158 = vadd.f32 0.0, %v1157
    %1159 = vdwg.mxu0
    %1160 = vmatprep.subr.mxu0 %v114
    %1161 = vmatpush1.msra.mxu0 %v113
    %1162 = vmatprep.subr.mxu0 %v119
    %1163 = vmatpush1.msra.mxu0 %v118
    %1164 = vmatprep.subr.mxu0 %v124
    %1165 = vmatpush1.msra.mxu0 %v123
    %1166 = vmatprep.subr.mxu0 %v129
    %1167 = vmatpush1.msra.mxu0 %v128
    %1168 = vmatprep.subr.mxu0 %v134
    %1169 = vmatpush1.msra.mxu0 %v133
    %1170 = vmatprep.subr.mxu0 %v139
    %1171 = vmatpush1.msra.mxu0 %v138
    %1172 = vmatprep.subr.mxu0 %v144
    %1173 = vmatpush1.msra.mxu0 %v143
    %1174 = vmatprep.subr.mxu0 %v149
    %1175 = vmatpush1.msra.mxu0 %v148
    %1176 = vmatprep.subr.mxu0 %v154
    %1177 = vmatpush1.msra.mxu0 %v153
    %1178 = vmatprep.subr.mxu0 %v159
    %1179 = vmatpush1.msra.mxu0 %v158
    %1180 = vmatprep.subr.mxu0 %v164
    %1181 = vmatpush1.msra.mxu0 %v163
    %1182 = vmatprep.subr.mxu0 %v169
    %1183 = vmatpush1.msra.mxu0 %v168
    %1184 = vmatprep.subr.mxu0 %v174
    %1185 = vmatpush1.msra.mxu0 %v173
    %1186 = vmatprep.subr.mxu0 %v179
    %1187 = vmatpush1.msra.mxu0 %v178
    %1188 = vmatprep.subr.mxu0 %v184
    %1189 = vmatpush1.msra.mxu0 %v183
    %1190 = vmatprep.subr.mxu0 %v189
    %1191 = vmatpush1.msra.mxu0 %v188
    %1192 = vmatprep.subr.mxu0 0.0
    %1193 = vmatpush1.msra.mxu0 0.0
    %1194 = vmatprep.subr.mxu0 0.0
    %1195 = vmatpush1.msra.mxu0 0.0
    %1196 = vmatprep.subr.mxu0 0.0
    %1197 = vmatpush1.msra.mxu0 0.0
    %1198 = vmatprep.subr.mxu0 0.0
    %1199 = vmatpush1.msra.mxu0 0.0
    %1200 = vmatprep.subr.mxu0 0.0
    %1201 = vmatpush1.msra.mxu0 0.0
    %1202 = vmatprep.subr.mxu0 0.0
    %1203 = vmatpush1.msra.mxu0 0.0
    %1204 = vmatprep.subr.mxu0 0.0
    %1205 = vmatpush1.msra.mxu0 0.0
    %1206 = vmatprep.subr.mxu0 0.0
    %1207 = vmatpush1.msra.mxu0 0.0
    %1208 = vmatprep.subr.mxu0 0.0
    %1209 = vmatpush1.msra.mxu0 0.0
    %1210 = vmatprep.subr.mxu0 0.0
    %1211 = vmatpush1.msra.mxu0 0.0
    %1212 = vmatprep.subr.mxu0 0.0
    %1213 = vmatpush1.msra.mxu0 0.0
    %1214 = vmatprep.subr.mxu0 0.0
    %1215 = vmatpush1.msra.mxu0 0.0
    %1216 = vmatprep.subr.mxu0 0.0
    %1217 = vmatpush1.msra.mxu0 0.0
    %1218 = vmatprep.subr.mxu0 0.0
    %1219 = vmatpush1.msra.mxu0 0.0
    %1220 = vmatprep.subr.mxu0 0.0
    %1221 = vmatpush1.msra.mxu0 0.0
    %1222 = vmatprep.subr.mxu0 0.0
    %1223 = vmatpush1.msra.mxu0 0.0
    %1224 = vmatprep.mubr.f32.mxu0 0.0
    %1225 = vmatmul.mubr.f32.gmra.mrb[0].mxu0 %v1088
    %v1226 = vpop.f32.mrb[0].mxu0
    %v1227 = vadd.f32 0.0, %v1226
    %v1228 = vpop.f32.mrb[0].mxu0
    %v1229 = vadd.f32 0.0, %v1228
    %1230 = vdwg.mxu0
    %1231 = vmatprep.subr.mxu0 0.0
    %1232 = vmatpush1.msra.mxu0 %v115
    %1233 = vmatprep.subr.mxu0 0.0
    %1234 = vmatpush1.msra.mxu0 %v120
    %1235 = vmatprep.subr.mxu0 0.0
    %1236 = vmatpush1.msra.mxu0 %v125
    %1237 = vmatprep.subr.mxu0 0.0
    %1238 = vmatpush1.msra.mxu0 %v130
    %1239 = vmatprep.subr.mxu0 0.0
    %1240 = vmatpush1.msra.mxu0 %v135
    %1241 = vmatprep.subr.mxu0 0.0
    %1242 = vmatpush1.msra.mxu0 %v140
    %1243 = vmatprep.subr.mxu0 0.0
    %1244 = vmatpush1.msra.mxu0 %v145
    %1245 = vmatprep.subr.mxu0 0.0
    %1246 = vmatpush1.msra.mxu0 %v150
    %1247 = vmatprep.subr.mxu0 0.0
    %1248 = vmatpush1.msra.mxu0 %v155
    %1249 = vmatprep.subr.mxu0 0.0
    %1250 = vmatpush1.msra.mxu0 %v160
    %1251 = vmatprep.subr.mxu0 0.0
    %1252 = vmatpush1.msra.mxu0 %v165
    %1253 = vmatprep.subr.mxu0 0.0
    %1254 = vmatpush1.msra.mxu0 %v170
    %1255 = vmatprep.subr.mxu0 0.0
    %1256 = vmatpush1.msra.mxu0 %v175
    %1257 = vmatprep.subr.mxu0 0.0
    %1258 = vmatpush1.msra.mxu0 %v180
    %1259 = vmatprep.subr.mxu0 0.0
    %1260 = vmatpush1.msra.mxu0 %v185
    %1261 = vmatprep.subr.mxu0 0.0
    %1262 = vmatpush1.msra.mxu0 %v190
    %1263 = vmatprep.subr.mxu0 0.0
    %1264 = vmatpush1.msra.mxu0 0.0
    %1265 = vmatprep.subr.mxu0 0.0
    %1266 = vmatpush1.msra.mxu0 0.0
    %1267 = vmatprep.subr.mxu0 0.0
    %1268 = vmatpush1.msra.mxu0 0.0
    %1269 = vmatprep.subr.mxu0 0.0
    %1270 = vmatpush1.msra.mxu0 0.0
    %1271 = vmatprep.subr.mxu0 0.0
    %1272 = vmatpush1.msra.mxu0 0.0
    %1273 = vmatprep.subr.mxu0 0.0
    %1274 = vmatpush1.msra.mxu0 0.0
    %1275 = vmatprep.subr.mxu0 0.0
    %1276 = vmatpush1.msra.mxu0 0.0
    %1277 = vmatprep.subr.mxu0 0.0
    %1278 = vmatpush1.msra.mxu0 0.0
    %1279 = vmatprep.subr.mxu0 0.0
    %1280 = vmatpush1.msra.mxu0 0.0
    %1281 = vmatprep.subr.mxu0 0.0
    %1282 = vmatpush1.msra.mxu0 0.0
    %1283 = vmatprep.subr.mxu0 0.0
    %1284 = vmatpush1.msra.mxu0 0.0
    %1285 = vmatprep.subr.mxu0 0.0
    %1286 = vmatpush1.msra.mxu0 0.0
    %1287 = vmatprep.subr.mxu0 0.0
    %1288 = vmatpush1.msra.mxu0 0.0
    %1289 = vmatprep.subr.mxu0 0.0
    %1290 = vmatpush1.msra.mxu0 0.0
    %1291 = vmatprep.subr.mxu0 0.0
    %1292 = vmatpush1.msra.mxu0 0.0
    %1293 = vmatprep.subr.mxu0 0.0
    %1294 = vmatpush1.msra.mxu0 0.0
    %1295 = vmatprep.mubr.f32.mxu0 0.0
    %1296 = vmatmul.mubr.f32.gmra.mrb[0].mxu0 %v1088
    %v1297 = vpop.f32.mrb[0].mxu0
    %v1298 = vadd.f32 0.0, %v1297
    %v1299 = vpop.f32.mrb[0].mxu0
    %1300 = vdwg.mxu0
    %v1301 = vadd.f32 %v659, %v1298
    %v1302 = vsel %vm903, %v1301, -inf
    %1303 = vmax.xlane.f32.xlu0 %v1302
    %v1304 = vpop.xlane.xlu0 %1303
    %v1305 = vsub.f32 %v1301, %v1304
    %v1306 = vmul.f32 %v1305, 1.442695
    %v1307 = vpow.pop %v1306
    %v1308 = vsel %vm903, %v1307, 0.0
    %1309 = vadd.xlane.f32.xlu0 %v1308
    %v1310 = vpop.xlane.xlu0 %1309
    %v1311 = vrcp.pop %v1310
    %v1312 = vmul.f32 %v1307, %v1311
    %v1313 = vadd.f32 %v662, %v1156
    %v1314 = vadd.f32 %v663, %v1158
    %v1315 = vadd.f32 %v664, %v1227
    %v1316 = vadd.f32 %v665, %v1229
    %1317 = vmatprep.subr.mxu0 %v192
    %1318 = vmatpush1.msra.mxu0 %v191
    %1319 = vmatprep.subr.mxu0 %v196
    %1320 = vmatpush1.msra.mxu0 %v195
    %1321 = vmatprep.subr.mxu0 %v200
    %1322 = vmatpush1.msra.mxu0 %v199
    %1323 = vmatprep.subr.mxu0 %v204
    %1324 = vmatpush1.msra.mxu0 %v203
    %1325 = vmatprep.subr.mxu0 %v208
    %1326 = vmatpush1.msra.mxu0 %v207
    %1327 = vmatprep.subr.mxu0 %v212
    %1328 = vmatpush1.msra.mxu0 %v211
    %1329 = vmatprep.subr.mxu0 %v216
    %1330 = vmatpush1.msra.mxu0 %v215
    %1331 = vmatprep.subr.mxu0 %v220
    %1332 = vmatpush1.msra.mxu0 %v219
    %1333 = vmatprep.subr.mxu0 %v224
    %1334 = vmatpush1.msra.mxu0 %v223
    %1335 = vmatprep.subr.mxu0 %v228
    %1336 = vmatpush1.msra.mxu0 %v227
    %1337 = vmatprep.subr.mxu0 %v232
    %1338 = vmatpush1.msra.mxu0 %v231
    %1339 = vmatprep.subr.mxu0 %v236
    %1340 = vmatpush1.msra.mxu0 %v235
    %1341 = vmatprep.subr.mxu0 %v240
    %1342 = vmatpush1.msra.mxu0 %v239
    %1343 = vmatprep.subr.mxu0 %v244
    %1344 = vmatpush1.msra.mxu0 %v243
    %1345 = vmatprep.subr.mxu0 %v248
    %1346 = vmatpush1.msra.mxu0 %v247
    %1347 = vmatprep.subr.mxu0 %v252
    %1348 = vmatpush1.msra.mxu0 %v251
    %1349 = vmatprep.subr.mxu0 0.0
    %1350 = vmatpush1.msra.mxu0 0.0
    %1351 = vmatprep.subr.mxu0 0.0
    %1352 = vmatpush1.msra.mxu0 0.0
    %1353 = vmatprep.subr.mxu0 0.0
    %1354 = vmatpush1.msra.mxu0 0.0
    %1355 = vmatprep.subr.mxu0 0.0
    %1356 = vmatpush1.msra.mxu0 0.0
    %1357 = vmatprep.subr.mxu0 0.0
    %1358 = vmatpush1.msra.mxu0 0.0
    %1359 = vmatprep.subr.mxu0 0.0
    %1360 = vmatpush1.msra.mxu0 0.0
    %1361 = vmatprep.subr.mxu0 0.0
    %1362 = vmatpush1.msra.mxu0 0.0
    %1363 = vmatprep.subr.mxu0 0.0
    %1364 = vmatpush1.msra.mxu0 0.0
    %1365 = vmatprep.subr.mxu0 0.0
    %1366 = vmatpush1.msra.mxu0 0.0
    %1367 = vmatprep.subr.mxu0 0.0
    %1368 = vmatpush1.msra.mxu0 0.0
    %1369 = vmatprep.subr.mxu0 0.0
    %1370 = vmatpush1.msra.mxu0 0.0
    %1371 = vmatprep.subr.mxu0 0.0
    %1372 = vmatpush1.msra.mxu0 0.0
    %1373 = vmatprep.subr.mxu0 0.0
    %1374 = vmatpush1.msra.mxu0 0.0
    %1375 = vmatprep.subr.mxu0 0.0
    %1376 = vmatpush1.msra.mxu0 0.0
    %1377 = vmatprep.subr.mxu0 0.0
    %1378 = vmatpush1.msra.mxu0 0.0
    %1379 = vmatprep.subr.mxu0 0.0
    %1380 = vmatpush1.msra.mxu0 0.0
    %1381 = vmatprep.mubr.f32.mxu0 0.0
    %1382 = vmatmul.mubr.f32.gmra.mrb[0].mxu0 %v1312
    %v1383 = vpop.f32.mrb[0].mxu0
    %v1384 = vadd.f32 0.0, %v1383
    %v1385 = vpop.f32.mrb[0].mxu0
    %v1386 = vadd.f32 0.0, %v1385
    %1387 = vdwg.mxu0
    %1388 = vmatprep.subr.mxu0 %v194
    %1389 = vmatpush1.msra.mxu0 %v193
    %1390 = vmatprep.subr.mxu0 %v198
    %1391 = vmatpush1.msra.mxu0 %v197
    %1392 = vmatprep.subr.mxu0 %v202
    %1393 = vmatpush1.msra.mxu0 %v201
    %1394 = vmatprep.subr.mxu0 %v206
    %1395 = vmatpush1.msra.mxu0 %v205
    %1396 = vmatprep.subr.mxu0 %v210
    %1397 = vmatpush1.msra.mxu0 %v209
    %1398 = vmatprep.subr.mxu0 %v214
    %1399 = vmatpush1.msra.mxu0 %v213
    %1400 = vmatprep.subr.mxu0 %v218
    %1401 = vmatpush1.msra.mxu0 %v217
    %1402 = vmatprep.subr.mxu0 %v222
    %1403 = vmatpush1.msra.mxu0 %v221
    %1404 = vmatprep.subr.mxu0 %v226
    %1405 = vmatpush1.msra.mxu0 %v225
    %1406 = vmatprep.subr.mxu0 %v230
    %1407 = vmatpush1.msra.mxu0 %v229
    %1408 = vmatprep.subr.mxu0 %v234
    %1409 = vmatpush1.msra.mxu0 %v233
    %1410 = vmatprep.subr.mxu0 %v238
    %1411 = vmatpush1.msra.mxu0 %v237
    %1412 = vmatprep.subr.mxu0 %v242
    %1413 = vmatpush1.msra.mxu0 %v241
    %1414 = vmatprep.subr.mxu0 %v246
    %1415 = vmatpush1.msra.mxu0 %v245
    %1416 = vmatprep.subr.mxu0 %v250
    %1417 = vmatpush1.msra.mxu0 %v249
    %1418 = vmatprep.subr.mxu0 %v254
    %1419 = vmatpush1.msra.mxu0 %v253
    %1420 = vmatprep.subr.mxu0 0.0
    %1421 = vmatpush1.msra.mxu0 0.0
    %1422 = vmatprep.subr.mxu0 0.0
    %1423 = vmatpush1.msra.mxu0 0.0
    %1424 = vmatprep.subr.mxu0 0.0
    %1425 = vmatpush1.msra.mxu0 0.0
    %1426 = vmatprep.subr.mxu0 0.0
    %1427 = vmatpush1.msra.mxu0 0.0
    %1428 = vmatprep.subr.mxu0 0.0
    %1429 = vmatpush1.msra.mxu0 0.0
    %1430 = vmatprep.subr.mxu0 0.0
    %1431 = vmatpush1.msra.mxu0 0.0
    %1432 = vmatprep.subr.mxu0 0.0
    %1433 = vmatpush1.msra.mxu0 0.0
    %1434 = vmatprep.subr.mxu0 0.0
    %1435 = vmatpush1.msra.mxu0 0.0
    %1436 = vmatprep.subr.mxu0 0.0
    %1437 = vmatpush1.msra.mxu0 0.0
    %1438 = vmatprep.subr.mxu0 0.0
    %1439 = vmatpush1.msra.mxu0 0.0
    %1440 = vmatprep.subr.mxu0 0.0
    %1441 = vmatpush1.msra.mxu0 0.0
    %1442 = vmatprep.subr.mxu0 0.0
    %1443 = vmatpush1.msra.mxu0 0.0
    %1444 = vmatprep.subr.mxu0 0.0
    %1445 = vmatpush1.msra.mxu0 0.0
    %1446 = vmatprep.subr.mxu0 0.0
    %1447 = vmatpush1.msra.mxu0 0.0
    %1448 = vmatprep.subr.mxu0 0.0
    %1449 = vmatpush1.msra.mxu0 0.0
    %1450 = vmatprep.subr.mxu0 0.0
    %1451 = vmatpush1.msra.mxu0 0.0
    %1452 = vmatprep.mubr.f32.mxu0 0.0
    %1453 = vmatmul.mubr.f32.gmra.mrb[0].mxu0 %v1312
    %v1454 = vpop.f32.mrb[0].mxu0
    %v1455 = vadd.f32 0.0, %v1454
    %v1456 = vpop.f32.mrb[0].mxu0
    %v1457 = vadd.f32 0.0, %v1456
    %1458 = vdwg.mxu0
    %v1459 = vadd.f32 %v1313, %v1384
    %v1460 = vadd.f32 %v1314, %v1386
    %v1461 = vadd.f32 %v1315, %v1455
    %v1462 = vadd.f32 %v1316, %v1457
    %v1463 = vxor.u32 %v1459, 2147483648
    %v1464 = vxor.u32 %v1460, 2147483648
    %v1465 = vxor.u32 %v1461, 2147483648
    %v1466 = vmul.f32 %v1463, 1.442695
    %v1467 = vpow.pop %v1466
    %v1468 = vmul.f32 %v1464, 1.442695
    %v1469 = vpow.pop %v1468
    %v1470 = vmul.f32 %v1465, 1.442695
    %v1471 = vpow.pop %v1470
    %v1472 = vadd.f32 %v1467, 1.0
    %v1473 = vadd.f32 %v1469, 1.0
    %v1474 = vadd.f32 %v1471, 1.0
    %v1475 = vrcp.pop %v1472
    %v1476 = vmul.f32 1.0, %v1475
    %v1477 = vrcp.pop %v1473
    %v1478 = vmul.f32 1.0, %v1477
    %v1479 = vrcp.pop %v1474
    %v1480 = vmul.f32 1.0, %v1479
    %v1481 = vtanh.pop %v1462
    %v1482 = vmul.f32 %v1478, %v1086
    %v1483 = vmul.f32 %v1476, %v1481
    %v1484 = vadd.f32 %v1482, %v1483
    %v1485 = vtanh.pop %v1484
    %v1486 = vmul.f32 %v1480, %v1485
    %1487 = vmatprep.subr.mxu0 %v112
    %1488 = vmatpush1.msra.mxu0 %v111
    %1489 = vmatprep.subr.mxu0 %v117
    %1490 = vmatpush1.msra.mxu0 %v116
    %1491 = vmatprep.subr.mxu0 %v122
    %1492 = vmatpush1.msra.mxu0 %v121
    %1493 = vmatprep.subr.mxu0 %v127
    %1494 = vmatpush1.msra.mxu0 %v126
    %1495 = vmatprep.subr.mxu0 %v132
    %1496 = vmatpush1.msra.mxu0 %v131
    %1497 = vmatprep.subr.mxu0 %v137
    %1498 = vmatpush1.msra.mxu0 %v136
    %1499 = vmatprep.subr.mxu0 %v142
    %1500 = vmatpush1.msra.mxu0 %v141
    %1501 = vmatprep.subr.mxu0 %v147
    %1502 = vmatpush1.msra.mxu0 %v146
    %1503 = vmatprep.subr.mxu0 %v152
    %1504 = vmatpush1.msra.mxu0 %v151
    %1505 = vmatprep.subr.mxu0 %v157
    %1506 = vmatpush1.msra.mxu0 %v156
    %1507 = vmatprep.subr.mxu0 %v162
    %1508 = vmatpush1.msra.mxu0 %v161
    %1509 = vmatprep.subr.mxu0 %v167
    %1510 = vmatpush1.msra.mxu0 %v166
    %1511 = vmatprep.subr.mxu0 %v172
    %1512 = vmatpush1.msra.mxu0 %v171
    %1513 = vmatprep.subr.mxu0 %v177
    %1514 = vmatpush1.msra.mxu0 %v176
    %1515 = vmatprep.subr.mxu0 %v182
    %1516 = vmatpush1.msra.mxu0 %v181
    %1517 = vmatprep.subr.mxu0 %v187
    %1518 = vmatpush1.msra.mxu0 %v186
    %1519 = vmatprep.subr.mxu0 0.0
    %1520 = vmatpush1.msra.mxu0 0.0
    %1521 = vmatprep.subr.mxu0 0.0
    %1522 = vmatpush1.msra.mxu0 0.0
    %1523 = vmatprep.subr.mxu0 0.0
    %1524 = vmatpush1.msra.mxu0 0.0
    %1525 = vmatprep.subr.mxu0 0.0
    %1526 = vmatpush1.msra.mxu0 0.0
    %1527 = vmatprep.subr.mxu0 0.0
    %1528 = vmatpush1.msra.mxu0 0.0
    %1529 = vmatprep.subr.mxu0 0.0
    %1530 = vmatpush1.msra.mxu0 0.0
    %1531 = vmatprep.subr.mxu0 0.0
    %1532 = vmatpush1.msra.mxu0 0.0
    %1533 = vmatprep.subr.mxu0 0.0
    %1534 = vmatpush1.msra.mxu0 0.0
    %1535 = vmatprep.subr.mxu0 0.0
    %1536 = vmatpush1.msra.mxu0 0.0
    %1537 = vmatprep.subr.mxu0 0.0
    %1538 = vmatpush1.msra.mxu0 0.0
    %1539 = vmatprep.subr.mxu0 0.0
    %1540 = vmatpush1.msra.mxu0 0.0
    %1541 = vmatprep.subr.mxu0 0.0
    %1542 = vmatpush1.msra.mxu0 0.0
    %1543 = vmatprep.subr.mxu0 0.0
    %1544 = vmatpush1.msra.mxu0 0.0
    %1545 = vmatprep.subr.mxu0 0.0
    %1546 = vmatpush1.msra.mxu0 0.0
    %1547 = vmatprep.subr.mxu0 0.0
    %1548 = vmatpush1.msra.mxu0 0.0
    %1549 = vmatprep.subr.mxu0 0.0
    %1550 = vmatpush1.msra.mxu0 0.0
    %1551 = vmatprep.mubr.f32.mxu0 0.0
    %1552 = vmatmul.mubr.f32.gmra.mrb[0].mxu0 %v1486
    %v1553 = vpop.f32.mrb[0].mxu0
    %v1554 = vadd.f32 0.0, %v1553
    %v1555 = vpop.f32.mrb[0].mxu0
    %v1556 = vadd.f32 0.0, %v1555
    %1557 = vdwg.mxu0
    %1558 = vmatprep.subr.mxu0 %v114
    %1559 = vmatpush1.msra.mxu0 %v113
    %1560 = vmatprep.subr.mxu0 %v119
    %1561 = vmatpush1.msra.mxu0 %v118
    %1562 = vmatprep.subr.mxu0 %v124
    %1563 = vmatpush1.msra.mxu0 %v123
    %1564 = vmatprep.subr.mxu0 %v129
    %1565 = vmatpush1.msra.mxu0 %v128
    %1566 = vmatprep.subr.mxu0 %v134
    %1567 = vmatpush1.msra.mxu0 %v133
    %1568 = vmatprep.subr.mxu0 %v139
    %1569 = vmatpush1.msra.mxu0 %v138
    %1570 = vmatprep.subr.mxu0 %v144
    %1571 = vmatpush1.msra.mxu0 %v143
    %1572 = vmatprep.subr.mxu0 %v149
    %1573 = vmatpush1.msra.mxu0 %v148
    %1574 = vmatprep.subr.mxu0 %v154
    %1575 = vmatpush1.msra.mxu0 %v153
    %1576 = vmatprep.subr.mxu0 %v159
    %1577 = vmatpush1.msra.mxu0 %v158
    %1578 = vmatprep.subr.mxu0 %v164
    %1579 = vmatpush1.msra.mxu0 %v163
    %1580 = vmatprep.subr.mxu0 %v169
    %1581 = vmatpush1.msra.mxu0 %v168
    %1582 = vmatprep.subr.mxu0 %v174
    %1583 = vmatpush1.msra.mxu0 %v173
    %1584 = vmatprep.subr.mxu0 %v179
    %1585 = vmatpush1.msra.mxu0 %v178
    %1586 = vmatprep.subr.mxu0 %v184
    %1587 = vmatpush1.msra.mxu0 %v183
    %1588 = vmatprep.subr.mxu0 %v189
    %1589 = vmatpush1.msra.mxu0 %v188
    %1590 = vmatprep.subr.mxu0 0.0
    %1591 = vmatpush1.msra.mxu0 0.0
    %1592 = vmatprep.subr.mxu0 0.0
    %1593 = vmatpush1.msra.mxu0 0.0
    %1594 = vmatprep.subr.mxu0 0.0
    %1595 = vmatpush1.msra.mxu0 0.0
    %1596 = vmatprep.subr.mxu0 0.0
    %1597 = vmatpush1.msra.mxu0 0.0
    %1598 = vmatprep.subr.mxu0 0.0
    %1599 = vmatpush1.msra.mxu0 0.0
    %1600 = vmatprep.subr.mxu0 0.0
    %1601 = vmatpush1.msra.mxu0 0.0
    %1602 = vmatprep.subr.mxu0 0.0
    %1603 = vmatpush1.msra.mxu0 0.0
    %1604 = vmatprep.subr.mxu0 0.0
    %1605 = vmatpush1.msra.mxu0 0.0
    %1606 = vmatprep.subr.mxu0 0.0
    %1607 = vmatpush1.msra.mxu0 0.0
    %1608 = vmatprep.subr.mxu0 0.0
    %1609 = vmatpush1.msra.mxu0 0.0
    %1610 = vmatprep.subr.mxu0 0.0
    %1611 = vmatpush1.msra.mxu0 0.0
    %1612 = vmatprep.subr.mxu0 0.0
    %1613 = vmatpush1.msra.mxu0 0.0
    %1614 = vmatprep.subr.mxu0 0.0
    %1615 = vmatpush1.msra.mxu0 0.0
    %1616 = vmatprep.subr.mxu0 0.0
    %1617 = vmatpush1.msra.mxu0 0.0
    %1618 = vmatprep.subr.mxu0 0.0
    %1619 = vmatpush1.msra.mxu0 0.0
    %1620 = vmatprep.subr.mxu0 0.0
    %1621 = vmatpush1.msra.mxu0 0.0
    %1622 = vmatprep.mubr.f32.mxu0 0.0
    %1623 = vmatmul.mubr.f32.gmra.mrb[0].mxu0 %v1486
    %v1624 = vpop.f32.mrb[0].mxu0
    %v1625 = vadd.f32 0.0, %v1624
    %v1626 = vpop.f32.mrb[0].mxu0
    %v1627 = vadd.f32 0.0, %v1626
    %1628 = vdwg.mxu0
    %1629 = vmatprep.subr.mxu0 0.0
    %1630 = vmatpush1.msra.mxu0 %v115
    %1631 = vmatprep.subr.mxu0 0.0
    %1632 = vmatpush1.msra.mxu0 %v120
    %1633 = vmatprep.subr.mxu0 0.0
    %1634 = vmatpush1.msra.mxu0 %v125
    %1635 = vmatprep.subr.mxu0 0.0
    %1636 = vmatpush1.msra.mxu0 %v130
    %1637 = vmatprep.subr.mxu0 0.0
    %1638 = vmatpush1.msra.mxu0 %v135
    %1639 = vmatprep.subr.mxu0 0.0
    %1640 = vmatpush1.msra.mxu0 %v140
    %1641 = vmatprep.subr.mxu0 0.0
    %1642 = vmatpush1.msra.mxu0 %v145
    %1643 = vmatprep.subr.mxu0 0.0
    %1644 = vmatpush1.msra.mxu0 %v150
    %1645 = vmatprep.subr.mxu0 0.0
    %1646 = vmatpush1.msra.mxu0 %v155
    %1647 = vmatprep.subr.mxu0 0.0
    %1648 = vmatpush1.msra.mxu0 %v160
    %1649 = vmatprep.subr.mxu0 0.0
    %1650 = vmatpush1.msra.mxu0 %v165
    %1651 = vmatprep.subr.mxu0 0.0
    %1652 = vmatpush1.msra.mxu0 %v170
    %1653 = vmatprep.subr.mxu0 0.0
    %1654 = vmatpush1.msra.mxu0 %v175
    %1655 = vmatprep.subr.mxu0 0.0
    %1656 = vmatpush1.msra.mxu0 %v180
    %1657 = vmatprep.subr.mxu0 0.0
    %1658 = vmatpush1.msra.mxu0 %v185
    %1659 = vmatprep.subr.mxu0 0.0
    %1660 = vmatpush1.msra.mxu0 %v190
    %1661 = vmatprep.subr.mxu0 0.0
    %1662 = vmatpush1.msra.mxu0 0.0
    %1663 = vmatprep.subr.mxu0 0.0
    %1664 = vmatpush1.msra.mxu0 0.0
    %1665 = vmatprep.subr.mxu0 0.0
    %1666 = vmatpush1.msra.mxu0 0.0
    %1667 = vmatprep.subr.mxu0 0.0
    %1668 = vmatpush1.msra.mxu0 0.0
    %1669 = vmatprep.subr.mxu0 0.0
    %1670 = vmatpush1.msra.mxu0 0.0
    %1671 = vmatprep.subr.mxu0 0.0
    %1672 = vmatpush1.msra.mxu0 0.0
    %1673 = vmatprep.subr.mxu0 0.0
    %1674 = vmatpush1.msra.mxu0 0.0
    %1675 = vmatprep.subr.mxu0 0.0
    %1676 = vmatpush1.msra.mxu0 0.0
    %1677 = vmatprep.subr.mxu0 0.0
    %1678 = vmatpush1.msra.mxu0 0.0
    %1679 = vmatprep.subr.mxu0 0.0
    %1680 = vmatpush1.msra.mxu0 0.0
    %1681 = vmatprep.subr.mxu0 0.0
    %1682 = vmatpush1.msra.mxu0 0.0
    %1683 = vmatprep.subr.mxu0 0.0
    %1684 = vmatpush1.msra.mxu0 0.0
    %1685 = vmatprep.subr.mxu0 0.0
    %1686 = vmatpush1.msra.mxu0 0.0
    %1687 = vmatprep.subr.mxu0 0.0
    %1688 = vmatpush1.msra.mxu0 0.0
    %1689 = vmatprep.subr.mxu0 0.0
    %1690 = vmatpush1.msra.mxu0 0.0
    %1691 = vmatprep.subr.mxu0 0.0
    %1692 = vmatpush1.msra.mxu0 0.0
    %1693 = vmatprep.mubr.f32.mxu0 0.0
    %1694 = vmatmul.mubr.f32.gmra.mrb[0].mxu0 %v1486
    %v1695 = vpop.f32.mrb[0].mxu0
    %v1696 = vadd.f32 0.0, %v1695
    %v1697 = vpop.f32.mrb[0].mxu0
    %1698 = vdwg.mxu0
    %v1699 = vadd.f32 %v659, %v1696
    %v1700 = vsel %vm903, %v1699, -inf
    %1701 = vmax.xlane.f32.xlu0 %v1700
    %v1702 = vpop.xlane.xlu0 %1701
    %v1703 = vsub.f32 %v1699, %v1702
    %v1704 = vmul.f32 %v1703, 1.442695
    %v1705 = vpow.pop %v1704
    %v1706 = vsel %vm903, %v1705, 0.0
    %1707 = vadd.xlane.f32.xlu0 %v1706
    %v1708 = vpop.xlane.xlu0 %1707
    %v1709 = vrcp.pop %v1708
    %v1710 = vmul.f32 %v1705, %v1709
    %v1711 = vadd.f32 %v662, %v1554
    %v1712 = vadd.f32 %v663, %v1556
    %v1713 = vadd.f32 %v664, %v1625
    %v1714 = vadd.f32 %v665, %v1627
    %1715 = vmatprep.subr.mxu0 %v192
    %1716 = vmatpush1.msra.mxu0 %v191
    %1717 = vmatprep.subr.mxu0 %v196
    %1718 = vmatpush1.msra.mxu0 %v195
    %1719 = vmatprep.subr.mxu0 %v200
    %1720 = vmatpush1.msra.mxu0 %v199
    %1721 = vmatprep.subr.mxu0 %v204
    %1722 = vmatpush1.msra.mxu0 %v203
    %1723 = vmatprep.subr.mxu0 %v208
    %1724 = vmatpush1.msra.mxu0 %v207
    %1725 = vmatprep.subr.mxu0 %v212
    %1726 = vmatpush1.msra.mxu0 %v211
    %1727 = vmatprep.subr.mxu0 %v216
    %1728 = vmatpush1.msra.mxu0 %v215
    %1729 = vmatprep.subr.mxu0 %v220
    %1730 = vmatpush1.msra.mxu0 %v219
    %1731 = vmatprep.subr.mxu0 %v224
    %1732 = vmatpush1.msra.mxu0 %v223
    %1733 = vmatprep.subr.mxu0 %v228
    %1734 = vmatpush1.msra.mxu0 %v227
    %1735 = vmatprep.subr.mxu0 %v232
    %1736 = vmatpush1.msra.mxu0 %v231
    %1737 = vmatprep.subr.mxu0 %v236
    %1738 = vmatpush1.msra.mxu0 %v235
    %1739 = vmatprep.subr.mxu0 %v240
    %1740 = vmatpush1.msra.mxu0 %v239
    %1741 = vmatprep.subr.mxu0 %v244
    %1742 = vmatpush1.msra.mxu0 %v243
    %1743 = vmatprep.subr.mxu0 %v248
    %1744 = vmatpush1.msra.mxu0 %v247
    %1745 = vmatprep.subr.mxu0 %v252
    %1746 = vmatpush1.msra.mxu0 %v251
    %1747 = vmatprep.subr.mxu0 0.0
    %1748 = vmatpush1.msra.mxu0 0.0
    %1749 = vmatprep.subr.mxu0 0.0
    %1750 = vmatpush1.msra.mxu0 0.0
    %1751 = vmatprep.subr.mxu0 0.0
    %1752 = vmatpush1.msra.mxu0 0.0
    %1753 = vmatprep.subr.mxu0 0.0
    %1754 = vmatpush1.msra.mxu0 0.0
    %1755 = vmatprep.subr.mxu0 0.0
    %1756 = vmatpush1.msra.mxu0 0.0
    %1757 = vmatprep.subr.mxu0 0.0
    %1758 = vmatpush1.msra.mxu0 0.0
    %1759 = vmatprep.subr.mxu0 0.0
    %1760 = vmatpush1.msra.mxu0 0.0
    %1761 = vmatprep.subr.mxu0 0.0
    %1762 = vmatpush1.msra.mxu0 0.0
    %1763 = vmatprep.subr.mxu0 0.0
    %1764 = vmatpush1.msra.mxu0 0.0
    %1765 = vmatprep.subr.mxu0 0.0
    %1766 = vmatpush1.msra.mxu0 0.0
    %1767 = vmatprep.subr.mxu0 0.0
    %1768 = vmatpush1.msra.mxu0 0.0
    %1769 = vmatprep.subr.mxu0 0.0
    %1770 = vmatpush1.msra.mxu0 0.0
    %1771 = vmatprep.subr.mxu0 0.0
    %1772 = vmatpush1.msra.mxu0 0.0
    %1773 = vmatprep.subr.mxu0 0.0
    %1774 = vmatpush1.msra.mxu0 0.0
    %1775 = vmatprep.subr.mxu0 0.0
    %1776 = vmatpush1.msra.mxu0 0.0
    %1777 = vmatprep.subr.mxu0 0.0
    %1778 = vmatpush1.msra.mxu0 0.0
    %1779 = vmatprep.mubr.f32.mxu0 0.0
    %1780 = vmatmul.mubr.f32.gmra.mrb[0].mxu0 %v1710
    %v1781 = vpop.f32.mrb[0].mxu0
    %v1782 = vadd.f32 0.0, %v1781
    %v1783 = vpop.f32.mrb[0].mxu0
    %v1784 = vadd.f32 0.0, %v1783
    %1785 = vdwg.mxu0
    %1786 = vmatprep.subr.mxu0 %v194
    %1787 = vmatpush1.msra.mxu0 %v193
    %1788 = vmatprep.subr.mxu0 %v198
    %1789 = vmatpush1.msra.mxu0 %v197
    %1790 = vmatprep.subr.mxu0 %v202
    %1791 = vmatpush1.msra.mxu0 %v201
    %1792 = vmatprep.subr.mxu0 %v206
    %1793 = vmatpush1.msra.mxu0 %v205
    %1794 = vmatprep.subr.mxu0 %v210
    %1795 = vmatpush1.msra.mxu0 %v209
    %1796 = vmatprep.subr.mxu0 %v214
    %1797 = vmatpush1.msra.mxu0 %v213
    %1798 = vmatprep.subr.mxu0 %v218
    %1799 = vmatpush1.msra.mxu0 %v217
    %1800 = vmatprep.subr.mxu0 %v222
    %1801 = vmatpush1.msra.mxu0 %v221
    %1802 = vmatprep.subr.mxu0 %v226
    %1803 = vmatpush1.msra.mxu0 %v225
    %1804 = vmatprep.subr.mxu0 %v230
    %1805 = vmatpush1.msra.mxu0 %v229
    %1806 = vmatprep.subr.mxu0 %v234
    %1807 = vmatpush1.msra.mxu0 %v233
    %1808 = vmatprep.subr.mxu0 %v238
    %1809 = vmatpush1.msra.mxu0 %v237
    %1810 = vmatprep.subr.mxu0 %v242
    %1811 = vmatpush1.msra.mxu0 %v241
    %1812 = vmatprep.subr.mxu0 %v246
    %1813 = vmatpush1.msra.mxu0 %v245
    %1814 = vmatprep.subr.mxu0 %v250
    %1815 = vmatpush1.msra.mxu0 %v249
    %1816 = vmatprep.subr.mxu0 %v254
    %1817 = vmatpush1.msra.mxu0 %v253
    %1818 = vmatprep.subr.mxu0 0.0
    %1819 = vmatpush1.msra.mxu0 0.0
    %1820 = vmatprep.subr.mxu0 0.0
    %1821 = vmatpush1.msra.mxu0 0.0
    %1822 = vmatprep.subr.mxu0 0.0
    %1823 = vmatpush1.msra.mxu0 0.0
    %1824 = vmatprep.subr.mxu0 0.0
    %1825 = vmatpush1.msra.mxu0 0.0
    %1826 = vmatprep.subr.mxu0 0.0
    %1827 = vmatpush1.msra.mxu0 0.0
    %1828 = vmatprep.subr.mxu0 0.0
    %1829 = vmatpush1.msra.mxu0 0.0
    %1830 = vmatprep.subr.mxu0 0.0
    %1831 = vmatpush1.msra.mxu0 0.0
    %1832 = vmatprep.subr.mxu0 0.0
    %1833 = vmatpush1.msra.mxu0 0.0
    %1834 = vmatprep.subr.mxu0 0.0
    %1835 = vmatpush1.msra.mxu0 0.0
    %1836 = vmatprep.subr.mxu0 0.0
    %1837 = vmatpush1.msra.mxu0 0.0
    %1838 = vmatprep.subr.mxu0 0.0
    %1839 = vmatpush1.msra.mxu0 0.0
    %1840 = vmatprep.subr.mxu0 0.0
    %1841 = vmatpush1.msra.mxu0 0.0
    %1842 = vmatprep.subr.mxu0 0.0
    %1843 = vmatpush1.msra.mxu0 0.0
    %1844 = vmatprep.subr.mxu0 0.0
    %1845 = vmatpush1.msra.mxu0 0.0
    %1846 = vmatprep.subr.mxu0 0.0
    %1847 = vmatpush1.msra.mxu0 0.0
    %1848 = vmatprep.subr.mxu0 0.0
    %1849 = vmatpush1.msra.mxu0 0.0
    %1850 = vmatprep.mubr.f32.mxu0 0.0
    %1851 = vmatmul.mubr.f32.gmra.mrb[0].mxu0 %v1710
    %v1852 = vpop.f32.mrb[0].mxu0
    %v1853 = vadd.f32 0.0, %v1852
    %v1854 = vpop.f32.mrb[0].mxu0
    %v1855 = vadd.f32 0.0, %v1854
    %1856 = vdwg.mxu0
    %v1857 = vadd.f32 %v1711, %v1782
    %v1858 = vadd.f32 %v1712, %v1784
    %v1859 = vadd.f32 %v1713, %v1853
    %v1860 = vadd.f32 %v1714, %v1855
    %v1861 = vxor.u32 %v1857, 2147483648
    %v1862 = vxor.u32 %v1858, 2147483648
    %v1863 = vxor.u32 %v1859, 2147483648
    %v1864 = vmul.f32 %v1861, 1.442695
    %v1865 = vpow.pop %v1864
    %v1866 = vmul.f32 %v1862, 1.442695
    %v1867 = vpow.pop %v1866
    %v1868 = vmul.f32 %v1863, 1.442695
    %v1869 = vpow.pop %v1868
    %v1870 = vadd.f32 %v1865, 1.0
    %v1871 = vadd.f32 %v1867, 1.0
    %v1872 = vadd.f32 %v1869, 1.0
    %v1873 = vrcp.pop %v1870
    %v1874 = vmul.f32 1.0, %v1873
    %v1875 = vrcp.pop %v1871
    %v1876 = vmul.f32 1.0, %v1875
    %v1877 = vrcp.pop %v1872
    %v1878 = vmul.f32 1.0, %v1877
    %v1879 = vtanh.pop %v1860
    %v1880 = vmul.f32 %v1876, %v1484
    %v1881 = vmul.f32 %v1874, %v1879
    %v1882 = vadd.f32 %v1880, %v1881
    %v1883 = vtanh.pop %v1882
    %v1884 = vmul.f32 %v1878, %v1883
    %v1885 = vadd.f32 %v74, %v1884
    %vm1886 = vcmask 254976
    %1887 = vst.msk [vmem:[#allocation10] sm:$0x3] %vm1886, %v1885
    // Predicated region
    $region38: #{tpu_custom_call.1} parent=1 // pred_check
      _
    $region39: #{tpu_custom_call.1} parent=1 // pred_check_branch
      %1889 = sbr.rel (0) target = $region41
    $region40: #{tpu_custom_call.1} parent=1 // pred_region
      %s1891 = ssub.s32 32, 32
      %1892 = vsyncadd [#allocation4], %s1891
      %s1894 = sshll.u32 [#allocation10], 4
      %s1895 = int_to_ptr.vmem [resolvable:$true] %s1894
      %1897 = dma.vmem_to_hbm [thread:$0]  %s1895, 32, %s5, [#allocation4]
    $region41: #{tpu_custom_call.1} parent=1 // pred_fallthru
      _
    // Predicated region
    $region42: #{tpu_custom_call.1} parent=1 // pred_check
      _
    $region43: #{tpu_custom_call.1} parent=1 // pred_check_branch
      %1899 = sbr.rel (0) target = $region45
    $region44: #{tpu_custom_call.1} parent=1 // pred_region
      %1900 = dma.done [#allocation4], 32
    $region45: #{tpu_custom_call.1} parent=1 // pred_fallthru
      _
    %1901 = vsyncpa [#allocation3], 1
    %1902 = vsyncpa [#allocation6], 1
    %1903 = vsyncpa [#allocation9], 1
    %1904 = vsyncpa [#allocation4], 1

</llo_original>
